<compile_context>
chip_gen: v7x
topology: tpu7x:2x2x1
jax: 0.10.0
libtpu: 0.0.40
codegen_flags: <defaults>
</compile_context>

<pallas_src>
import functools

import jax
import jax.numpy as jnp
from jax.experimental import pallas as pl
from jax.experimental.pallas import tpu as pltpu


# --------------------------- tiling helpers ----------------------------------

def _pick_tile(dim, target, multiple):
    """Largest tile <= target that divides `dim` and is a multiple of `multiple`
    (sublane/lane alignment).  Falls back to the full dim (block == array dim is
    always a legal block shape)."""
    if dim <= target:
        return dim
    t = (target // multiple) * multiple
    while t >= multiple:
        if dim % t == 0:
            return t
        t -= multiple
    return dim


# Conservative scoped-VMEM request: safe on v7x (64 MiB physical) and plenty for the
# double-buffered tiles chosen below; v5e/v6e have 128 MiB physical.
_VMEM_LIMIT = 40 * 1024 * 1024


# ---------------- fused (LayerNorm) -> matmul -> bias/GELU/residual ----------

def _fused_matmul_kernel(*refs, fuse_ln, has_res, act, eps):
    # refs: x, w, b, [ln_g, ln_b], [res], out, acc
    o_ref, acc_ref = refs[-2], refs[-1]
    x_ref, w_ref, b_ref = refs[0], refs[1], refs[2]
    idx = 3
    if fuse_ln:
        g_ref, beta_ref = refs[idx], refs[idx + 1]
        idx += 2
    if has_res:
        res_ref = refs[idx]
        idx += 1

    k_id = pl.program_id(2)

    @pl.when(k_id == 0)
    def _init():
        acc_ref[...] = jnp.zeros_like(acc_ref)

    x = x_ref[...].astype(jnp.float32)
    if fuse_ln:
        # LayerNorm fused into the consumer matmul (requires the full K row in-tile).
        mu = jnp.mean(x, axis=-1, keepdims=True)
        xc = x - mu
        var = jnp.mean(xc * xc, axis=-1, keepdims=True)
        x = (xc * jax.lax.rsqrt(var + eps)) * g_ref[...] + beta_ref[...]

    acc_ref[...] += jnp.dot(x.astype(jnp.bfloat16),
                            w_ref[...].astype(jnp.bfloat16),
                            preferred_element_type=jnp.float32)

    @pl.when(k_id == pl.num_programs(2) - 1)
    def _finalize():
        y = acc_ref[...] + b_ref[...].astype(jnp.float32)
        if act == "gelu":
            # TODO(synk): PyTorch/Whisper use exact erf-GELU; tanh approximation here.
            y = jax.nn.gelu(y, approximate=True)
        if has_res:
            y = y + res_ref[...].astype(jnp.float32)
        o_ref[...] = y.astype(o_ref.dtype)


def fused_matmul(x, w, b, *, ln=None, residual=None, act="none", eps=1e-5,
                 tm=256, tn=512, tk=512):
    """y = act(LN?(x) @ w + b) (+ residual).  x:(M,K) w:(K,N) b:(N,)."""
    M, K = x.shape
    _, N = w.shape
    tm = _pick_tile(M, tm, 8)
    tn = _pick_tile(N, tn, 128)
    tk = K if ln is not None else _pick_tile(K, tk, 128)
    grid = (M // tm, N // tn, K // tk)

    in_specs = [
        pl.BlockSpec((tm, tk), lambda i, j, k: (i, k)),
        pl.BlockSpec((tk, tn), lambda i, j, k: (k, j)),
        pl.BlockSpec((1, tn), lambda i, j, k: (0, j)),
    ]
    args = [x, w, b.reshape(1, N)]
    if ln is not None:
        g, beta = ln
        in_specs += [pl.BlockSpec((1, K), lambda i, j, k: (0, 0)),
                     pl.BlockSpec((1, K), lambda i, j, k: (0, 0))]
        args += [g.reshape(1, K), beta.reshape(1, K)]
    if residual is not None:
        in_specs.append(pl.BlockSpec((tm, tn), lambda i, j, k: (i, j)))
        args.append(residual)

    kernel = functools.partial(_fused_matmul_kernel, fuse_ln=ln is not None,
                               has_res=residual is not None, act=act, eps=eps)
    return pl.pallas_call(
        kernel,
        out_shape=jax.ShapeDtypeStruct((M, N), x.dtype),
        grid=grid,
        in_specs=in_specs,
        out_specs=pl.BlockSpec((tm, tn), lambda i, j, k: (i, j)),
        scratch_shapes=[pltpu.VMEM((tm, tn), jnp.float32)],
        compiler_params=pltpu.CompilerParams(
            dimension_semantics=("parallel", "parallel", "arbitrary"),
            vmem_limit_bytes=_VMEM_LIMIT),
    )(*args)


# ------------------- head-batched flash-style self-attention ------------------

def _attention_kernel(q_ref, k_ref, v_ref, o_ref, m_sc, l_sc, acc_sc, *, n_heads, dh):
    # q_ref: (1, tq, D), k_ref/v_ref: (1, tk, D); heads live as contiguous Dh slices
    # of the last (lane) dim, so no head-split transposes are needed and the output
    # store is a lane-dense (tq, D) block.  Softmax scale is folded into wq.
    kv_id = pl.program_id(2)

    @pl.when(kv_id == 0)
    def _init():
        m_sc[...] = jnp.full(m_sc.shape, -jnp.inf, m_sc.dtype)
        l_sc[...] = jnp.zeros_like(l_sc)
        acc_sc[...] = jnp.zeros_like(acc_sc)

    q = q_ref[0].astype(jnp.bfloat16)
    k = k_ref[0].astype(jnp.bfloat16)
    v = v_ref[0].astype(jnp.bfloat16)

    for h in range(n_heads):
        sl = slice(h * dh, (h + 1) * dh)
        # contraction on last dims -> no explicit (T, Dh) transpose materialized
        s = jax.lax.dot_general(q[:, sl], k[:, sl], (((1,), (1,)), ((), ())),
                                preferred_element_type=jnp.float32)        # (tq, tk)
        m_prev = m_sc[:, h:h + 1]
        m_new = jnp.maximum(m_prev, jnp.max(s, axis=-1, keepdims=True))
        alpha = jnp.exp(m_prev - m_new)
        p = jnp.exp(s - m_new)
        l_sc[:, h:h + 1] = alpha * l_sc[:, h:h + 1] + jnp.sum(p, axis=-1, keepdims=True)
        pv = jnp.dot(p.astype(jnp.bfloat16), v[:, sl],
                     preferred_element_type=jnp.float32)                    # (tq, dh)
        acc_sc[:, sl] = alpha * acc_sc[:, sl] + pv
        m_sc[:, h:h + 1] = m_new

    @pl.when(kv_id == pl.num_programs(2) - 1)
    def _finalize():
        inv_l = pl.reciprocal(l_sc[...], approx=True)                      # (tq, H)
        outs = [acc_sc[:, h * dh:(h + 1) * dh] * inv_l[:, h:h + 1]
                for h in range(n_heads)]
        o_ref[0] = jnp.concatenate(outs, axis=-1).astype(o_ref.dtype)


def attention(q, k, v, *, n_heads, tq=256, tkv=256):
    """q/k/v: (B, T, D) with heads packed along D.  Returns (B, T, D)."""
    B, T, D = q.shape
    dh = D // n_heads
    tq = _pick_tile(T, tq, 8)
    tkv = _pick_tile(T, tkv, 8)
    grid = (B, T // tq, T // tkv)

    q_spec = pl.BlockSpec((1, tq, D), lambda b, qi, ki: (b, qi, 0))
    kv_spec = pl.BlockSpec((1, tkv, D), lambda b, qi, ki: (b, ki, 0))
    out_spec = pl.BlockSpec((1, tq, D), lambda b, qi, ki: (b, qi, 0))

    return pl.pallas_call(
        functools.partial(_attention_kernel, n_heads=n_heads, dh=dh),
        out_shape=jax.ShapeDtypeStruct((B, T, D), q.dtype),
        grid=grid,
        in_specs=[q_spec, kv_spec, kv_spec],
        out_specs=out_spec,
        scratch_shapes=[
            pltpu.VMEM((tq, n_heads), jnp.float32),   # running max m
            pltpu.VMEM((tq, n_heads), jnp.float32),   # running sum l
            pltpu.VMEM((tq, D), jnp.float32),         # output accumulator
        ],
        compiler_params=pltpu.CompilerParams(
            dimension_semantics=("parallel", "parallel", "arbitrary"),
            vmem_limit_bytes=_VMEM_LIMIT),
    )(q, k, v)


# --------------- fused final-LayerNorm + embedding head + mean(dim=1) --------

def _head_mean_kernel(x_ref, g_ref, bln_ref, w_ref, b_ref, o_ref, acc_ref, *, inv_t, eps):
    # mean_t(LN(x) @ W + b) == (sum_t LN(x_t)) @ W * (1/T) + b   (exact linearity)
    t_id = pl.program_id(0)

    @pl.when(t_id == 0)
    def _init():
        acc_ref[...] = jnp.zeros_like(acc_ref)

    x = x_ref[...].astype(jnp.float32)                     # (B, tt, D)
    mu = jnp.mean(x, axis=-1, keepdims=True)
    xc = x - mu
    var = jnp.mean(xc * xc, axis=-1, keepdims=True)
    xn = (xc * jax.lax.rsqrt(var + eps)) * g_ref[...] + bln_ref[...]
    acc_ref[...] += jnp.sum(xn, axis=1)                    # (B, D)

    @pl.when(t_id == pl.num_programs(0) - 1)
    def _finalize():
        xm = (acc_ref[...] * inv_t).astype(jnp.bfloat16)
        y = jnp.dot(xm, w_ref[...].astype(jnp.bfloat16),
                    preferred_element_type=jnp.float32)
        o_ref[...] = (y + b_ref[...].astype(jnp.float32)).astype(o_ref.dtype)


def head_and_mean(x, ln_g, ln_b, w, b, *, eps=1e-5, tt=512):
    """(LN(x) @ w + b).mean(dim=1): x (B,T,D), w (D,E), b (E,) -> (B,E)."""
    B, T, D = x.shape
    _, E = w.shape
    tt = _pick_tile(T, tt, 8)
    return pl.pallas_call(
        functools.partial(_head_mean_kernel, inv_t=1.0 / T, eps=eps),
        out_shape=jax.ShapeDtypeStruct((B, E), x.dtype),
        grid=(T // tt,),
        in_specs=[
            pl.BlockSpec((B, tt, D), lambda t: (0, t, 0)),
            pl.BlockSpec((1, D), lambda t: (0, 0)),
            pl.BlockSpec((1, D), lambda t: (0, 0)),
            pl.BlockSpec((D, E), lambda t: (0, 0)),
            pl.BlockSpec((1, E), lambda t: (0, 0)),
        ],
        out_specs=pl.BlockSpec((B, E), lambda t: (0, 0)),
        scratch_shapes=[pltpu.VMEM((B, D), jnp.float32)],
        compiler_params=pltpu.CompilerParams(
            dimension_semantics=("arbitrary",),
            vmem_limit_bytes=_VMEM_LIMIT),
    )(x, ln_g.reshape(1, D), ln_b.reshape(1, D), w, b.reshape(1, E))


# --------------------------- glue (plain JAX) ---------------------------------

def im2col_1d(x, kernel, stride, pad):
    """x: (B, T, C) channels-last -> patches (B, T_out, kernel*C)."""
    # TODO(synk): replace im2col materialization with an in-kernel 3-tap accumulation
    # (shifted pl.ds views) to cut conv-stage HBM traffic ~3x at real Whisper sizes.
    B, T, C = x.shape
    xp = jnp.pad(x, ((0, 0), (pad, pad), (0, 0)))
    T_out = (T + 2 * pad - kernel) // stride + 1
    cols = [xp[:, k:k + stride * T_out:stride, :] for k in range(kernel)]
    return jnp.concatenate(cols, axis=-1)


def init_params(key, cfg):
    """Deterministic synthetic weights; shapes follow a (small) Whisper encoder + head."""
    D, H, F, E = cfg["d_model"], cfg["n_heads"], cfg["d_ff"], cfg["embed_dim"]
    C, Tmax = cfg["n_mels"], cfg["max_pos"]
    keys = iter(jax.random.split(key, 16 + 16 * cfg["n_layers"]))

    def w(shape, scale=0.02):
        return (scale * jax.random.normal(next(keys), shape)).astype(jnp.float32)

    params = {
        "conv1_w": w((3 * C, D)), "conv1_b": w((D,)),        # Conv1d(n_mels, D, 3, p=1)
        "conv2_w": w((3 * D, D)), "conv2_b": w((D,)),        # Conv1d(D, D, 3, s=2, p=1)
        "pos_embed": w((Tmax, D)),
        "lnf_g": jnp.ones((D,), jnp.float32), "lnf_b": jnp.zeros((D,), jnp.float32),
        "head_w": w((D, E)), "head_b": w((E,)),              # embedding_head: Linear(D, E)
        "layers": [],
    }
    for _ in range(cfg["n_layers"]):
        params["layers"].append({
            "ln1_g": jnp.ones((D,), jnp.float32), "ln1_b": jnp.zeros((D,), jnp.float32),
            "wq": w((D, D)), "bq": w((D,)),
            "wk": w((D, D)),                                  # Whisper k_proj has no bias
            "wv": w((D, D)), "bv": w((D,)),
            "wo": w((D, D)), "bo": w((D,)),
            "ln2_g": jnp.ones((D,), jnp.float32), "ln2_b": jnp.zeros((D,), jnp.float32),
            "w1": w((D, F)), "b1": w((F,)),
            "w2": w((F, D)), "b2": w((D,)),
        })
    return params


def audio_encoder_forward(params, features_ncw, cfg):
    """features_ncw: (B, n_mels, T) as in PyTorch Whisper (NCW)."""
    B, C, T_in = features_ncw.shape
    D, H = cfg["d_model"], cfg["n_heads"]
    Dh = D // H
    scale = Dh ** -0.5

    x = jnp.transpose(features_ncw, (0, 2, 1))                # (B, T, C) channels-last

    # conv1 (k=3, s=1, p=1) + GELU
    p1 = im2col_1d(x, 3, 1, 1)
    h = fused_matmul(p1.reshape(B * T_in, 3 * C), params["conv1_w"], params["conv1_b"],
                     act="gelu")
    h = h.reshape(B, T_in, D)

    # conv2 (k=3, s=2, p=1) + GELU
    p2 = im2col_1d(h, 3, 2, 1)
    T = p2.shape[1]
    h2 = fused_matmul(p2.reshape(B * T, 3 * D), params["conv2_w"], params["conv2_b"],
                      act="gelu")                             # (B*T, D)

    # positional embedding
    if T > params["pos_embed"].shape[0]:
        raise ValueError("sequence length exceeds max positional embeddings")
    # TODO(synk): could be folded into the conv2 epilogue with a per-batch grid.
    h2 = (h2.reshape(B, T, D) + params["pos_embed"][:T][None]).reshape(B * T, D)

    zeros_k_bias = jnp.zeros((D,), h2.dtype)
    for lyr in params["layers"]:
        # --- self-attention block (pre-norm, LN fused into the QKV matmul) ---
        # attention scale folded into wq / bq; K projection has no bias in Whisper.
        w_qkv = jnp.concatenate([lyr["wq"] * scale, lyr["wk"], lyr["wv"]], axis=1)
        b_qkv = jnp.concatenate([lyr["bq"] * scale, zeros_k_bias, lyr["bv"]])
        qkv = fused_matmul(h2, w_qkv, b_qkv, ln=(lyr["ln1_g"], lyr["ln1_b"]))
        qkv = qkv.reshape(B, T, 3 * D)
        # TODO(synk): at real sizes (D % 128 == 0) slice q/k/v via attention index_maps
        # on the fused QKV tensor instead of JAX-level slices.
        q, k, v = qkv[:, :, :D], qkv[:, :, D:2 * D], qkv[:, :, 2 * D:]
        o = attention(q, k, v, n_heads=H)                     # (B, T, D)
        # output projection with fused residual add
        h2 = fused_matmul(o.reshape(B * T, D), lyr["wo"], lyr["bo"], residual=h2)

        # --- MLP block (pre-norm, LN fused into w1; residual fused into w2) ---
        f = fused_matmul(h2, lyr["w1"], lyr["b1"], ln=(lyr["ln2_g"], lyr["ln2_b"]),
                         act="gelu")
        h2 = fused_matmul(f, lyr["w2"], lyr["b2"], residual=h2)

    # final layer norm + embedding_head + mean over sequence dim (fused)
    return head_and_mean(h2.reshape(B, T, D), params["lnf_g"], params["lnf_b"],
                         params["head_w"], params["head_b"])  # (B, embed_dim)


# ------------------------------ main ------------------------------------------

if __name__ == "__main__":
    # Small synthetic Whisper-encoder config (whisper-large replaced by tiny dims).
    cfg = dict(n_mels=8, d_model=32, n_heads=4, d_ff=64, n_layers=2,
               embed_dim=16, max_pos=64)

    key = jax.random.PRNGKey(0)
    k_params, k_x = jax.random.split(key)
    params = init_params(k_params, cfg)

    B, T_in = 2, 16
    features = jax.random.normal(k_x, (B, cfg["n_mels"], T_in), jnp.float32)  # NCW

    fwd = jax.jit(functools.partial(audio_encoder_forward, cfg=cfg))
    out = fwd(params, features)
    out = jax.block_until_ready(out)

    assert out.shape == (B, cfg["embed_dim"]), out.shape
    assert bool(jnp.all(jnp.isfinite(out)))
    print("KERNEL_OK")
</pallas_src>

<mosaic_0001>
module attributes {stable_mosaic.version = 11 : i64} {
  func.func @_fused_matmul_kernel(%arg0: i32, %arg1: i32, %arg2: i32, %arg3: memref<32x24xf32, #tpu.memory_space<vmem>>, %arg4: memref<24x32xf32, #tpu.memory_space<vmem>>, %arg5: memref<1x32xf32, #tpu.memory_space<vmem>>, %arg6: memref<32x32xf32, #tpu.memory_space<vmem>>, %arg7: memref<32x32xf32, #tpu.memory_space<vmem>>) attributes {dimension_semantics = [#tpu.dimension_semantics<parallel>, #tpu.dimension_semantics<parallel>, #tpu.dimension_semantics<arbitrary>], iteration_bounds = array<i64: 1, 1, 1>, scalar_prefetch = 0 : i64, scratch_operands = 1 : i64, tpu.core_type = #tpu.core_type<tc>, window_params = [{transform_indices = @transform_0, window_bounds = array<i64: 32, 24>}, {transform_indices = @transform_1, window_bounds = array<i64: 24, 32>}, {transform_indices = @transform_2, window_bounds = array<i64: 1, 32>}, {transform_indices = @transform_3, window_bounds = array<i64: 32, 32>}]} {
    %c0_i32 = arith.constant 0 : i32
    %0 = arith.cmpi eq, %arg2, %c0_i32 : i32
    %1 = arith.extui %0 : i1 to i32
    %c0_i32_0 = arith.constant 0 : i32
    %2 = arith.cmpi ne, %1, %c0_i32_0 : i32
    scf.if %2 {
      %cst_10 = arith.constant 0.000000e+00 : f32
      %14 = vector.broadcast %cst_10 : f32 to vector<32x32xf32>
      %c0_11 = arith.constant 0 : index
      %c0_12 = arith.constant 0 : index
      %15 = vector.load %arg7[%c0_11, %c0_12] : memref<32x32xf32, #tpu.memory_space<vmem>>, vector<32x32xf32>
      tpu.vector_store %arg7[%c0_11, %c0_12], %14 {strides = array<i32>} : memref<32x32xf32, #tpu.memory_space<vmem>>, vector<32x32xf32>,
    } else {
    }
    %c0 = arith.constant 0 : index
    %c0_1 = arith.constant 0 : index
    %3 = vector.load %arg3[%c0, %c0_1] : memref<32x24xf32, #tpu.memory_space<vmem>>, vector<32x24xf32>
    %c0_2 = arith.constant 0 : index
    %c0_3 = arith.constant 0 : index
    %4 = vector.load %arg7[%c0_2, %c0_3] : memref<32x32xf32, #tpu.memory_space<vmem>>, vector<32x32xf32>
    %5 = arith.truncf %3 : vector<32x24xf32> to vector<32x24xbf16>
    %c0_4 = arith.constant 0 : index
    %c0_5 = arith.constant 0 : index
    %6 = vector.load %arg4[%c0_4, %c0_5] : memref<24x32xf32, #tpu.memory_space<vmem>>, vector<24x32xf32>
    %7 = arith.truncf %6 : vector<24x32xf32> to vector<24x32xbf16>
    %cst = arith.constant dense<0.000000e+00> : vector<32x32xf32>
    %8 = tpu.matmul %5, %7, %cst {dimension_numbers = #tpu.dot_dimension_numbers<[1], [0], [0], [1], [0, 0, 1, 1], [], []>} : vector<32x24xbf16>, vector<24x32xbf16>, vector<32x32xf32> -> vector<32x32xf32>
    %9 = arith.addf %4, %8 : vector<32x32xf32>
    %c0_6 = arith.constant 0 : index
    %c0_7 = arith.constant 0 : index
    %10 = vector.load %arg7[%c0_6, %c0_7] : memref<32x32xf32, #tpu.memory_space<vmem>>, vector<32x32xf32>
    tpu.vector_store %arg7[%c0_6, %c0_7], %9 {strides = array<i32>} : memref<32x32xf32, #tpu.memory_space<vmem>>, vector<32x32xf32>,
    %c0_i32_8 = arith.constant 0 : i32
    %11 = arith.cmpi eq, %arg2, %c0_i32_8 : i32
    %12 = arith.extui %11 : i1 to i32
    %c0_i32_9 = arith.constant 0 : i32
    %13 = arith.cmpi ne, %12, %c0_i32_9 : i32
    scf.if %13 {
      %c0_10 = arith.constant 0 : index
      %c0_11 = arith.constant 0 : index
      %14 = vector.load %arg7[%c0_10, %c0_11] : memref<32x32xf32, #tpu.memory_space<vmem>>, vector<32x32xf32>
      %c0_12 = arith.constant 0 : index
      %c0_13 = arith.constant 0 : index
      %15 = vector.load %arg5[%c0_12, %c0_13] : memref<1x32xf32, #tpu.memory_space<vmem>>, vector<1x32xf32>
      %16 = vector.broadcast %15 : vector<1x32xf32> to vector<32x32xf32>
      %17 = arith.addf %14, %16 : vector<32x32xf32>
      %18 = arith.mulf %17, %17 : vector<32x32xf32>
      %19 = arith.mulf %17, %18 : vector<32x32xf32>
      %cst_14 = arith.constant 4.471500e-02 : f32
      %20 = vector.broadcast %cst_14 : f32 to vector<32x32xf32>
      %21 = arith.mulf %20, %19 : vector<32x32xf32>
      %22 = arith.addf %17, %21 : vector<32x32xf32>
      %cst_15 = arith.constant 0.797884583 : f32
      %23 = vector.broadcast %cst_15 : f32 to vector<32x32xf32>
      %24 = arith.mulf %23, %22 : vector<32x32xf32>
      %25 = math.tanh %24 : vector<32x32xf32>
      %cst_16 = arith.constant 1.000000e+00 : f32
      %26 = vector.broadcast %cst_16 : f32 to vector<32x32xf32>
      %27 = arith.addf %26, %25 : vector<32x32xf32>
      %cst_17 = arith.constant 5.000000e-01 : f32
      %28 = vector.broadcast %cst_17 : f32 to vector<32x32xf32>
      %29 = arith.mulf %28, %27 : vector<32x32xf32>
      %30 = arith.mulf %17, %29 : vector<32x32xf32>
      %c0_18 = arith.constant 0 : index
      %c0_19 = arith.constant 0 : index
      %31 = vector.load %arg6[%c0_18, %c0_19] : memref<32x32xf32, #tpu.memory_space<vmem>>, vector<32x32xf32>
      tpu.vector_store %arg6[%c0_18, %c0_19], %30 {strides = array<i32>} : memref<32x32xf32, #tpu.memory_space<vmem>>, vector<32x32xf32>,
    } else {
    }
    return
  }
  func.func @transform_0(%arg0: i32, %arg1: i32, %arg2: i32) -> (i32, i32) {
    %c0_i32 = arith.constant 0 : i32
    return %arg0, %arg2 : i32, i32
  }
  func.func @transform_1(%arg0: i32, %arg1: i32, %arg2: i32) -> (i32, i32) {
    %c0_i32 = arith.constant 0 : i32
    return %arg2, %arg1 : i32, i32
  }
  func.func @transform_2(%arg0: i32, %arg1: i32, %arg2: i32) -> (i32, i32) {
    %c0_i32 = arith.constant 0 : i32
    %c0_i32_0 = arith.constant 0 : i32
    return %c0_i32, %arg1 : i32, i32
  }
  func.func @transform_3(%arg0: i32, %arg1: i32, %arg2: i32) -> (i32, i32) {
    %c0_i32 = arith.constant 0 : i32
    return %arg0, %arg1 : i32, i32
  }
}

module attributes {stable_mosaic.version = 11 : i64} {
  func.func @_fused_matmul_kernel(%arg0: i32, %arg1: i32, %arg2: i32, %arg3: memref<16x96xf32, #tpu.memory_space<vmem>>, %arg4: memref<96x32xf32, #tpu.memory_space<vmem>>, %arg5: memref<1x32xf32, #tpu.memory_space<vmem>>, %arg6: memref<16x32xf32, #tpu.memory_space<vmem>>, %arg7: memref<16x32xf32, #tpu.memory_space<vmem>>) attributes {dimension_semantics = [#tpu.dimension_semantics<parallel>, #tpu.dimension_semantics<parallel>, #tpu.dimension_semantics<arbitrary>], iteration_bounds = array<i64: 1, 1, 1>, scalar_prefetch = 0 : i64, scratch_operands = 1 : i64, tpu.core_type = #tpu.core_type<tc>, window_params = [{transform_indices = @transform_0, window_bounds = array<i64: 16, 96>}, {transform_indices = @transform_1, window_bounds = array<i64: 96, 32>}, {transform_indices = @transform_2, window_bounds = array<i64: 1, 32>}, {transform_indices = @transform_3, window_bounds = array<i64: 16, 32>}]} {
    %c0_i32 = arith.constant 0 : i32
    %0 = arith.cmpi eq, %arg2, %c0_i32 : i32
    %1 = arith.extui %0 : i1 to i32
    %c0_i32_0 = arith.constant 0 : i32
    %2 = arith.cmpi ne, %1, %c0_i32_0 : i32
    scf.if %2 {
      %cst_10 = arith.constant 0.000000e+00 : f32
      %14 = vector.broadcast %cst_10 : f32 to vector<16x32xf32>
      %c0_11 = arith.constant 0 : index
      %c0_12 = arith.constant 0 : index
      %15 = vector.load %arg7[%c0_11, %c0_12] : memref<16x32xf32, #tpu.memory_space<vmem>>, vector<16x32xf32>
      tpu.vector_store %arg7[%c0_11, %c0_12], %14 {strides = array<i32>} : memref<16x32xf32, #tpu.memory_space<vmem>>, vector<16x32xf32>,
    } else {
    }
    %c0 = arith.constant 0 : index
    %c0_1 = arith.constant 0 : index
    %3 = vector.load %arg3[%c0, %c0_1] : memref<16x96xf32, #tpu.memory_space<vmem>>, vector<16x96xf32>
    %c0_2 = arith.constant 0 : index
    %c0_3 = arith.constant 0 : index
    %4 = vector.load %arg7[%c0_2, %c0_3] : memref<16x32xf32, #tpu.memory_space<vmem>>, vector<16x32xf32>
    %5 = arith.truncf %3 : vector<16x96xf32> to vector<16x96xbf16>
    %c0_4 = arith.constant 0 : index
    %c0_5 = arith.constant 0 : index
    %6 = vector.load %arg4[%c0_4, %c0_5] : memref<96x32xf32, #tpu.memory_space<vmem>>, vector<96x32xf32>
    %7 = arith.truncf %6 : vector<96x32xf32> to vector<96x32xbf16>
    %cst = arith.constant dense<0.000000e+00> : vector<16x32xf32>
    %8 = tpu.matmul %5, %7, %cst {dimension_numbers = #tpu.dot_dimension_numbers<[1], [0], [0], [1], [0, 0, 1, 1], [], []>} : vector<16x96xbf16>, vector<96x32xbf16>, vector<16x32xf32> -> vector<16x32xf32>
    %9 = arith.addf %4, %8 : vector<16x32xf32>
    %c0_6 = arith.constant 0 : index
    %c0_7 = arith.constant 0 : index
    %10 = vector.load %arg7[%c0_6, %c0_7] : memref<16x32xf32, #tpu.memory_space<vmem>>, vector<16x32xf32>
    tpu.vector_store %arg7[%c0_6, %c0_7], %9 {strides = array<i32>} : memref<16x32xf32, #tpu.memory_space<vmem>>, vector<16x32xf32>,
    %c0_i32_8 = arith.constant 0 : i32
    %11 = arith.cmpi eq, %arg2, %c0_i32_8 : i32
    %12 = arith.extui %11 : i1 to i32
    %c0_i32_9 = arith.constant 0 : i32
    %13 = arith.cmpi ne, %12, %c0_i32_9 : i32
    scf.if %13 {
      %c0_10 = arith.constant 0 : index
      %c0_11 = arith.constant 0 : index
      %14 = vector.load %arg7[%c0_10, %c0_11] : memref<16x32xf32, #tpu.memory_space<vmem>>, vector<16x32xf32>
      %c0_12 = arith.constant 0 : index
      %c0_13 = arith.constant 0 : index
      %15 = vector.load %arg5[%c0_12, %c0_13] : memref<1x32xf32, #tpu.memory_space<vmem>>, vector<1x32xf32>
      %16 = vector.broadcast %15 : vector<1x32xf32> to vector<16x32xf32>
      %17 = arith.addf %14, %16 : vector<16x32xf32>
      %18 = arith.mulf %17, %17 : vector<16x32xf32>
      %19 = arith.mulf %17, %18 : vector<16x32xf32>
      %cst_14 = arith.constant 4.471500e-02 : f32
      %20 = vector.broadcast %cst_14 : f32 to vector<16x32xf32>
      %21 = arith.mulf %20, %19 : vector<16x32xf32>
      %22 = arith.addf %17, %21 : vector<16x32xf32>
      %cst_15 = arith.constant 0.797884583 : f32
      %23 = vector.broadcast %cst_15 : f32 to vector<16x32xf32>
      %24 = arith.mulf %23, %22 : vector<16x32xf32>
      %25 = math.tanh %24 : vector<16x32xf32>
      %cst_16 = arith.constant 1.000000e+00 : f32
      %26 = vector.broadcast %cst_16 : f32 to vector<16x32xf32>
      %27 = arith.addf %26, %25 : vector<16x32xf32>
      %cst_17 = arith.constant 5.000000e-01 : f32
      %28 = vector.broadcast %cst_17 : f32 to vector<16x32xf32>
      %29 = arith.mulf %28, %27 : vector<16x32xf32>
      %30 = arith.mulf %17, %29 : vector<16x32xf32>
      %c0_18 = arith.constant 0 : index
      %c0_19 = arith.constant 0 : index
      %31 = vector.load %arg6[%c0_18, %c0_19] : memref<16x32xf32, #tpu.memory_space<vmem>>, vector<16x32xf32>
      tpu.vector_store %arg6[%c0_18, %c0_19], %30 {strides = array<i32>} : memref<16x32xf32, #tpu.memory_space<vmem>>, vector<16x32xf32>,
    } else {
    }
    return
  }
  func.func @transform_0(%arg0: i32, %arg1: i32, %arg2: i32) -> (i32, i32) {
    %c0_i32 = arith.constant 0 : i32
    return %arg0, %arg2 : i32, i32
  }
  func.func @transform_1(%arg0: i32, %arg1: i32, %arg2: i32) -> (i32, i32) {
    %c0_i32 = arith.constant 0 : i32
    return %arg2, %arg1 : i32, i32
  }
  func.func @transform_2(%arg0: i32, %arg1: i32, %arg2: i32) -> (i32, i32) {
    %c0_i32 = arith.constant 0 : i32
    %c0_i32_0 = arith.constant 0 : i32
    return %c0_i32, %arg1 : i32, i32
  }
  func.func @transform_3(%arg0: i32, %arg1: i32, %arg2: i32) -> (i32, i32) {
    %c0_i32 = arith.constant 0 : i32
    return %arg0, %arg1 : i32, i32
  }
}

module attributes {stable_mosaic.version = 11 : i64} {
  func.func @_fused_matmul_kernel(%arg0: i32, %arg1: i32, %arg2: i32, %arg3: memref<16x32xf32, #tpu.memory_space<vmem>>, %arg4: memref<32x96xf32, #tpu.memory_space<vmem>>, %arg5: memref<1x96xf32, #tpu.memory_space<vmem>>, %arg6: memref<1x32xf32, #tpu.memory_space<vmem>>, %arg7: memref<1x32xf32, #tpu.memory_space<vmem>>, %arg8: memref<16x96xf32, #tpu.memory_space<vmem>>, %arg9: memref<16x96xf32, #tpu.memory_space<vmem>>) attributes {dimension_semantics = [#tpu.dimension_semantics<parallel>, #tpu.dimension_semantics<parallel>, #tpu.dimension_semantics<arbitrary>], iteration_bounds = array<i64: 1, 1, 1>, scalar_prefetch = 0 : i64, scratch_operands = 1 : i64, tpu.core_type = #tpu.core_type<tc>, window_params = [{transform_indices = @transform_0, window_bounds = array<i64: 16, 32>}, {transform_indices = @transform_1, window_bounds = array<i64: 32, 96>}, {transform_indices = @transform_2, window_bounds = array<i64: 1, 96>}, {pipeline_mode = #tpu.pipeline_mode<synchronous>, transform_indices = @transform_3, window_bounds = array<i64: 1, 32>}, {pipeline_mode = #tpu.pipeline_mode<synchronous>, transform_indices = @transform_4, window_bounds = array<i64: 1, 32>}, {transform_indices = @transform_5, window_bounds = array<i64: 16, 96>}]} {
    %c0_i32 = arith.constant 0 : i32
    %0 = arith.cmpi eq, %arg2, %c0_i32 : i32
    %1 = arith.extui %0 : i1 to i32
    %c0_i32_0 = arith.constant 0 : i32
    %2 = arith.cmpi ne, %1, %c0_i32_0 : i32
    scf.if %2 {
      %cst_19 = arith.constant 0.000000e+00 : f32
      %36 = vector.broadcast %cst_19 : f32 to vector<16x96xf32>
      %c0_20 = arith.constant 0 : index
      %c0_21 = arith.constant 0 : index
      %37 = vector.load %arg9[%c0_20, %c0_21] : memref<16x96xf32, #tpu.memory_space<vmem>>, vector<16x96xf32>
      tpu.vector_store %arg9[%c0_20, %c0_21], %36 {strides = array<i32>} : memref<16x96xf32, #tpu.memory_space<vmem>>, vector<16x96xf32>,
    } else {
    }
    %c0 = arith.constant 0 : index
    %c0_1 = arith.constant 0 : index
    %3 = vector.load %arg3[%c0, %c0_1] : memref<16x32xf32, #tpu.memory_space<vmem>>, vector<16x32xf32>
    %cst = arith.constant dense<0.000000e+00> : vector<16xf32>
    %4 = vector.multi_reduction <add>, %3, %cst [1] : vector<16x32xf32> to vector<16xf32>
    %5 = vector.shape_cast %4 : vector<16xf32> to vector<16x1xf32>
    %cst_2 = arith.constant 3.200000e+01 : f32
    %6 = vector.broadcast %cst_2 : f32 to vector<16x1xf32>
    %7 = arith.divf %5, %6 : vector<16x1xf32>
    %8 = vector.broadcast %7 : vector<16x1xf32> to vector<16x32xf32>
    %9 = arith.subf %3, %8 : vector<16x32xf32>
    %10 = arith.mulf %9, %9 : vector<16x32xf32>
    %cst_3 = arith.constant dense<0.000000e+00> : vector<16xf32>
    %11 = vector.multi_reduction <add>, %10, %cst_3 [1] : vector<16x32xf32> to vector<16xf32>
    %12 = vector.shape_cast %11 : vector<16xf32> to vector<16x1xf32>
    %cst_4 = arith.constant 3.200000e+01 : f32
    %13 = vector.broadcast %cst_4 : f32 to vector<16x1xf32>
    %14 = arith.divf %12, %13 : vector<16x1xf32>
    %cst_5 = arith.constant 9.99999974E-6 : f32
    %15 = vector.broadcast %cst_5 : f32 to vector<16x1xf32>
    %16 = arith.addf %14, %15 : vector<16x1xf32>
    %17 = math.rsqrt %16 : vector<16x1xf32>
    %18 = vector.broadcast %17 : vector<16x1xf32> to vector<16x32xf32>
    %19 = arith.mulf %9, %18 : vector<16x32xf32>
    %c0_6 = arith.constant 0 : index
    %c0_7 = arith.constant 0 : index
    %20 = vector.load %arg6[%c0_6, %c0_7] : memref<1x32xf32, #tpu.memory_space<vmem>>, vector<1x32xf32>
    %21 = vector.broadcast %20 : vector<1x32xf32> to vector<16x32xf32>
    %22 = arith.mulf %19, %21 : vector<16x32xf32>
    %c0_8 = arith.constant 0 : index
    %c0_9 = arith.constant 0 : index
    %23 = vector.load %arg7[%c0_8, %c0_9] : memref<1x32xf32, #tpu.memory_space<vmem>>, vector<1x32xf32>
    %24 = vector.broadcast %23 : vector<1x32xf32> to vector<16x32xf32>
    %25 = arith.addf %22, %24 : vector<16x32xf32>
    %c0_10 = arith.constant 0 : index
    %c0_11 = arith.constant 0 : index
    %26 = vector.load %arg9[%c0_10, %c0_11] : memref<16x96xf32, #tpu.memory_space<vmem>>, vector<16x96xf32>
    %27 = arith.truncf %25 : vector<16x32xf32> to vector<16x32xbf16>
    %c0_12 = arith.constant 0 : index
    %c0_13 = arith.constant 0 : index
    %28 = vector.load %arg4[%c0_12, %c0_13] : memref<32x96xf32, #tpu.memory_space<vmem>>, vector<32x96xf32>
    %29 = arith.truncf %28 : vector<32x96xf32> to vector<32x96xbf16>
    %cst_14 = arith.constant dense<0.000000e+00> : vector<16x96xf32>
    %30 = tpu.matmul %27, %29, %cst_14 {dimension_numbers = #tpu.dot_dimension_numbers<[1], [0], [0], [1], [0, 0, 1, 1], [], []>} : vector<16x32xbf16>, vector<32x96xbf16>, vector<16x96xf32> -> vector<16x96xf32>
    %31 = arith.addf %26, %30 : vector<16x96xf32>
    %c0_15 = arith.constant 0 : index
    %c0_16 = arith.constant 0 : index
    %32 = vector.load %arg9[%c0_15, %c0_16] : memref<16x96xf32, #tpu.memory_space<vmem>>, vector<16x96xf32>
    tpu.vector_store %arg9[%c0_15, %c0_16], %31 {strides = array<i32>} : memref<16x96xf32, #tpu.memory_space<vmem>>, vector<16x96xf32>,
    %c0_i32_17 = arith.constant 0 : i32
    %33 = arith.cmpi eq, %arg2, %c0_i32_17 : i32
    %34 = arith.extui %33 : i1 to i32
    %c0_i32_18 = arith.constant 0 : i32
    %35 = arith.cmpi ne, %34, %c0_i32_18 : i32
    scf.if %35 {
      %c0_19 = arith.constant 0 : index
      %c0_20 = arith.constant 0 : index
      %36 = vector.load %arg9[%c0_19, %c0_20] : memref<16x96xf32, #tpu.memory_space<vmem>>, vector<16x96xf32>
      %c0_21 = arith.constant 0 : index
      %c0_22 = arith.constant 0 : index
      %37 = vector.load %arg5[%c0_21, %c0_22] : memref<1x96xf32, #tpu.memory_space<vmem>>, vector<1x96xf32>
      %38 = vector.broadcast %37 : vector<1x96xf32> to vector<16x96xf32>
      %39 = arith.addf %36, %38 : vector<16x96xf32>
      %c0_23 = arith.constant 0 : index
      %c0_24 = arith.constant 0 : index
      %40 = vector.load %arg8[%c0_23, %c0_24] : memref<16x96xf32, #tpu.memory_space<vmem>>, vector<16x96xf32>
      tpu.vector_store %arg8[%c0_23, %c0_24], %39 {strides = array<i32>} : memref<16x96xf32, #tpu.memory_space<vmem>>, vector<16x96xf32>,
    } else {
    }
    return
  }
  func.func @transform_0(%arg0: i32, %arg1: i32, %arg2: i32) -> (i32, i32) {
    %c0_i32 = arith.constant 0 : i32
    return %arg0, %arg2 : i32, i32
  }
  func.func @transform_1(%arg0: i32, %arg1: i32, %arg2: i32) -> (i32, i32) {
    %c0_i32 = arith.constant 0 : i32
    return %arg2, %arg1 : i32, i32
  }
  func.func @transform_2(%arg0: i32, %arg1: i32, %arg2: i32) -> (i32, i32) {
    %c0_i32 = arith.constant 0 : i32
    %c0_i32_0 = arith.constant 0 : i32
    return %c0_i32, %arg1 : i32, i32
  }
  func.func @transform_3(%arg0: i32, %arg1: i32, %arg2: i32) -> (i32, i32) {
    %c0_i32 = arith.constant 0 : i32
    %c0_i32_0 = arith.constant 0 : i32
    %c0_i32_1 = arith.constant 0 : i32
    return %c0_i32, %c0_i32_0 : i32, i32
  }
  func.func @transform_4(%arg0: i32, %arg1: i32, %arg2: i32) -> (i32, i32) {
    %c0_i32 = arith.constant 0 : i32
    %c0_i32_0 = arith.constant 0 : i32
    %c0_i32_1 = arith.constant 0 : i32
    return %c0_i32, %c0_i32_0 : i32, i32
  }
  func.func @transform_5(%arg0: i32, %arg1: i32, %arg2: i32) -> (i32, i32) {
    %c0_i32 = arith.constant 0 : i32
    return %arg0, %arg1 : i32, i32
  }
}

module attributes {stable_mosaic.version = 11 : i64} {
  func.func @_attention_kernel(%arg0: i32, %arg1: i32, %arg2: i32, %arg3: memref<1x8x32xf32, #tpu.memory_space<vmem>>, %arg4: memref<1x8x32xf32, #tpu.memory_space<vmem>>, %arg5: memref<1x8x32xf32, #tpu.memory_space<vmem>>, %arg6: memref<1x8x32xf32, #tpu.memory_space<vmem>>, %arg7: memref<8x4xf32, #tpu.memory_space<vmem>>, %arg8: memref<8x4xf32, #tpu.memory_space<vmem>>, %arg9: memref<8x32xf32, #tpu.memory_space<vmem>>) attributes {dimension_semantics = [#tpu.dimension_semantics<parallel>, #tpu.dimension_semantics<parallel>, #tpu.dimension_semantics<arbitrary>], iteration_bounds = array<i64: 2, 1, 1>, scalar_prefetch = 0 : i64, scratch_operands = 3 : i64, tpu.core_type = #tpu.core_type<tc>, window_params = [{transform_indices = @transform_0, window_bounds = array<i64: 1, 8, 32>}, {transform_indices = @transform_1, window_bounds = array<i64: 1, 8, 32>}, {transform_indices = @transform_2, window_bounds = array<i64: 1, 8, 32>}, {transform_indices = @transform_3, window_bounds = array<i64: 1, 8, 32>}]} {
    %c0_i32 = arith.constant 0 : i32
    %0 = arith.cmpi eq, %arg2, %c0_i32 : i32
    %1 = arith.extui %0 : i1 to i32
    %c0_i32_0 = arith.constant 0 : i32
    %2 = arith.cmpi ne, %1, %c0_i32_0 : i32
    scf.if %2 {
      %cst_68 = arith.constant 0xFF800000 : f32
      %123 = vector.broadcast %cst_68 : f32 to vector<8x4xf32>
      %c0_69 = arith.constant 0 : index
      %c0_70 = arith.constant 0 : index
      %124 = vector.load %arg7[%c0_69, %c0_70] : memref<8x4xf32, #tpu.memory_space<vmem>>, vector<8x4xf32>
      tpu.vector_store %arg7[%c0_69, %c0_70], %123 {strides = array<i32>} : memref<8x4xf32, #tpu.memory_space<vmem>>, vector<8x4xf32>,
      %cst_71 = arith.constant 0.000000e+00 : f32
      %125 = vector.broadcast %cst_71 : f32 to vector<8x4xf32>
      %c0_72 = arith.constant 0 : index
      %c0_73 = arith.constant 0 : index
      %126 = vector.load %arg8[%c0_72, %c0_73] : memref<8x4xf32, #tpu.memory_space<vmem>>, vector<8x4xf32>
      tpu.vector_store %arg8[%c0_72, %c0_73], %125 {strides = array<i32>} : memref<8x4xf32, #tpu.memory_space<vmem>>, vector<8x4xf32>,
      %cst_74 = arith.constant 0.000000e+00 : f32
      %127 = vector.broadcast %cst_74 : f32 to vector<8x32xf32>
      %c0_75 = arith.constant 0 : index
      %c0_76 = arith.constant 0 : index
      %128 = vector.load %arg9[%c0_75, %c0_76] : memref<8x32xf32, #tpu.memory_space<vmem>>, vector<8x32xf32>
      tpu.vector_store %arg9[%c0_75, %c0_76], %127 {strides = array<i32>} : memref<8x32xf32, #tpu.memory_space<vmem>>, vector<8x32xf32>,
    } else {
    }
    %c0 = arith.constant 0 : index
    %c0_1 = arith.constant 0 : index
    %c0_2 = arith.constant 0 : index
    %3 = vector.load %arg3[%c0, %c0_1, %c0_2] : memref<1x8x32xf32, #tpu.memory_space<vmem>>, vector<1x8x32xf32>
    %4 = vector.shape_cast %3 : vector<1x8x32xf32> to vector<8x32xf32>
    %5 = arith.truncf %4 : vector<8x32xf32> to vector<8x32xbf16>
    %c0_3 = arith.constant 0 : index
    %c0_4 = arith.constant 0 : index
    %c0_5 = arith.constant 0 : index
    %6 = vector.load %arg4[%c0_3, %c0_4, %c0_5] : memref<1x8x32xf32, #tpu.memory_space<vmem>>, vector<1x8x32xf32>
    %7 = vector.shape_cast %6 : vector<1x8x32xf32> to vector<8x32xf32>
    %8 = arith.truncf %7 : vector<8x32xf32> to vector<8x32xbf16>
    %c0_6 = arith.constant 0 : index
    %c0_7 = arith.constant 0 : index
    %c0_8 = arith.constant 0 : index
    %9 = vector.load %arg5[%c0_6, %c0_7, %c0_8] : memref<1x8x32xf32, #tpu.memory_space<vmem>>, vector<1x8x32xf32>
    %10 = vector.shape_cast %9 : vector<1x8x32xf32> to vector<8x32xf32>
    %11 = arith.truncf %10 : vector<8x32xf32> to vector<8x32xbf16>
    %12 = vector.extract_strided_slice %5 {offsets = [0, 0], sizes = [8, 8], strides = [1, 1]} : vector<8x32xbf16> to vector<8x8xbf16>
    %13 = vector.extract_strided_slice %8 {offsets = [0, 0], sizes = [8, 8], strides = [1, 1]} : vector<8x32xbf16> to vector<8x8xbf16>
    %cst = arith.constant dense<0.000000e+00> : vector<8x8xf32>
    %14 = tpu.matmul %12, %13, %cst {dimension_numbers = #tpu.dot_dimension_numbers<[1], [1], [0], [0], [0, 0, 1, 0], [], []>} : vector<8x8xbf16>, vector<8x8xbf16>, vector<8x8xf32> -> vector<8x8xf32>
    %c0_9 = arith.constant 0 : index
    %c0_10 = arith.constant 0 : index
    %15 = vector.load %arg7[%c0_9, %c0_10] : memref<8x4xf32, #tpu.memory_space<vmem>>, vector<8x1xf32>
    %cst_11 = arith.constant dense<0xFF800000> : vector<8xf32>
    %16 = vector.multi_reduction <maximumf>, %14, %cst_11 [1] : vector<8x8xf32> to vector<8xf32>
    %17 = vector.shape_cast %16 : vector<8xf32> to vector<8x1xf32>
    %18 = arith.maximumf %15, %17 : vector<8x1xf32>
    %19 = arith.subf %15, %18 : vector<8x1xf32>
    %20 = math.exp %19 : vector<8x1xf32>
    %21 = vector.broadcast %18 : vector<8x1xf32> to vector<8x8xf32>
    %22 = arith.subf %14, %21 : vector<8x8xf32>
    %23 = math.exp %22 : vector<8x8xf32>
    %c0_12 = arith.constant 0 : index
    %c0_13 = arith.constant 0 : index
    %24 = vector.load %arg8[%c0_12, %c0_13] : memref<8x4xf32, #tpu.memory_space<vmem>>, vector<8x1xf32>
    %25 = arith.mulf %20, %24 : vector<8x1xf32>
    %cst_14 = arith.constant dense<0.000000e+00> : vector<8xf32>
    %26 = vector.multi_reduction <add>, %23, %cst_14 [1] : vector<8x8xf32> to vector<8xf32>
    %27 = vector.shape_cast %26 : vector<8xf32> to vector<8x1xf32>
    %28 = arith.addf %25, %27 : vector<8x1xf32>
    %c0_15 = arith.constant 0 : index
    %c0_16 = arith.constant 0 : index
    %29 = vector.load %arg8[%c0_15, %c0_16] : memref<8x4xf32, #tpu.memory_space<vmem>>, vector<8x1xf32>
    tpu.vector_store %arg8[%c0_15, %c0_16], %28 {strides = array<i32>} : memref<8x4xf32, #tpu.memory_space<vmem>>, vector<8x1xf32>,
    %30 = arith.truncf %23 : vector<8x8xf32> to vector<8x8xbf16>
    %31 = vector.extract_strided_slice %11 {offsets = [0, 0], sizes = [8, 8], strides = [1, 1]} : vector<8x32xbf16> to vector<8x8xbf16>
    %cst_17 = arith.constant dense<0.000000e+00> : vector<8x8xf32>
    %32 = tpu.matmul %30, %31, %cst_17 {dimension_numbers = #tpu.dot_dimension_numbers<[1], [0], [0], [1], [0, 0, 1, 1], [], []>} : vector<8x8xbf16>, vector<8x8xbf16>, vector<8x8xf32> -> vector<8x8xf32>
    %c0_18 = arith.constant 0 : index
    %c0_19 = arith.constant 0 : index
    %33 = vector.load %arg9[%c0_18, %c0_19] : memref<8x32xf32, #tpu.memory_space<vmem>>, vector<8x8xf32>
    %34 = vector.broadcast %20 : vector<8x1xf32> to vector<8x8xf32>
    %35 = arith.mulf %34, %33 : vector<8x8xf32>
    %36 = arith.addf %35, %32 : vector<8x8xf32>
    %c0_20 = arith.constant 0 : index
    %c0_21 = arith.constant 0 : index
    %37 = vector.load %arg9[%c0_20, %c0_21] : memref<8x32xf32, #tpu.memory_space<vmem>>, vector<8x8xf32>
    tpu.vector_store %arg9[%c0_20, %c0_21], %36 {strides = array<i32>} : memref<8x32xf32, #tpu.memory_space<vmem>>, vector<8x8xf32>,
    %c0_22 = arith.constant 0 : index
    %c0_23 = arith.constant 0 : index
    %38 = vector.load %arg7[%c0_22, %c0_23] : memref<8x4xf32, #tpu.memory_space<vmem>>, vector<8x1xf32>
    tpu.vector_store %arg7[%c0_22, %c0_23], %18 {strides = array<i32>} : memref<8x4xf32, #tpu.memory_space<vmem>>, vector<8x1xf32>,
    %39 = vector.extract_strided_slice %5 {offsets = [0, 8], sizes = [8, 8], strides = [1, 1]} : vector<8x32xbf16> to vector<8x8xbf16>
    %40 = vector.extract_strided_slice %8 {offsets = [0, 8], sizes = [8, 8], strides = [1, 1]} : vector<8x32xbf16> to vector<8x8xbf16>
    %cst_24 = arith.constant dense<0.000000e+00> : vector<8x8xf32>
    %41 = tpu.matmul %39, %40, %cst_24 {dimension_numbers = #tpu.dot_dimension_numbers<[1], [1], [0], [0], [0, 0, 1, 0], [], []>} : vector<8x8xbf16>, vector<8x8xbf16>, vector<8x8xf32> -> vector<8x8xf32>
    %c0_25 = arith.constant 0 : index
    %c1 = arith.constant 1 : index
    %42 = vector.load %arg7[%c0_25, %c1] : memref<8x4xf32, #tpu.memory_space<vmem>>, vector<8x1xf32>
    %cst_26 = arith.constant dense<0xFF800000> : vector<8xf32>
    %43 = vector.multi_reduction <maximumf>, %41, %cst_26 [1] : vector<8x8xf32> to vector<8xf32>
    %44 = vector.shape_cast %43 : vector<8xf32> to vector<8x1xf32>
    %45 = arith.maximumf %42, %44 : vector<8x1xf32>
    %46 = arith.subf %42, %45 : vector<8x1xf32>
    %47 = math.exp %46 : vector<8x1xf32>
    %48 = vector.broadcast %45 : vector<8x1xf32> to vector<8x8xf32>
    %49 = arith.subf %41, %48 : vector<8x8xf32>
    %50 = math.exp %49 : vector<8x8xf32>
    %c0_27 = arith.constant 0 : index
    %c1_28 = arith.constant 1 : index
    %51 = vector.load %arg8[%c0_27, %c1_28] : memref<8x4xf32, #tpu.memory_space<vmem>>, vector<8x1xf32>
    %52 = arith.mulf %47, %51 : vector<8x1xf32>
    %cst_29 = arith.constant dense<0.000000e+00> : vector<8xf32>
    %53 = vector.multi_reduction <add>, %50, %cst_29 [1] : vector<8x8xf32> to vector<8xf32>
    %54 = vector.shape_cast %53 : vector<8xf32> to vector<8x1xf32>
    %55 = arith.addf %52, %54 : vector<8x1xf32>
    %c0_30 = arith.constant 0 : index
    %c1_31 = arith.constant 1 : index
    %56 = vector.load %arg8[%c0_30, %c1_31] : memref<8x4xf32, #tpu.memory_space<vmem>>, vector<8x1xf32>
    tpu.vector_store %arg8[%c0_30, %c1_31], %55 {strides = array<i32>} : memref<8x4xf32, #tpu.memory_space<vmem>>, vector<8x1xf32>,
    %57 = arith.truncf %50 : vector<8x8xf32> to vector<8x8xbf16>
    %58 = vector.extract_strided_slice %11 {offsets = [0, 8], sizes = [8, 8], strides = [1, 1]} : vector<8x32xbf16> to vector<8x8xbf16>
    %cst_32 = arith.constant dense<0.000000e+00> : vector<8x8xf32>
    %59 = tpu.matmul %57, %58, %cst_32 {dimension_numbers = #tpu.dot_dimension_numbers<[1], [0], [0], [1], [0, 0, 1, 1], [], []>} : vector<8x8xbf16>, vector<8x8xbf16>, vector<8x8xf32> -> vector<8x8xf32>
    %c0_33 = arith.constant 0 : index
    %c8 = arith.constant 8 : index
    %60 = vector.load %arg9[%c0_33, %c8] : memref<8x32xf32, #tpu.memory_space<vmem>>, vector<8x8xf32>
    %61 = vector.broadcast %47 : vector<8x1xf32> to vector<8x8xf32>
    %62 = arith.mulf %61, %60 : vector<8x8xf32>
    %63 = arith.addf %62, %59 : vector<8x8xf32>
    %c0_34 = arith.constant 0 : index
    %c8_35 = arith.constant 8 : index
    %64 = vector.load %arg9[%c0_34, %c8_35] : memref<8x32xf32, #tpu.memory_space<vmem>>, vector<8x8xf32>
    tpu.vector_store %arg9[%c0_34, %c8_35], %63 {strides = array<i32>} : memref<8x32xf32, #tpu.memory_space<vmem>>, vector<8x8xf32>,
    %c0_36 = arith.constant 0 : index
    %c1_37 = arith.constant 1 : index
    %65 = vector.load %arg7[%c0_36, %c1_37] : memref<8x4xf32, #tpu.memory_space<vmem>>, vector<8x1xf32>
    tpu.vector_store %arg7[%c0_36, %c1_37], %45 {strides = array<i32>} : memref<8x4xf32, #tpu.memory_space<vmem>>, vector<8x1xf32>,
    %66 = vector.extract_strided_slice %5 {offsets = [0, 16], sizes = [8, 8], strides = [1, 1]} : vector<8x32xbf16> to vector<8x8xbf16>
    %67 = vector.extract_strided_slice %8 {offsets = [0, 16], sizes = [8, 8], strides = [1, 1]} : vector<8x32xbf16> to vector<8x8xbf16>
    %cst_38 = arith.constant dense<0.000000e+00> : vector<8x8xf32>
    %68 = tpu.matmul %66, %67, %cst_38 {dimension_numbers = #tpu.dot_dimension_numbers<[1], [1], [0], [0], [0, 0, 1, 0], [], []>} : vector<8x8xbf16>, vector<8x8xbf16>, vector<8x8xf32> -> vector<8x8xf32>
    %c0_39 = arith.constant 0 : index
    %c2 = arith.constant 2 : index
    %69 = vector.load %arg7[%c0_39, %c2] : memref<8x4xf32, #tpu.memory_space<vmem>>, vector<8x1xf32>
    %cst_40 = arith.constant dense<0xFF800000> : vector<8xf32>
    %70 = vector.multi_reduction <maximumf>, %68, %cst_40 [1] : vector<8x8xf32> to vector<8xf32>
    %71 = vector.shape_cast %70 : vector<8xf32> to vector<8x1xf32>
    %72 = arith.maximumf %69, %71 : vector<8x1xf32>
    %73 = arith.subf %69, %72 : vector<8x1xf32>
    %74 = math.exp %73 : vector<8x1xf32>
    %75 = vector.broadcast %72 : vector<8x1xf32> to vector<8x8xf32>
    %76 = arith.subf %68, %75 : vector<8x8xf32>
    %77 = math.exp %76 : vector<8x8xf32>
    %c0_41 = arith.constant 0 : index
    %c2_42 = arith.constant 2 : index
    %78 = vector.load %arg8[%c0_41, %c2_42] : memref<8x4xf32, #tpu.memory_space<vmem>>, vector<8x1xf32>
    %79 = arith.mulf %74, %78 : vector<8x1xf32>
    %cst_43 = arith.constant dense<0.000000e+00> : vector<8xf32>
    %80 = vector.multi_reduction <add>, %77, %cst_43 [1] : vector<8x8xf32> to vector<8xf32>
    %81 = vector.shape_cast %80 : vector<8xf32> to vector<8x1xf32>
    %82 = arith.addf %79, %81 : vector<8x1xf32>
    %c0_44 = arith.constant 0 : index
    %c2_45 = arith.constant 2 : index
    %83 = vector.load %arg8[%c0_44, %c2_45] : memref<8x4xf32, #tpu.memory_space<vmem>>, vector<8x1xf32>
    tpu.vector_store %arg8[%c0_44, %c2_45], %82 {strides = array<i32>} : memref<8x4xf32, #tpu.memory_space<vmem>>, vector<8x1xf32>,
    %84 = arith.truncf %77 : vector<8x8xf32> to vector<8x8xbf16>
    %85 = vector.extract_strided_slice %11 {offsets = [0, 16], sizes = [8, 8], strides = [1, 1]} : vector<8x32xbf16> to vector<8x8xbf16>
    %cst_46 = arith.constant dense<0.000000e+00> : vector<8x8xf32>
    %86 = tpu.matmul %84, %85, %cst_46 {dimension_numbers = #tpu.dot_dimension_numbers<[1], [0], [0], [1], [0, 0, 1, 1], [], []>} : vector<8x8xbf16>, vector<8x8xbf16>, vector<8x8xf32> -> vector<8x8xf32>
    %c0_47 = arith.constant 0 : index
    %c16 = arith.constant 16 : index
    %87 = vector.load %arg9[%c0_47, %c16] : memref<8x32xf32, #tpu.memory_space<vmem>>, vector<8x8xf32>
    %88 = vector.broadcast %74 : vector<8x1xf32> to vector<8x8xf32>
    %89 = arith.mulf %88, %87 : vector<8x8xf32>
    %90 = arith.addf %89, %86 : vector<8x8xf32>
    %c0_48 = arith.constant 0 : index
    %c16_49 = arith.constant 16 : index
    %91 = vector.load %arg9[%c0_48, %c16_49] : memref<8x32xf32, #tpu.memory_space<vmem>>, vector<8x8xf32>
    tpu.vector_store %arg9[%c0_48, %c16_49], %90 {strides = array<i32>} : memref<8x32xf32, #tpu.memory_space<vmem>>, vector<8x8xf32>,
    %c0_50 = arith.constant 0 : index
    %c2_51 = arith.constant 2 : index
    %92 = vector.load %arg7[%c0_50, %c2_51] : memref<8x4xf32, #tpu.memory_space<vmem>>, vector<8x1xf32>
    tpu.vector_store %arg7[%c0_50, %c2_51], %72 {strides = array<i32>} : memref<8x4xf32, #tpu.memory_space<vmem>>, vector<8x1xf32>,
    %93 = vector.extract_strided_slice %5 {offsets = [0, 24], sizes = [8, 8], strides = [1, 1]} : vector<8x32xbf16> to vector<8x8xbf16>
    %94 = vector.extract_strided_slice %8 {offsets = [0, 24], sizes = [8, 8], strides = [1, 1]} : vector<8x32xbf16> to vector<8x8xbf16>
    %cst_52 = arith.constant dense<0.000000e+00> : vector<8x8xf32>
    %95 = tpu.matmul %93, %94, %cst_52 {dimension_numbers = #tpu.dot_dimension_numbers<[1], [1], [0], [0], [0, 0, 1, 0], [], []>} : vector<8x8xbf16>, vector<8x8xbf16>, vector<8x8xf32> -> vector<8x8xf32>
    %c0_53 = arith.constant 0 : index
    %c3 = arith.constant 3 : index
    %96 = vector.load %arg7[%c0_53, %c3] : memref<8x4xf32, #tpu.memory_space<vmem>>, vector<8x1xf32>
    %cst_54 = arith.constant dense<0xFF800000> : vector<8xf32>
    %97 = vector.multi_reduction <maximumf>, %95, %cst_54 [1] : vector<8x8xf32> to vector<8xf32>
    %98 = vector.shape_cast %97 : vector<8xf32> to vector<8x1xf32>
    %99 = arith.maximumf %96, %98 : vector<8x1xf32>
    %100 = arith.subf %96, %99 : vector<8x1xf32>
    %101 = math.exp %100 : vector<8x1xf32>
    %102 = vector.broadcast %99 : vector<8x1xf32> to vector<8x8xf32>
    %103 = arith.subf %95, %102 : vector<8x8xf32>
    %104 = math.exp %103 : vector<8x8xf32>
    %c0_55 = arith.constant 0 : index
    %c3_56 = arith.constant 3 : index
    %105 = vector.load %arg8[%c0_55, %c3_56] : memref<8x4xf32, #tpu.memory_space<vmem>>, vector<8x1xf32>
    %106 = arith.mulf %101, %105 : vector<8x1xf32>
    %cst_57 = arith.constant dense<0.000000e+00> : vector<8xf32>
    %107 = vector.multi_reduction <add>, %104, %cst_57 [1] : vector<8x8xf32> to vector<8xf32>
    %108 = vector.shape_cast %107 : vector<8xf32> to vector<8x1xf32>
    %109 = arith.addf %106, %108 : vector<8x1xf32>
    %c0_58 = arith.constant 0 : index
    %c3_59 = arith.constant 3 : index
    %110 = vector.load %arg8[%c0_58, %c3_59] : memref<8x4xf32, #tpu.memory_space<vmem>>, vector<8x1xf32>
    tpu.vector_store %arg8[%c0_58, %c3_59], %109 {strides = array<i32>} : memref<8x4xf32, #tpu.memory_space<vmem>>, vector<8x1xf32>,
    %111 = arith.truncf %104 : vector<8x8xf32> to vector<8x8xbf16>
    %112 = vector.extract_strided_slice %11 {offsets = [0, 24], sizes = [8, 8], strides = [1, 1]} : vector<8x32xbf16> to vector<8x8xbf16>
    %cst_60 = arith.constant dense<0.000000e+00> : vector<8x8xf32>
    %113 = tpu.matmul %111, %112, %cst_60 {dimension_numbers = #tpu.dot_dimension_numbers<[1], [0], [0], [1], [0, 0, 1, 1], [], []>} : vector<8x8xbf16>, vector<8x8xbf16>, vector<8x8xf32> -> vector<8x8xf32>
    %c0_61 = arith.constant 0 : index
    %c24 = arith.constant 24 : index
    %114 = vector.load %arg9[%c0_61, %c24] : memref<8x32xf32, #tpu.memory_space<vmem>>, vector<8x8xf32>
    %115 = vector.broadcast %101 : vector<8x1xf32> to vector<8x8xf32>
    %116 = arith.mulf %115, %114 : vector<8x8xf32>
    %117 = arith.addf %116, %113 : vector<8x8xf32>
    %c0_62 = arith.constant 0 : index
    %c24_63 = arith.constant 24 : index
    %118 = vector.load %arg9[%c0_62, %c24_63] : memref<8x32xf32, #tpu.memory_space<vmem>>, vector<8x8xf32>
    tpu.vector_store %arg9[%c0_62, %c24_63], %117 {strides = array<i32>} : memref<8x32xf32, #tpu.memory_space<vmem>>, vector<8x8xf32>,
    %c0_64 = arith.constant 0 : index
    %c3_65 = arith.constant 3 : index
    %119 = vector.load %arg7[%c0_64, %c3_65] : memref<8x4xf32, #tpu.memory_space<vmem>>, vector<8x1xf32>
    tpu.vector_store %arg7[%c0_64, %c3_65], %99 {strides = array<i32>} : memref<8x4xf32, #tpu.memory_space<vmem>>, vector<8x1xf32>,
    %c0_i32_66 = arith.constant 0 : i32
    %120 = arith.cmpi eq, %arg2, %c0_i32_66 : i32
    %121 = arith.extui %120 : i1 to i32
    %c0_i32_67 = arith.constant 0 : i32
    %122 = arith.cmpi ne, %121, %c0_i32_67 : i32
    scf.if %122 {
      %c0_68 = arith.constant 0 : index
      %c0_69 = arith.constant 0 : index
      %123 = vector.load %arg8[%c0_68, %c0_69] : memref<8x4xf32, #tpu.memory_space<vmem>>, vector<8x4xf32>
      %124 = tpu.reciprocal %123 {approx = true} : vector<8x4xf32> -> vector<8x4xf32>
      %c0_70 = arith.constant 0 : index
      %c0_71 = arith.constant 0 : index
      %125 = vector.load %arg9[%c0_70, %c0_71] : memref<8x32xf32, #tpu.memory_space<vmem>>, vector<8x8xf32>
      %126 = vector.extract_strided_slice %124 {offsets = [0, 0], sizes = [8, 1], strides = [1, 1]} : vector<8x4xf32> to vector<8x1xf32>
      %127 = vector.broadcast %126 : vector<8x1xf32> to vector<8x8xf32>
      %128 = arith.mulf %125, %127 : vector<8x8xf32>
      %c0_72 = arith.constant 0 : index
      %c8_73 = arith.constant 8 : index
      %129 = vector.load %arg9[%c0_72, %c8_73] : memref<8x32xf32, #tpu.memory_space<vmem>>, vector<8x8xf32>
      %130 = vector.extract_strided_slice %124 {offsets = [0, 1], sizes = [8, 1], strides = [1, 1]} : vector<8x4xf32> to vector<8x1xf32>
      %131 = vector.broadcast %130 : vector<8x1xf32> to vector<8x8xf32>
      %132 = arith.mulf %129, %131 : vector<8x8xf32>
      %c0_74 = arith.constant 0 : index
      %c16_75 = arith.constant 16 : index
      %133 = vector.load %arg9[%c0_74, %c16_75] : memref<8x32xf32, #tpu.memory_space<vmem>>, vector<8x8xf32>
      %134 = vector.extract_strided_slice %124 {offsets = [0, 2], sizes = [8, 1], strides = [1, 1]} : vector<8x4xf32> to vector<8x1xf32>
      %135 = vector.broadcast %134 : vector<8x1xf32> to vector<8x8xf32>
      %136 = arith.mulf %133, %135 : vector<8x8xf32>
      %c0_76 = arith.constant 0 : index
      %c24_77 = arith.constant 24 : index
      %137 = vector.load %arg9[%c0_76, %c24_77] : memref<8x32xf32, #tpu.memory_space<vmem>>, vector<8x8xf32>
      %138 = vector.extract_strided_slice %124 {offsets = [0, 3], sizes = [8, 1], strides = [1, 1]} : vector<8x4xf32> to vector<8x1xf32>
      %139 = vector.broadcast %138 : vector<8x1xf32> to vector<8x8xf32>
      %140 = arith.mulf %137, %139 : vector<8x8xf32>
      %141 = tpu.concatenate %128, %132, %136, %140 in 1 : vector<8x8xf32>, vector<8x8xf32>, vector<8x8xf32>, vector<8x8xf32> -> vector<8x32xf32>
      %c0_78 = arith.constant 0 : index
      %c0_79 = arith.constant 0 : index
      %c0_80 = arith.constant 0 : index
      %142 = vector.load %arg6[%c0_78, %c0_79, %c0_80] : memref<1x8x32xf32, #tpu.memory_space<vmem>>, vector<1x8x32xf32>
      %143 = vector.shape_cast %142 : vector<1x8x32xf32> to vector<8x32xf32>
      %144 = vector.shape_cast %141 : vector<8x32xf32> to vector<1x8x32xf32>
      tpu.vector_store %arg6[%c0_78, %c0_79, %c0_80], %144 {strides = array<i32>} : memref<1x8x32xf32, #tpu.memory_space<vmem>>, vector<1x8x32xf32>,
    } else {
    }
    return
  }
  func.func @transform_0(%arg0: i32, %arg1: i32, %arg2: i32) -> (i32, i32, i32) {
    %c0_i32 = arith.constant 0 : i32
    %c0_i32_0 = arith.constant 0 : i32
    return %arg0, %arg1, %c0_i32 : i32, i32, i32
  }
  func.func @transform_1(%arg0: i32, %arg1: i32, %arg2: i32) -> (i32, i32, i32) {
    %c0_i32 = arith.constant 0 : i32
    %c0_i32_0 = arith.constant 0 : i32
    return %arg0, %arg2, %c0_i32 : i32, i32, i32
  }
  func.func @transform_2(%arg0: i32, %arg1: i32, %arg2: i32) -> (i32, i32, i32) {
    %c0_i32 = arith.constant 0 : i32
    %c0_i32_0 = arith.constant 0 : i32
    return %arg0, %arg2, %c0_i32 : i32, i32, i32
  }
  func.func @transform_3(%arg0: i32, %arg1: i32, %arg2: i32) -> (i32, i32, i32) {
    %c0_i32 = arith.constant 0 : i32
    %c0_i32_0 = arith.constant 0 : i32
    return %arg0, %arg1, %c0_i32 : i32, i32, i32
  }
}

module attributes {stable_mosaic.version = 11 : i64} {
  func.func @_fused_matmul_kernel(%arg0: i32, %arg1: i32, %arg2: i32, %arg3: memref<16x32xf32, #tpu.memory_space<vmem>>, %arg4: memref<32x32xf32, #tpu.memory_space<vmem>>, %arg5: memref<1x32xf32, #tpu.memory_space<vmem>>, %arg6: memref<16x32xf32, #tpu.memory_space<vmem>>, %arg7: memref<16x32xf32, #tpu.memory_space<vmem>>, %arg8: memref<16x32xf32, #tpu.memory_space<vmem>>) attributes {dimension_semantics = [#tpu.dimension_semantics<parallel>, #tpu.dimension_semantics<parallel>, #tpu.dimension_semantics<arbitrary>], iteration_bounds = array<i64: 1, 1, 1>, scalar_prefetch = 0 : i64, scratch_operands = 1 : i64, tpu.core_type = #tpu.core_type<tc>, window_params = [{transform_indices = @transform_0, window_bounds = array<i64: 16, 32>}, {transform_indices = @transform_1, window_bounds = array<i64: 32, 32>}, {transform_indices = @transform_2, window_bounds = array<i64: 1, 32>}, {transform_indices = @transform_3, window_bounds = array<i64: 16, 32>}, {transform_indices = @transform_4, window_bounds = array<i64: 16, 32>}]} {
    %c0_i32 = arith.constant 0 : i32
    %0 = arith.cmpi eq, %arg2, %c0_i32 : i32
    %1 = arith.extui %0 : i1 to i32
    %c0_i32_0 = arith.constant 0 : i32
    %2 = arith.cmpi ne, %1, %c0_i32_0 : i32
    scf.if %2 {
      %cst_10 = arith.constant 0.000000e+00 : f32
      %14 = vector.broadcast %cst_10 : f32 to vector<16x32xf32>
      %c0_11 = arith.constant 0 : index
      %c0_12 = arith.constant 0 : index
      %15 = vector.load %arg8[%c0_11, %c0_12] : memref<16x32xf32, #tpu.memory_space<vmem>>, vector<16x32xf32>
      tpu.vector_store %arg8[%c0_11, %c0_12], %14 {strides = array<i32>} : memref<16x32xf32, #tpu.memory_space<vmem>>, vector<16x32xf32>,
    } else {
    }
    %c0 = arith.constant 0 : index
    %c0_1 = arith.constant 0 : index
    %3 = vector.load %arg3[%c0, %c0_1] : memref<16x32xf32, #tpu.memory_space<vmem>>, vector<16x32xf32>
    %c0_2 = arith.constant 0 : index
    %c0_3 = arith.constant 0 : index
    %4 = vector.load %arg8[%c0_2, %c0_3] : memref<16x32xf32, #tpu.memory_space<vmem>>, vector<16x32xf32>
    %5 = arith.truncf %3 : vector<16x32xf32> to vector<16x32xbf16>
    %c0_4 = arith.constant 0 : index
    %c0_5 = arith.constant 0 : index
    %6 = vector.load %arg4[%c0_4, %c0_5] : memref<32x32xf32, #tpu.memory_space<vmem>>, vector<32x32xf32>
    %7 = arith.truncf %6 : vector<32x32xf32> to vector<32x32xbf16>
    %cst = arith.constant dense<0.000000e+00> : vector<16x32xf32>
    %8 = tpu.matmul %5, %7, %cst {dimension_numbers = #tpu.dot_dimension_numbers<[1], [0], [0], [1], [0, 0, 1, 1], [], []>} : vector<16x32xbf16>, vector<32x32xbf16>, vector<16x32xf32> -> vector<16x32xf32>
    %9 = arith.addf %4, %8 : vector<16x32xf32>
    %c0_6 = arith.constant 0 : index
    %c0_7 = arith.constant 0 : index
    %10 = vector.load %arg8[%c0_6, %c0_7] : memref<16x32xf32, #tpu.memory_space<vmem>>, vector<16x32xf32>
    tpu.vector_store %arg8[%c0_6, %c0_7], %9 {strides = array<i32>} : memref<16x32xf32, #tpu.memory_space<vmem>>, vector<16x32xf32>,
    %c0_i32_8 = arith.constant 0 : i32
    %11 = arith.cmpi eq, %arg2, %c0_i32_8 : i32
    %12 = arith.extui %11 : i1 to i32
    %c0_i32_9 = arith.constant 0 : i32
    %13 = arith.cmpi ne, %12, %c0_i32_9 : i32
    scf.if %13 {
      %c0_10 = arith.constant 0 : index
      %c0_11 = arith.constant 0 : index
      %14 = vector.load %arg8[%c0_10, %c0_11] : memref<16x32xf32, #tpu.memory_space<vmem>>, vector<16x32xf32>
      %c0_12 = arith.constant 0 : index
      %c0_13 = arith.constant 0 : index
      %15 = vector.load %arg5[%c0_12, %c0_13] : memref<1x32xf32, #tpu.memory_space<vmem>>, vector<1x32xf32>
      %16 = vector.broadcast %15 : vector<1x32xf32> to vector<16x32xf32>
      %17 = arith.addf %14, %16 : vector<16x32xf32>
      %c0_14 = arith.constant 0 : index
      %c0_15 = arith.constant 0 : index
      %18 = vector.load %arg6[%c0_14, %c0_15] : memref<16x32xf32, #tpu.memory_space<vmem>>, vector<16x32xf32>
      %19 = arith.addf %17, %18 : vector<16x32xf32>
      %c0_16 = arith.constant 0 : index
      %c0_17 = arith.constant 0 : index
      %20 = vector.load %arg7[%c0_16, %c0_17] : memref<16x32xf32, #tpu.memory_space<vmem>>, vector<16x32xf32>
      tpu.vector_store %arg7[%c0_16, %c0_17], %19 {strides = array<i32>} : memref<16x32xf32, #tpu.memory_space<vmem>>, vector<16x32xf32>,
    } else {
    }
    return
  }
  func.func @transform_0(%arg0: i32, %arg1: i32, %arg2: i32) -> (i32, i32) {
    %c0_i32 = arith.constant 0 : i32
    return %arg0, %arg2 : i32, i32
  }
  func.func @transform_1(%arg0: i32, %arg1: i32, %arg2: i32) -> (i32, i32) {
    %c0_i32 = arith.constant 0 : i32
    return %arg2, %arg1 : i32, i32
  }
  func.func @transform_2(%arg0: i32, %arg1: i32, %arg2: i32) -> (i32, i32) {
    %c0_i32 = arith.constant 0 : i32
    %c0_i32_0 = arith.constant 0 : i32
    return %c0_i32, %arg1 : i32, i32
  }
  func.func @transform_3(%arg0: i32, %arg1: i32, %arg2: i32) -> (i32, i32) {
    %c0_i32 = arith.constant 0 : i32
    return %arg0, %arg1 : i32, i32
  }
  func.func @transform_4(%arg0: i32, %arg1: i32, %arg2: i32) -> (i32, i32) {
    %c0_i32 = arith.constant 0 : i32
    return %arg0, %arg1 : i32, i32
  }
}

module attributes {stable_mosaic.version = 11 : i64} {
  func.func @_fused_matmul_kernel(%arg0: i32, %arg1: i32, %arg2: i32, %arg3: memref<16x32xf32, #tpu.memory_space<vmem>>, %arg4: memref<32x64xf32, #tpu.memory_space<vmem>>, %arg5: memref<1x64xf32, #tpu.memory_space<vmem>>, %arg6: memref<1x32xf32, #tpu.memory_space<vmem>>, %arg7: memref<1x32xf32, #tpu.memory_space<vmem>>, %arg8: memref<16x64xf32, #tpu.memory_space<vmem>>, %arg9: memref<16x64xf32, #tpu.memory_space<vmem>>) attributes {dimension_semantics = [#tpu.dimension_semantics<parallel>, #tpu.dimension_semantics<parallel>, #tpu.dimension_semantics<arbitrary>], iteration_bounds = array<i64: 1, 1, 1>, scalar_prefetch = 0 : i64, scratch_operands = 1 : i64, tpu.core_type = #tpu.core_type<tc>, window_params = [{transform_indices = @transform_0, window_bounds = array<i64: 16, 32>}, {transform_indices = @transform_1, window_bounds = array<i64: 32, 64>}, {transform_indices = @transform_2, window_bounds = array<i64: 1, 64>}, {pipeline_mode = #tpu.pipeline_mode<synchronous>, transform_indices = @transform_3, window_bounds = array<i64: 1, 32>}, {pipeline_mode = #tpu.pipeline_mode<synchronous>, transform_indices = @transform_4, window_bounds = array<i64: 1, 32>}, {transform_indices = @transform_5, window_bounds = array<i64: 16, 64>}]} {
    %c0_i32 = arith.constant 0 : i32
    %0 = arith.cmpi eq, %arg2, %c0_i32 : i32
    %1 = arith.extui %0 : i1 to i32
    %c0_i32_0 = arith.constant 0 : i32
    %2 = arith.cmpi ne, %1, %c0_i32_0 : i32
    scf.if %2 {
      %cst_19 = arith.constant 0.000000e+00 : f32
      %36 = vector.broadcast %cst_19 : f32 to vector<16x64xf32>
      %c0_20 = arith.constant 0 : index
      %c0_21 = arith.constant 0 : index
      %37 = vector.load %arg9[%c0_20, %c0_21] : memref<16x64xf32, #tpu.memory_space<vmem>>, vector<16x64xf32>
      tpu.vector_store %arg9[%c0_20, %c0_21], %36 {strides = array<i32>} : memref<16x64xf32, #tpu.memory_space<vmem>>, vector<16x64xf32>,
    } else {
    }
    %c0 = arith.constant 0 : index
    %c0_1 = arith.constant 0 : index
    %3 = vector.load %arg3[%c0, %c0_1] : memref<16x32xf32, #tpu.memory_space<vmem>>, vector<16x32xf32>
    %cst = arith.constant dense<0.000000e+00> : vector<16xf32>
    %4 = vector.multi_reduction <add>, %3, %cst [1] : vector<16x32xf32> to vector<16xf32>
    %5 = vector.shape_cast %4 : vector<16xf32> to vector<16x1xf32>
    %cst_2 = arith.constant 3.200000e+01 : f32
    %6 = vector.broadcast %cst_2 : f32 to vector<16x1xf32>
    %7 = arith.divf %5, %6 : vector<16x1xf32>
    %8 = vector.broadcast %7 : vector<16x1xf32> to vector<16x32xf32>
    %9 = arith.subf %3, %8 : vector<16x32xf32>
    %10 = arith.mulf %9, %9 : vector<16x32xf32>
    %cst_3 = arith.constant dense<0.000000e+00> : vector<16xf32>
    %11 = vector.multi_reduction <add>, %10, %cst_3 [1] : vector<16x32xf32> to vector<16xf32>
    %12 = vector.shape_cast %11 : vector<16xf32> to vector<16x1xf32>
    %cst_4 = arith.constant 3.200000e+01 : f32
    %13 = vector.broadcast %cst_4 : f32 to vector<16x1xf32>
    %14 = arith.divf %12, %13 : vector<16x1xf32>
    %cst_5 = arith.constant 9.99999974E-6 : f32
    %15 = vector.broadcast %cst_5 : f32 to vector<16x1xf32>
    %16 = arith.addf %14, %15 : vector<16x1xf32>
    %17 = math.rsqrt %16 : vector<16x1xf32>
    %18 = vector.broadcast %17 : vector<16x1xf32> to vector<16x32xf32>
    %19 = arith.mulf %9, %18 : vector<16x32xf32>
    %c0_6 = arith.constant 0 : index
    %c0_7 = arith.constant 0 : index
    %20 = vector.load %arg6[%c0_6, %c0_7] : memref<1x32xf32, #tpu.memory_space<vmem>>, vector<1x32xf32>
    %21 = vector.broadcast %20 : vector<1x32xf32> to vector<16x32xf32>
    %22 = arith.mulf %19, %21 : vector<16x32xf32>
    %c0_8 = arith.constant 0 : index
    %c0_9 = arith.constant 0 : index
    %23 = vector.load %arg7[%c0_8, %c0_9] : memref<1x32xf32, #tpu.memory_space<vmem>>, vector<1x32xf32>
    %24 = vector.broadcast %23 : vector<1x32xf32> to vector<16x32xf32>
    %25 = arith.addf %22, %24 : vector<16x32xf32>
    %c0_10 = arith.constant 0 : index
    %c0_11 = arith.constant 0 : index
    %26 = vector.load %arg9[%c0_10, %c0_11] : memref<16x64xf32, #tpu.memory_space<vmem>>, vector<16x64xf32>
    %27 = arith.truncf %25 : vector<16x32xf32> to vector<16x32xbf16>
    %c0_12 = arith.constant 0 : index
    %c0_13 = arith.constant 0 : index
    %28 = vector.load %arg4[%c0_12, %c0_13] : memref<32x64xf32, #tpu.memory_space<vmem>>, vector<32x64xf32>
    %29 = arith.truncf %28 : vector<32x64xf32> to vector<32x64xbf16>
    %cst_14 = arith.constant dense<0.000000e+00> : vector<16x64xf32>
    %30 = tpu.matmul %27, %29, %cst_14 {dimension_numbers = #tpu.dot_dimension_numbers<[1], [0], [0], [1], [0, 0, 1, 1], [], []>} : vector<16x32xbf16>, vector<32x64xbf16>, vector<16x64xf32> -> vector<16x64xf32>
    %31 = arith.addf %26, %30 : vector<16x64xf32>
    %c0_15 = arith.constant 0 : index
    %c0_16 = arith.constant 0 : index
    %32 = vector.load %arg9[%c0_15, %c0_16] : memref<16x64xf32, #tpu.memory_space<vmem>>, vector<16x64xf32>
    tpu.vector_store %arg9[%c0_15, %c0_16], %31 {strides = array<i32>} : memref<16x64xf32, #tpu.memory_space<vmem>>, vector<16x64xf32>,
    %c0_i32_17 = arith.constant 0 : i32
    %33 = arith.cmpi eq, %arg2, %c0_i32_17 : i32
    %34 = arith.extui %33 : i1 to i32
    %c0_i32_18 = arith.constant 0 : i32
    %35 = arith.cmpi ne, %34, %c0_i32_18 : i32
    scf.if %35 {
      %c0_19 = arith.constant 0 : index
      %c0_20 = arith.constant 0 : index
      %36 = vector.load %arg9[%c0_19, %c0_20] : memref<16x64xf32, #tpu.memory_space<vmem>>, vector<16x64xf32>
      %c0_21 = arith.constant 0 : index
      %c0_22 = arith.constant 0 : index
      %37 = vector.load %arg5[%c0_21, %c0_22] : memref<1x64xf32, #tpu.memory_space<vmem>>, vector<1x64xf32>
      %38 = vector.broadcast %37 : vector<1x64xf32> to vector<16x64xf32>
      %39 = arith.addf %36, %38 : vector<16x64xf32>
      %40 = arith.mulf %39, %39 : vector<16x64xf32>
      %41 = arith.mulf %39, %40 : vector<16x64xf32>
      %cst_23 = arith.constant 4.471500e-02 : f32
      %42 = vector.broadcast %cst_23 : f32 to vector<16x64xf32>
      %43 = arith.mulf %42, %41 : vector<16x64xf32>
      %44 = arith.addf %39, %43 : vector<16x64xf32>
      %cst_24 = arith.constant 0.797884583 : f32
      %45 = vector.broadcast %cst_24 : f32 to vector<16x64xf32>
      %46 = arith.mulf %45, %44 : vector<16x64xf32>
      %47 = math.tanh %46 : vector<16x64xf32>
      %cst_25 = arith.constant 1.000000e+00 : f32
      %48 = vector.broadcast %cst_25 : f32 to vector<16x64xf32>
      %49 = arith.addf %48, %47 : vector<16x64xf32>
      %cst_26 = arith.constant 5.000000e-01 : f32
      %50 = vector.broadcast %cst_26 : f32 to vector<16x64xf32>
      %51 = arith.mulf %50, %49 : vector<16x64xf32>
      %52 = arith.mulf %39, %51 : vector<16x64xf32>
      %c0_27 = arith.constant 0 : index
      %c0_28 = arith.constant 0 : index
      %53 = vector.load %arg8[%c0_27, %c0_28] : memref<16x64xf32, #tpu.memory_space<vmem>>, vector<16x64xf32>
      tpu.vector_store %arg8[%c0_27, %c0_28], %52 {strides = array<i32>} : memref<16x64xf32, #tpu.memory_space<vmem>>, vector<16x64xf32>,
    } else {
    }
    return
  }
  func.func @transform_0(%arg0: i32, %arg1: i32, %arg2: i32) -> (i32, i32) {
    %c0_i32 = arith.constant 0 : i32
    return %arg0, %arg2 : i32, i32
  }
  func.func @transform_1(%arg0: i32, %arg1: i32, %arg2: i32) -> (i32, i32) {
    %c0_i32 = arith.constant 0 : i32
    return %arg2, %arg1 : i32, i32
  }
  func.func @transform_2(%arg0: i32, %arg1: i32, %arg2: i32) -> (i32, i32) {
    %c0_i32 = arith.constant 0 : i32
    %c0_i32_0 = arith.constant 0 : i32
    return %c0_i32, %arg1 : i32, i32
  }
  func.func @transform_3(%arg0: i32, %arg1: i32, %arg2: i32) -> (i32, i32) {
    %c0_i32 = arith.constant 0 : i32
    %c0_i32_0 = arith.constant 0 : i32
    %c0_i32_1 = arith.constant 0 : i32
    return %c0_i32, %c0_i32_0 : i32, i32
  }
  func.func @transform_4(%arg0: i32, %arg1: i32, %arg2: i32) -> (i32, i32) {
    %c0_i32 = arith.constant 0 : i32
    %c0_i32_0 = arith.constant 0 : i32
    %c0_i32_1 = arith.constant 0 : i32
    return %c0_i32, %c0_i32_0 : i32, i32
  }
  func.func @transform_5(%arg0: i32, %arg1: i32, %arg2: i32) -> (i32, i32) {
    %c0_i32 = arith.constant 0 : i32
    return %arg0, %arg1 : i32, i32
  }
}

module attributes {stable_mosaic.version = 11 : i64} {
  func.func @_fused_matmul_kernel(%arg0: i32, %arg1: i32, %arg2: i32, %arg3: memref<16x64xf32, #tpu.memory_space<vmem>>, %arg4: memref<64x32xf32, #tpu.memory_space<vmem>>, %arg5: memref<1x32xf32, #tpu.memory_space<vmem>>, %arg6: memref<16x32xf32, #tpu.memory_space<vmem>>, %arg7: memref<16x32xf32, #tpu.memory_space<vmem>>, %arg8: memref<16x32xf32, #tpu.memory_space<vmem>>) attributes {dimension_semantics = [#tpu.dimension_semantics<parallel>, #tpu.dimension_semantics<parallel>, #tpu.dimension_semantics<arbitrary>], iteration_bounds = array<i64: 1, 1, 1>, scalar_prefetch = 0 : i64, scratch_operands = 1 : i64, tpu.core_type = #tpu.core_type<tc>, window_params = [{transform_indices = @transform_0, window_bounds = array<i64: 16, 64>}, {transform_indices = @transform_1, window_bounds = array<i64: 64, 32>}, {transform_indices = @transform_2, window_bounds = array<i64: 1, 32>}, {transform_indices = @transform_3, window_bounds = array<i64: 16, 32>}, {transform_indices = @transform_4, window_bounds = array<i64: 16, 32>}]} {
    %c0_i32 = arith.constant 0 : i32
    %0 = arith.cmpi eq, %arg2, %c0_i32 : i32
    %1 = arith.extui %0 : i1 to i32
    %c0_i32_0 = arith.constant 0 : i32
    %2 = arith.cmpi ne, %1, %c0_i32_0 : i32
    scf.if %2 {
      %cst_10 = arith.constant 0.000000e+00 : f32
      %14 = vector.broadcast %cst_10 : f32 to vector<16x32xf32>
      %c0_11 = arith.constant 0 : index
      %c0_12 = arith.constant 0 : index
      %15 = vector.load %arg8[%c0_11, %c0_12] : memref<16x32xf32, #tpu.memory_space<vmem>>, vector<16x32xf32>
      tpu.vector_store %arg8[%c0_11, %c0_12], %14 {strides = array<i32>} : memref<16x32xf32, #tpu.memory_space<vmem>>, vector<16x32xf32>,
    } else {
    }
    %c0 = arith.constant 0 : index
    %c0_1 = arith.constant 0 : index
    %3 = vector.load %arg3[%c0, %c0_1] : memref<16x64xf32, #tpu.memory_space<vmem>>, vector<16x64xf32>
    %c0_2 = arith.constant 0 : index
    %c0_3 = arith.constant 0 : index
    %4 = vector.load %arg8[%c0_2, %c0_3] : memref<16x32xf32, #tpu.memory_space<vmem>>, vector<16x32xf32>
    %5 = arith.truncf %3 : vector<16x64xf32> to vector<16x64xbf16>
    %c0_4 = arith.constant 0 : index
    %c0_5 = arith.constant 0 : index
    %6 = vector.load %arg4[%c0_4, %c0_5] : memref<64x32xf32, #tpu.memory_space<vmem>>, vector<64x32xf32>
    %7 = arith.truncf %6 : vector<64x32xf32> to vector<64x32xbf16>
    %cst = arith.constant dense<0.000000e+00> : vector<16x32xf32>
    %8 = tpu.matmul %5, %7, %cst {dimension_numbers = #tpu.dot_dimension_numbers<[1], [0], [0], [1], [0, 0, 1, 1], [], []>} : vector<16x64xbf16>, vector<64x32xbf16>, vector<16x32xf32> -> vector<16x32xf32>
    %9 = arith.addf %4, %8 : vector<16x32xf32>
    %c0_6 = arith.constant 0 : index
    %c0_7 = arith.constant 0 : index
    %10 = vector.load %arg8[%c0_6, %c0_7] : memref<16x32xf32, #tpu.memory_space<vmem>>, vector<16x32xf32>
    tpu.vector_store %arg8[%c0_6, %c0_7], %9 {strides = array<i32>} : memref<16x32xf32, #tpu.memory_space<vmem>>, vector<16x32xf32>,
    %c0_i32_8 = arith.constant 0 : i32
    %11 = arith.cmpi eq, %arg2, %c0_i32_8 : i32
    %12 = arith.extui %11 : i1 to i32
    %c0_i32_9 = arith.constant 0 : i32
    %13 = arith.cmpi ne, %12, %c0_i32_9 : i32
    scf.if %13 {
      %c0_10 = arith.constant 0 : index
      %c0_11 = arith.constant 0 : index
      %14 = vector.load %arg8[%c0_10, %c0_11] : memref<16x32xf32, #tpu.memory_space<vmem>>, vector<16x32xf32>
      %c0_12 = arith.constant 0 : index
      %c0_13 = arith.constant 0 : index
      %15 = vector.load %arg5[%c0_12, %c0_13] : memref<1x32xf32, #tpu.memory_space<vmem>>, vector<1x32xf32>
      %16 = vector.broadcast %15 : vector<1x32xf32> to vector<16x32xf32>
      %17 = arith.addf %14, %16 : vector<16x32xf32>
      %c0_14 = arith.constant 0 : index
      %c0_15 = arith.constant 0 : index
      %18 = vector.load %arg6[%c0_14, %c0_15] : memref<16x32xf32, #tpu.memory_space<vmem>>, vector<16x32xf32>
      %19 = arith.addf %17, %18 : vector<16x32xf32>
      %c0_16 = arith.constant 0 : index
      %c0_17 = arith.constant 0 : index
      %20 = vector.load %arg7[%c0_16, %c0_17] : memref<16x32xf32, #tpu.memory_space<vmem>>, vector<16x32xf32>
      tpu.vector_store %arg7[%c0_16, %c0_17], %19 {strides = array<i32>} : memref<16x32xf32, #tpu.memory_space<vmem>>, vector<16x32xf32>,
    } else {
    }
    return
  }
  func.func @transform_0(%arg0: i32, %arg1: i32, %arg2: i32) -> (i32, i32) {
    %c0_i32 = arith.constant 0 : i32
    return %arg0, %arg2 : i32, i32
  }
  func.func @transform_1(%arg0: i32, %arg1: i32, %arg2: i32) -> (i32, i32) {
    %c0_i32 = arith.constant 0 : i32
    return %arg2, %arg1 : i32, i32
  }
  func.func @transform_2(%arg0: i32, %arg1: i32, %arg2: i32) -> (i32, i32) {
    %c0_i32 = arith.constant 0 : i32
    %c0_i32_0 = arith.constant 0 : i32
    return %c0_i32, %arg1 : i32, i32
  }
  func.func @transform_3(%arg0: i32, %arg1: i32, %arg2: i32) -> (i32, i32) {
    %c0_i32 = arith.constant 0 : i32
    return %arg0, %arg1 : i32, i32
  }
  func.func @transform_4(%arg0: i32, %arg1: i32, %arg2: i32) -> (i32, i32) {
    %c0_i32 = arith.constant 0 : i32
    return %arg0, %arg1 : i32, i32
  }
}

module attributes {stable_mosaic.version = 11 : i64} {
  func.func @_head_mean_kernel(%arg0: i32, %arg1: memref<2x8x32xf32, #tpu.memory_space<vmem>>, %arg2: memref<1x32xf32, #tpu.memory_space<vmem>>, %arg3: memref<1x32xf32, #tpu.memory_space<vmem>>, %arg4: memref<32x16xf32, #tpu.memory_space<vmem>>, %arg5: memref<1x16xf32, #tpu.memory_space<vmem>>, %arg6: memref<2x16xf32, #tpu.memory_space<vmem>>, %arg7: memref<2x32xf32, #tpu.memory_space<vmem>>) attributes {dimension_semantics = [#tpu.dimension_semantics<arbitrary>], iteration_bounds = array<i64: 1>, scalar_prefetch = 0 : i64, scratch_operands = 1 : i64, tpu.core_type = #tpu.core_type<tc>, window_params = [{transform_indices = @transform_0, window_bounds = array<i64: 2, 8, 32>}, {pipeline_mode = #tpu.pipeline_mode<synchronous>, transform_indices = @transform_1, window_bounds = array<i64: 1, 32>}, {pipeline_mode = #tpu.pipeline_mode<synchronous>, transform_indices = @transform_2, window_bounds = array<i64: 1, 32>}, {pipeline_mode = #tpu.pipeline_mode<synchronous>, transform_indices = @transform_3, window_bounds = array<i64: 32, 16>}, {pipeline_mode = #tpu.pipeline_mode<synchronous>, transform_indices = @transform_4, window_bounds = array<i64: 1, 16>}, {pipeline_mode = #tpu.pipeline_mode<synchronous>, transform_indices = @transform_5, window_bounds = array<i64: 2, 16>}]} {
    %c0_i32 = arith.constant 0 : i32
    %0 = arith.cmpi eq, %arg0, %c0_i32 : i32
    %1 = arith.extui %0 : i1 to i32
    %c0_i32_0 = arith.constant 0 : i32
    %2 = arith.cmpi ne, %1, %c0_i32_0 : i32
    scf.if %2 {
      %cst_18 = arith.constant 0.000000e+00 : f32
      %35 = vector.broadcast %cst_18 : f32 to vector<2x32xf32>
      %c0_19 = arith.constant 0 : index
      %c0_20 = arith.constant 0 : index
      %36 = vector.load %arg7[%c0_19, %c0_20] : memref<2x32xf32, #tpu.memory_space<vmem>>, vector<2x32xf32>
      tpu.vector_store %arg7[%c0_19, %c0_20], %35 {strides = array<i32>} : memref<2x32xf32, #tpu.memory_space<vmem>>, vector<2x32xf32>,
    } else {
    }
    %c0 = arith.constant 0 : index
    %c0_1 = arith.constant 0 : index
    %c0_2 = arith.constant 0 : index
    %3 = vector.load %arg1[%c0, %c0_1, %c0_2] : memref<2x8x32xf32, #tpu.memory_space<vmem>>, vector<2x8x32xf32>
    %cst = arith.constant dense<0.000000e+00> : vector<2x8xf32>
    %4 = vector.multi_reduction <add>, %3, %cst [2] : vector<2x8x32xf32> to vector<2x8xf32>
    %5 = vector.shape_cast %4 : vector<2x8xf32> to vector<2x8x1xf32>
    %cst_3 = arith.constant 3.200000e+01 : f32
    %6 = vector.broadcast %cst_3 : f32 to vector<2x8x1xf32>
    %7 = arith.divf %5, %6 : vector<2x8x1xf32>
    %8 = vector.broadcast %7 : vector<2x8x1xf32> to vector<2x8x32xf32>
    %9 = arith.subf %3, %8 : vector<2x8x32xf32>
    %10 = arith.mulf %9, %9 : vector<2x8x32xf32>
    %cst_4 = arith.constant dense<0.000000e+00> : vector<2x8xf32>
    %11 = vector.multi_reduction <add>, %10, %cst_4 [2] : vector<2x8x32xf32> to vector<2x8xf32>
    %12 = vector.shape_cast %11 : vector<2x8xf32> to vector<2x8x1xf32>
    %cst_5 = arith.constant 3.200000e+01 : f32
    %13 = vector.broadcast %cst_5 : f32 to vector<2x8x1xf32>
    %14 = arith.divf %12, %13 : vector<2x8x1xf32>
    %cst_6 = arith.constant 9.99999974E-6 : f32
    %15 = vector.broadcast %cst_6 : f32 to vector<2x8x1xf32>
    %16 = arith.addf %14, %15 : vector<2x8x1xf32>
    %17 = math.rsqrt %16 : vector<2x8x1xf32>
    %18 = vector.broadcast %17 : vector<2x8x1xf32> to vector<2x8x32xf32>
    %19 = arith.mulf %9, %18 : vector<2x8x32xf32>
    %c0_7 = arith.constant 0 : index
    %c0_8 = arith.constant 0 : index
    %20 = vector.load %arg2[%c0_7, %c0_8] : memref<1x32xf32, #tpu.memory_space<vmem>>, vector<1x32xf32>
    %21 = vector.shape_cast %20 : vector<1x32xf32> to vector<1x1x32xf32>
    %22 = vector.broadcast %21 : vector<1x1x32xf32> to vector<2x8x32xf32>
    %23 = arith.mulf %19, %22 : vector<2x8x32xf32>
    %c0_9 = arith.constant 0 : index
    %c0_10 = arith.constant 0 : index
    %24 = vector.load %arg3[%c0_9, %c0_10] : memref<1x32xf32, #tpu.memory_space<vmem>>, vector<1x32xf32>
    %25 = vector.shape_cast %24 : vector<1x32xf32> to vector<1x1x32xf32>
    %26 = vector.broadcast %25 : vector<1x1x32xf32> to vector<2x8x32xf32>
    %27 = arith.addf %23, %26 : vector<2x8x32xf32>
    %c0_11 = arith.constant 0 : index
    %c0_12 = arith.constant 0 : index
    %28 = vector.load %arg7[%c0_11, %c0_12] : memref<2x32xf32, #tpu.memory_space<vmem>>, vector<2x32xf32>
    %cst_13 = arith.constant dense<0.000000e+00> : vector<2x32xf32>
    %29 = vector.multi_reduction <add>, %27, %cst_13 [1] : vector<2x8x32xf32> to vector<2x32xf32>
    %30 = arith.addf %28, %29 : vector<2x32xf32>
    %c0_14 = arith.constant 0 : index
    %c0_15 = arith.constant 0 : index
    %31 = vector.load %arg7[%c0_14, %c0_15] : memref<2x32xf32, #tpu.memory_space<vmem>>, vector<2x32xf32>
    tpu.vector_store %arg7[%c0_14, %c0_15], %30 {strides = array<i32>} : memref<2x32xf32, #tpu.memory_space<vmem>>, vector<2x32xf32>,
    %c0_i32_16 = arith.constant 0 : i32
    %32 = arith.cmpi eq, %arg0, %c0_i32_16 : i32
    %33 = arith.extui %32 : i1 to i32
    %c0_i32_17 = arith.constant 0 : i32
    %34 = arith.cmpi ne, %33, %c0_i32_17 : i32
    scf.if %34 {
      %c0_18 = arith.constant 0 : index
      %c0_19 = arith.constant 0 : index
      %35 = vector.load %arg7[%c0_18, %c0_19] : memref<2x32xf32, #tpu.memory_space<vmem>>, vector<2x32xf32>
      %cst_20 = arith.constant 1.250000e-01 : f32
      %36 = vector.broadcast %cst_20 : f32 to vector<2x32xf32>
      %37 = arith.mulf %35, %36 : vector<2x32xf32>
      %38 = arith.truncf %37 : vector<2x32xf32> to vector<2x32xbf16>
      %c0_21 = arith.constant 0 : index
      %c0_22 = arith.constant 0 : index
      %39 = vector.load %arg4[%c0_21, %c0_22] : memref<32x16xf32, #tpu.memory_space<vmem>>, vector<32x16xf32>
      %40 = arith.truncf %39 : vector<32x16xf32> to vector<32x16xbf16>
      %cst_23 = arith.constant dense<0.000000e+00> : vector<2x16xf32>
      %41 = tpu.matmul %38, %40, %cst_23 {dimension_numbers = #tpu.dot_dimension_numbers<[1], [0], [0], [1], [0, 0, 1, 1], [], []>} : vector<2x32xbf16>, vector<32x16xbf16>, vector<2x16xf32> -> vector<2x16xf32>
      %c0_24 = arith.constant 0 : index
      %c0_25 = arith.constant 0 : index
      %42 = vector.load %arg5[%c0_24, %c0_25] : memref<1x16xf32, #tpu.memory_space<vmem>>, vector<1x16xf32>
      %43 = vector.broadcast %42 : vector<1x16xf32> to vector<2x16xf32>
      %44 = arith.addf %41, %43 : vector<2x16xf32>
      %c0_26 = arith.constant 0 : index
      %c0_27 = arith.constant 0 : index
      %45 = vector.load %arg6[%c0_26, %c0_27] : memref<2x16xf32, #tpu.memory_space<vmem>>, vector<2x16xf32>
      tpu.vector_store %arg6[%c0_26, %c0_27], %44 {strides = array<i32>} : memref<2x16xf32, #tpu.memory_space<vmem>>, vector<2x16xf32>,
    } else {
    }
    return
  }
  func.func @transform_0(%arg0: i32) -> (i32, i32, i32) {
    %c0_i32 = arith.constant 0 : i32
    %c0_i32_0 = arith.constant 0 : i32
    %c0_i32_1 = arith.constant 0 : i32
    return %c0_i32, %arg0, %c0_i32_0 : i32, i32, i32
  }
  func.func @transform_1(%arg0: i32) -> (i32, i32) {
    %c0_i32 = arith.constant 0 : i32
    %c0_i32_0 = arith.constant 0 : i32
    %c0_i32_1 = arith.constant 0 : i32
    return %c0_i32, %c0_i32_0 : i32, i32
  }
  func.func @transform_2(%arg0: i32) -> (i32, i32) {
    %c0_i32 = arith.constant 0 : i32
    %c0_i32_0 = arith.constant 0 : i32
    %c0_i32_1 = arith.constant 0 : i32
    return %c0_i32, %c0_i32_0 : i32, i32
  }
  func.func @transform_3(%arg0: i32) -> (i32, i32) {
    %c0_i32 = arith.constant 0 : i32
    %c0_i32_0 = arith.constant 0 : i32
    %c0_i32_1 = arith.constant 0 : i32
    return %c0_i32, %c0_i32_0 : i32, i32
  }
  func.func @transform_4(%arg0: i32) -> (i32, i32) {
    %c0_i32 = arith.constant 0 : i32
    %c0_i32_0 = arith.constant 0 : i32
    %c0_i32_1 = arith.constant 0 : i32
    return %c0_i32, %c0_i32_0 : i32, i32
  }
  func.func @transform_5(%arg0: i32) -> (i32, i32) {
    %c0_i32 = arith.constant 0 : i32
    %c0_i32_0 = arith.constant 0 : i32
    %c0_i32_1 = arith.constant 0 : i32
    return %c0_i32, %c0_i32_0 : i32, i32
  }
}

</mosaic_0001>

<llo_original>
// kernel: audio_encoder_forward.13
$region0: #{audio_encoder_forward.13}
  #allocation0 [shape = 'u32[]', space=smem, size = 0x4, offset = 0x4, fixed_abs, tag = 'smem constant byte address 0x4 - core index']
  #allocation1 [shape = 'u32[144,128]{1,0:T(1,128)}', space=vmem, size = 0x12000, scoped, tag = 'internal scratch']
  #allocation2 [shape = 'f32[32,32]{1,0:T(8,128)}', space=vmem, size = 0x4000, scoped, tag = 'scratch operand']
  %s0 = inlined_call_operand.vmem [shape: f32[32,24], index: 0, kind: input, shape index: {}]
  %s1 = inlined_call_operand.vmem [shape: f32[24,32], index: 1, kind: input, shape index: {}]
  %s2 = inlined_call_operand.vmem [shape: f32[1,32], index: 2, kind: input, shape index: {}]
  %s3 = inlined_call_operand.vmem [shape: f32[32,32], index: 3, kind: output, shape index: {}]
  %s4 = sld [smem:[#allocation0]]
  $region30: #{audio_encoder_forward.13} parent=0
    _
  %s6 = ssub.s32 1, %s4
  %s7 = scalar_select 0, %s6, %s4
  // Predicated region
  $region2: #{audio_encoder_forward.13} parent=0 // pred_check
    _
  $region3: #{audio_encoder_forward.13} parent=0 // pred_check_branch
    %9 = sbr.rel (0) target = $region5
  $region4: #{audio_encoder_forward.13} parent=0 // pred_region
    _
  $region5: #{audio_encoder_forward.13} parent=0 // pred_fallthru
    _
  // Predicated region
  $region6: #{audio_encoder_forward.13} parent=0 // pred_check
    _
  $region7: #{audio_encoder_forward.13} parent=0 // pred_check_branch
    %11 = sbr.rel (0) target = $region9
  $region8: #{audio_encoder_forward.13} parent=0 // pred_region
    _
  $region9: #{audio_encoder_forward.13} parent=0 // pred_fallthru
    _
  // Predicated region
  $region10: #{audio_encoder_forward.13} parent=0 // pred_check
    _
  $region11: #{audio_encoder_forward.13} parent=0 // pred_check_branch
    %13 = sbr.rel (0) target = $region13
  $region12: #{audio_encoder_forward.13} parent=0 // pred_region
    _
  $region13: #{audio_encoder_forward.13} parent=0 // pred_fallthru
    _
  %p15 = scmp.eq.s32.totalorder 0, 0
  // Predicated region
  $region14: #{audio_encoder_forward.13} parent=0 // pred_check
    %p16 = pneg %p15
  $region15: #{audio_encoder_forward.13} parent=0 // pred_check_branch
    %18 = sbr.rel (%p16) target = $region17
  $region16: #{audio_encoder_forward.13} parent=0 // pred_region
    %vm19 = vcmask 261120
    %20 = vst.msk [vmem:[#allocation2] sm:$0xff] %vm19, 0.0
    %21 = vst.msk [vmem:[#allocation2 + $0x8] sm:$0xff] %vm19, 0.0
    %22 = vst.msk [vmem:[#allocation2 + $0x10] sm:$0xff] %vm19, 0.0
    %23 = vst.msk [vmem:[#allocation2 + $0x18] sm:$0xff] %vm19, 0.0
  $region17: #{audio_encoder_forward.13} parent=0 // pred_fallthru
    _
  %v24 = vld [vmem:[%s0] sm:$0xff]
  %v25 = vld [vmem:[%s0 + $0x8] sm:$0xff]
  %v26 = vld [vmem:[%s0 + $0x10] sm:$0xff]
  %v27 = vld [vmem:[%s0 + $0x18] sm:$0xff]
  %v28 = vld [vmem:[#allocation2] sm:$0xff]
  %v29 = vld [vmem:[#allocation2 + $0x8] sm:$0xff]
  %v30 = vld [vmem:[#allocation2 + $0x10] sm:$0xff]
  %v31 = vld [vmem:[#allocation2 + $0x18] sm:$0xff]
  %v32 = vpack.c.bf16 %v25, %v24
  %v33 = vpack.c.bf16 %v27, %v26
  %v34 = vld [vmem:[%s1] sm:$0xff]
  %v35 = vld [vmem:[%s1 + $0x8] sm:$0xff]
  %v36 = vld [vmem:[%s1 + $0x10] sm:$0xff]
  %v37 = vpack.c.bf16 %v35, %v34
  %v38 = vpack.c.bf16 %v36, %v36
  %vm39 = vcmask 195584
  %v41 = vsel %vm39, %v32, 0
  %v44 = vsel %vm39, %v33, 0
  %vm46 = vcmask 1043456
  %v48 = vsel %vm46, %v38, 0
  %50 = vmatprep.subr.bf16.mxu0 0
  %51 = vmatpush1.bf16.msra.mxu0 %v37
  %52 = vmatprep.subr.bf16.mxu0 0
  %53 = vmatpush1.bf16.msra.mxu0 %v48
  %54 = vmatprep.subr.bf16.mxu0 0
  %55 = vmatpush1.bf16.msra.mxu0 0
  %56 = vmatprep.subr.bf16.mxu0 0
  %57 = vmatpush1.bf16.msra.mxu0 0
  %58 = vmatprep.subr.bf16.mxu0 0
  %59 = vmatpush1.bf16.msra.mxu0 0
  %60 = vmatprep.subr.bf16.mxu0 0
  %61 = vmatpush1.bf16.msra.mxu0 0
  %62 = vmatprep.subr.bf16.mxu0 0
  %63 = vmatpush1.bf16.msra.mxu0 0
  %64 = vmatprep.subr.bf16.mxu0 0
  %65 = vmatpush1.bf16.msra.mxu0 0
  %66 = vmatprep.subr.bf16.mxu0 0
  %67 = vmatpush1.bf16.msra.mxu0 0
  %68 = vmatprep.subr.bf16.mxu0 0
  %69 = vmatpush1.bf16.msra.mxu0 0
  %70 = vmatprep.subr.bf16.mxu0 0
  %71 = vmatpush1.bf16.msra.mxu0 0
  %72 = vmatprep.subr.bf16.mxu0 0
  %73 = vmatpush1.bf16.msra.mxu0 0
  %74 = vmatprep.subr.bf16.mxu0 0
  %75 = vmatpush1.bf16.msra.mxu0 0
  %76 = vmatprep.subr.bf16.mxu0 0
  %77 = vmatpush1.bf16.msra.mxu0 0
  %78 = vmatprep.subr.bf16.mxu0 0
  %79 = vmatpush1.bf16.msra.mxu0 0
  %80 = vmatprep.subr.bf16.mxu0 0
  %81 = vmatpush1.bf16.msra.mxu0 0
  %82 = vmatprep.mubr.bf16.mxu0 0
  %83 = vmatmul.mubr.bf16.gmra.mrb[0].mxu0 %v41
  %v84 = vpop.f32.mrb[0].mxu0
  %v85 = vadd.f32 0.0, %v84
  %v86 = vpop.f32.mrb[0].mxu0
  %v87 = vpop.f32.mrb[0].mxu0
  %v88 = vadd.f32 0.0, %v87
  %v89 = vpop.f32.mrb[0].mxu0
  %90 = vmatprep.mubr.bf16.mxu0 0
  %91 = vmatmul.mubr.bf16.gmra.mrb[0].mxu0 %v44
  %v92 = vpop.f32.mrb[0].mxu0
  %v93 = vadd.f32 0.0, %v92
  %v94 = vpop.f32.mrb[0].mxu0
  %v95 = vpop.f32.mrb[0].mxu0
  %v96 = vadd.f32 0.0, %v95
  %v97 = vpop.f32.mrb[0].mxu0
  %98 = vdwg.mxu0
  %v99 = vadd.f32 %v28, %v85
  %v100 = vadd.f32 %v29, %v88
  %v101 = vadd.f32 %v30, %v93
  %v102 = vadd.f32 %v31, %v96
  %vm103 = vcmask 261120
  %104 = vst.msk [vmem:[#allocation2] sm:$0xff] %vm103, %v99
  %105 = vst.msk [vmem:[#allocation2 + $0x8] sm:$0xff] %vm103, %v100
  %106 = vst.msk [vmem:[#allocation2 + $0x10] sm:$0xff] %vm103, %v101
  %107 = vst.msk [vmem:[#allocation2 + $0x18] sm:$0xff] %vm103, %v102
  // Predicated region
  $region18: #{audio_encoder_forward.13} parent=0 // pred_check
    %p108 = pneg %p15
  $region19: #{audio_encoder_forward.13} parent=0 // pred_check_branch
    %110 = sbr.rel (%p108) target = $region21
  $region20: #{audio_encoder_forward.13} parent=0 // pred_region
    %v111 = vld [vmem:[#allocation2] sm:$0xff]
    %v112 = vld [vmem:[#allocation2 + $0x8] sm:$0xff]
    %v113 = vld [vmem:[#allocation2 + $0x10] sm:$0xff]
    %v114 = vld [vmem:[#allocation2 + $0x18] sm:$0xff]
    %v115 = vld [vmem:[%s2] sm:$0x1]
    %v117 = vlaneseq
    %v118 = vshrl.u32 %v117, 7
    %v119 = vsub.s32 0, %v118
    %v120 = vrot.slane %v115, %v119
    %v122 = vadd.f32 %v111, %v120
    %v123 = vadd.f32 %v112, %v120
    %v124 = vadd.f32 %v113, %v120
    %v125 = vadd.f32 %v114, %v120
    %v126 = vmul.f32 %v122, %v122
    %v127 = vmul.f32 %v123, %v123
    %v128 = vmul.f32 %v124, %v124
    %v129 = vmul.f32 %v125, %v125
    %v130 = vmul.f32 %v122, %v126
    %v131 = vmul.f32 %v123, %v127
    %v132 = vmul.f32 %v124, %v128
    %v133 = vmul.f32 %v125, %v129
    %v134 = vmul.f32 %v130, 0.044715
    %v135 = vmul.f32 %v131, 0.044715
    %v136 = vmul.f32 %v132, 0.044715
    %v137 = vmul.f32 %v133, 0.044715
    %v138 = vadd.f32 %v122, %v134
    %v139 = vadd.f32 %v123, %v135
    %v140 = vadd.f32 %v124, %v136
    %v141 = vadd.f32 %v125, %v137
    %v142 = vmul.f32 %v138, 0.7978846
    %v143 = vmul.f32 %v139, 0.7978846
    %v144 = vmul.f32 %v140, 0.7978846
    %v145 = vmul.f32 %v141, 0.7978846
    %v146 = vtanh.pop %v142
    %v147 = vtanh.pop %v143
    %v148 = vtanh.pop %v144
    %v149 = vtanh.pop %v145
    %v150 = vadd.f32 %v146, 1.0
    %v151 = vadd.f32 %v147, 1.0
    %v152 = vadd.f32 %v148, 1.0
    %v153 = vadd.f32 %v149, 1.0
    %v154 = vmul.f32 %v150, 0.5
    %v155 = vmul.f32 %v151, 0.5
    %v156 = vmul.f32 %v152, 0.5
    %v157 = vmul.f32 %v153, 0.5
    %v158 = vmul.f32 %v122, %v154
    %v159 = vmul.f32 %v123, %v155
    %v160 = vmul.f32 %v124, %v156
    %v161 = vmul.f32 %v125, %v157
    %162 = vst.msk [vmem:[%s3] sm:$0xff] %vm103, %v158
    %163 = vst.msk [vmem:[%s3 + $0x8] sm:$0xff] %vm103, %v159
    %164 = vst.msk [vmem:[%s3 + $0x10] sm:$0xff] %vm103, %v160
    %165 = vst.msk [vmem:[%s3 + $0x18] sm:$0xff] %vm103, %v161
  $region21: #{audio_encoder_forward.13} parent=0 // pred_fallthru
    _
  // Predicated region
  $region22: #{audio_encoder_forward.13} parent=0 // pred_check
    _
  $region23: #{audio_encoder_forward.13} parent=0 // pred_check_branch
    %167 = sbr.rel (0) target = $region25
  $region24: #{audio_encoder_forward.13} parent=0 // pred_region
    _
  $region25: #{audio_encoder_forward.13} parent=0 // pred_fallthru
    _
  // Predicated region
  $region26: #{audio_encoder_forward.13} parent=0 // pred_check
    _
  $region27: #{audio_encoder_forward.13} parent=0 // pred_check_branch
    %169 = sbr.rel (0) target = $region29
  $region28: #{audio_encoder_forward.13} parent=0 // pred_region
    _
  $region29: #{audio_encoder_forward.13} parent=0 // pred_fallthru
    _

// kernel: audio_encoder_forward.14
$region0: #{audio_encoder_forward.14}
  #allocation0 [shape = 'u32[]', space=smem, size = 0x4, offset = 0x4, fixed_abs, tag = 'smem constant byte address 0x4 - core index']
  #allocation1 [shape = 'u32[144,128]{1,0:T(1,128)}', space=vmem, size = 0x12000, scoped, tag = 'internal scratch']
  #allocation2 [shape = 'f32[16,32]{1,0:T(8,128)}', space=vmem, size = 0x2000, scoped, tag = 'scratch operand']
  %s0 = inlined_call_operand.vmem [shape: f32[16,96], index: 0, kind: input, shape index: {}]
  %s1 = inlined_call_operand.vmem [shape: f32[96,32], index: 1, kind: input, shape index: {}]
  %s2 = inlined_call_operand.vmem [shape: f32[1,32], index: 2, kind: input, shape index: {}]
  %s3 = inlined_call_operand.vmem [shape: f32[16,32], index: 3, kind: output, shape index: {}]
  %s4 = sld [smem:[#allocation0]]
  $region30: #{audio_encoder_forward.14} parent=0
    _
  %s6 = ssub.s32 1, %s4
  %s7 = scalar_select 0, %s6, %s4
  // Predicated region
  $region2: #{audio_encoder_forward.14} parent=0 // pred_check
    _
  $region3: #{audio_encoder_forward.14} parent=0 // pred_check_branch
    %9 = sbr.rel (0) target = $region5
  $region4: #{audio_encoder_forward.14} parent=0 // pred_region
    _
  $region5: #{audio_encoder_forward.14} parent=0 // pred_fallthru
    _
  // Predicated region
  $region6: #{audio_encoder_forward.14} parent=0 // pred_check
    _
  $region7: #{audio_encoder_forward.14} parent=0 // pred_check_branch
    %11 = sbr.rel (0) target = $region9
  $region8: #{audio_encoder_forward.14} parent=0 // pred_region
    _
  $region9: #{audio_encoder_forward.14} parent=0 // pred_fallthru
    _
  // Predicated region
  $region10: #{audio_encoder_forward.14} parent=0 // pred_check
    _
  $region11: #{audio_encoder_forward.14} parent=0 // pred_check_branch
    %13 = sbr.rel (0) target = $region13
  $region12: #{audio_encoder_forward.14} parent=0 // pred_region
    _
  $region13: #{audio_encoder_forward.14} parent=0 // pred_fallthru
    _
  %p15 = scmp.eq.s32.totalorder 0, 0
  // Predicated region
  $region14: #{audio_encoder_forward.14} parent=0 // pred_check
    %p16 = pneg %p15
  $region15: #{audio_encoder_forward.14} parent=0 // pred_check_branch
    %18 = sbr.rel (%p16) target = $region17
  $region16: #{audio_encoder_forward.14} parent=0 // pred_region
    %vm19 = vcmask 261120
    %20 = vst.msk [vmem:[#allocation2] sm:$0xff] %vm19, 0.0
    %21 = vst.msk [vmem:[#allocation2 + $0x8] sm:$0xff] %vm19, 0.0
  $region17: #{audio_encoder_forward.14} parent=0 // pred_fallthru
    _
  %v22 = vld [vmem:[%s0] sm:$0xff]
  %v23 = vld [vmem:[%s0 + $0x8] sm:$0xff]
  %v24 = vld [vmem:[#allocation2] sm:$0xff]
  %v25 = vld [vmem:[#allocation2 + $0x8] sm:$0xff]
  %v26 = vpack.c.bf16 %v23, %v22
  %v27 = vld [vmem:[%s1] sm:$0xff]
  %v28 = vld [vmem:[%s1 + $0x8] sm:$0xff]
  %v29 = vld [vmem:[%s1 + $0x10] sm:$0xff]
  %v30 = vld [vmem:[%s1 + $0x18] sm:$0xff]
  %v31 = vld [vmem:[%s1 + $0x20] sm:$0xff]
  %v32 = vld [vmem:[%s1 + $0x28] sm:$0xff]
  %v33 = vld [vmem:[%s1 + $0x30] sm:$0xff]
  %v34 = vld [vmem:[%s1 + $0x38] sm:$0xff]
  %v35 = vld [vmem:[%s1 + $0x40] sm:$0xff]
  %v36 = vld [vmem:[%s1 + $0x48] sm:$0xff]
  %v37 = vld [vmem:[%s1 + $0x50] sm:$0xff]
  %v38 = vld [vmem:[%s1 + $0x58] sm:$0xff]
  %v39 = vpack.c.bf16 %v28, %v27
  %v40 = vpack.c.bf16 %v30, %v29
  %v41 = vpack.c.bf16 %v32, %v31
  %v42 = vpack.c.bf16 %v34, %v33
  %v43 = vpack.c.bf16 %v36, %v35
  %v44 = vpack.c.bf16 %v38, %v37
  %vm45 = vcmask 785408
  %v47 = vsel %vm45, %v26, 0
  %49 = vmatprep.subr.bf16.mxu0 0
  %50 = vmatpush1.bf16.msra.mxu0 %v39
  %51 = vmatprep.subr.bf16.mxu0 0
  %52 = vmatpush1.bf16.msra.mxu0 %v40
  %53 = vmatprep.subr.bf16.mxu0 0
  %54 = vmatpush1.bf16.msra.mxu0 %v41
  %55 = vmatprep.subr.bf16.mxu0 0
  %56 = vmatpush1.bf16.msra.mxu0 %v42
  %57 = vmatprep.subr.bf16.mxu0 0
  %58 = vmatpush1.bf16.msra.mxu0 %v43
  %59 = vmatprep.subr.bf16.mxu0 0
  %60 = vmatpush1.bf16.msra.mxu0 %v44
  %61 = vmatprep.subr.bf16.mxu0 0
  %62 = vmatpush1.bf16.msra.mxu0 0
  %63 = vmatprep.subr.bf16.mxu0 0
  %64 = vmatpush1.bf16.msra.mxu0 0
  %65 = vmatprep.subr.bf16.mxu0 0
  %66 = vmatpush1.bf16.msra.mxu0 0
  %67 = vmatprep.subr.bf16.mxu0 0
  %68 = vmatpush1.bf16.msra.mxu0 0
  %69 = vmatprep.subr.bf16.mxu0 0
  %70 = vmatpush1.bf16.msra.mxu0 0
  %71 = vmatprep.subr.bf16.mxu0 0
  %72 = vmatpush1.bf16.msra.mxu0 0
  %73 = vmatprep.subr.bf16.mxu0 0
  %74 = vmatpush1.bf16.msra.mxu0 0
  %75 = vmatprep.subr.bf16.mxu0 0
  %76 = vmatpush1.bf16.msra.mxu0 0
  %77 = vmatprep.subr.bf16.mxu0 0
  %78 = vmatpush1.bf16.msra.mxu0 0
  %79 = vmatprep.subr.bf16.mxu0 0
  %80 = vmatpush1.bf16.msra.mxu0 0
  %81 = vmatprep.mubr.bf16.mxu0 0
  %82 = vmatmul.mubr.bf16.gmra.mrb[0].mxu0 %v47
  %v83 = vpop.f32.mrb[0].mxu0
  %v84 = vadd.f32 0.0, %v83
  %v85 = vpop.f32.mrb[0].mxu0
  %v86 = vpop.f32.mrb[0].mxu0
  %v87 = vadd.f32 0.0, %v86
  %v88 = vpop.f32.mrb[0].mxu0
  %89 = vdwg.mxu0
  %v90 = vadd.f32 %v24, %v84
  %v91 = vadd.f32 %v25, %v87
  %vm92 = vcmask 261120
  %93 = vst.msk [vmem:[#allocation2] sm:$0xff] %vm92, %v90
  %94 = vst.msk [vmem:[#allocation2 + $0x8] sm:$0xff] %vm92, %v91
  // Predicated region
  $region18: #{audio_encoder_forward.14} parent=0 // pred_check
    %p95 = pneg %p15
  $region19: #{audio_encoder_forward.14} parent=0 // pred_check_branch
    %97 = sbr.rel (%p95) target = $region21
  $region20: #{audio_encoder_forward.14} parent=0 // pred_region
    %v98 = vld [vmem:[#allocation2] sm:$0xff]
    %v99 = vld [vmem:[#allocation2 + $0x8] sm:$0xff]
    %v100 = vld [vmem:[%s2] sm:$0x1]
    %v102 = vlaneseq
    %v103 = vshrl.u32 %v102, 7
    %v104 = vsub.s32 0, %v103
    %v105 = vrot.slane %v100, %v104
    %v107 = vadd.f32 %v98, %v105
    %v108 = vadd.f32 %v99, %v105
    %v109 = vmul.f32 %v107, %v107
    %v110 = vmul.f32 %v108, %v108
    %v111 = vmul.f32 %v107, %v109
    %v112 = vmul.f32 %v108, %v110
    %v113 = vmul.f32 %v111, 0.044715
    %v114 = vmul.f32 %v112, 0.044715
    %v115 = vadd.f32 %v107, %v113
    %v116 = vadd.f32 %v108, %v114
    %v117 = vmul.f32 %v115, 0.7978846
    %v118 = vmul.f32 %v116, 0.7978846
    %v119 = vtanh.pop %v117
    %v120 = vtanh.pop %v118
    %v121 = vadd.f32 %v119, 1.0
    %v122 = vadd.f32 %v120, 1.0
    %v123 = vmul.f32 %v121, 0.5
    %v124 = vmul.f32 %v122, 0.5
    %v125 = vmul.f32 %v107, %v123
    %v126 = vmul.f32 %v108, %v124
    %127 = vst.msk [vmem:[%s3] sm:$0xff] %vm92, %v125
    %128 = vst.msk [vmem:[%s3 + $0x8] sm:$0xff] %vm92, %v126
  $region21: #{audio_encoder_forward.14} parent=0 // pred_fallthru
    _
  // Predicated region
  $region22: #{audio_encoder_forward.14} parent=0 // pred_check
    _
  $region23: #{audio_encoder_forward.14} parent=0 // pred_check_branch
    %130 = sbr.rel (0) target = $region25
  $region24: #{audio_encoder_forward.14} parent=0 // pred_region
    _
  $region25: #{audio_encoder_forward.14} parent=0 // pred_fallthru
    _
  // Predicated region
  $region26: #{audio_encoder_forward.14} parent=0 // pred_check
    _
  $region27: #{audio_encoder_forward.14} parent=0 // pred_check_branch
    %132 = sbr.rel (0) target = $region29
  $region28: #{audio_encoder_forward.14} parent=0 // pred_region
    _
  $region29: #{audio_encoder_forward.14} parent=0 // pred_fallthru
    _

// kernel: audio_encoder_forward.15
$region0: #{audio_encoder_forward.15}
  #allocation0 [shape = 'u32[]', space=smem, size = 0x4, offset = 0x4, fixed_abs, tag = 'smem constant byte address 0x4 - core index']
  #allocation1 [shape = 'u32[144,128]{1,0:T(1,128)}', space=vmem, size = 0x12000, scoped, tag = 'internal scratch']
  #allocation2 [shape = 'f32[16,96]{1,0:T(8,128)}', space=vmem, size = 0x2000, scoped, tag = 'scratch operand']
  %s0 = inlined_call_operand.vmem [shape: f32[16,32], index: 0, kind: input, shape index: {}]
  %s1 = inlined_call_operand.vmem [shape: f32[32,96], index: 1, kind: input, shape index: {}]
  %s2 = inlined_call_operand.vmem [shape: f32[1,96], index: 2, kind: input, shape index: {}]
  %s3 = inlined_call_operand.vmem [shape: f32[1,32], index: 3, kind: input, shape index: {}]
  %s4 = inlined_call_operand.vmem [shape: f32[1,32], index: 4, kind: input, shape index: {}]
  %s5 = inlined_call_operand.vmem [shape: f32[16,96], index: 5, kind: output, shape index: {}]
  %s6 = sld [smem:[#allocation0]]
  $region38: #{audio_encoder_forward.15} parent=0
    _
  %s8 = ssub.s32 1, %s6
  %s9 = scalar_select 0, %s8, %s6
  // Predicated region
  $region2: #{audio_encoder_forward.15} parent=0 // pred_check
    _
  $region3: #{audio_encoder_forward.15} parent=0 // pred_check_branch
    %11 = sbr.rel (0) target = $region5
  $region4: #{audio_encoder_forward.15} parent=0 // pred_region
    _
  $region5: #{audio_encoder_forward.15} parent=0 // pred_fallthru
    _
  // Predicated region
  $region6: #{audio_encoder_forward.15} parent=0 // pred_check
    _
  $region7: #{audio_encoder_forward.15} parent=0 // pred_check_branch
    %13 = sbr.rel (0) target = $region9
  $region8: #{audio_encoder_forward.15} parent=0 // pred_region
    _
  $region9: #{audio_encoder_forward.15} parent=0 // pred_fallthru
    _
  // Predicated region
  $region10: #{audio_encoder_forward.15} parent=0 // pred_check
    _
  $region11: #{audio_encoder_forward.15} parent=0 // pred_check_branch
    %15 = sbr.rel (0) target = $region13
  $region12: #{audio_encoder_forward.15} parent=0 // pred_region
    _
  $region13: #{audio_encoder_forward.15} parent=0 // pred_fallthru
    _
  // Predicated region
  $region14: #{audio_encoder_forward.15} parent=0 // pred_check
    _
  $region15: #{audio_encoder_forward.15} parent=0 // pred_check_branch
    %17 = sbr.rel (0) target = $region17
  $region16: #{audio_encoder_forward.15} parent=0 // pred_region
    _
  $region17: #{audio_encoder_forward.15} parent=0 // pred_fallthru
    _
  // Predicated region
  $region18: #{audio_encoder_forward.15} parent=0 // pred_check
    _
  $region19: #{audio_encoder_forward.15} parent=0 // pred_check_branch
    %19 = sbr.rel (0) target = $region21
  $region20: #{audio_encoder_forward.15} parent=0 // pred_region
    _
  $region21: #{audio_encoder_forward.15} parent=0 // pred_fallthru
    _
  %p21 = scmp.eq.s32.totalorder 0, 0
  // Predicated region
  $region22: #{audio_encoder_forward.15} parent=0 // pred_check
    %p22 = pneg %p21
  $region23: #{audio_encoder_forward.15} parent=0 // pred_check_branch
    %24 = sbr.rel (%p22) target = $region25
  $region24: #{audio_encoder_forward.15} parent=0 // pred_region
    %vm25 = vcmask 785408
    %26 = vst.msk [vmem:[#allocation2] sm:$0xff] %vm25, 0.0
    %27 = vst.msk [vmem:[#allocation2 + $0x8] sm:$0xff] %vm25, 0.0
  $region25: #{audio_encoder_forward.15} parent=0 // pred_fallthru
    _
  %v28 = vld [vmem:[%s0] sm:$0xff]
  %v29 = vld [vmem:[%s0 + $0x8] sm:$0xff]
  %vm30 = vcmask 261120
  %v31 = vsel %vm30, %v28, 0.0
  %32 = vadd.xlane.f32.xlu0 %v31
  %v33 = vpop.xlane.xlu0 %32
  %v34 = vsel %vm30, %v29, 0.0
  %35 = vadd.xlane.f32.xlu0 %v34
  %v36 = vpop.xlane.xlu0 %35
  %v37 = vrcp.pop 32.0
  %v38 = vmul.f32 %v33, %v37
  %v39 = vmul.f32 %v36, %v37
  %v40 = vsub.f32 %v28, %v38
  %v41 = vsub.f32 %v29, %v39
  %v42 = vmul.f32 %v40, %v40
  %v43 = vmul.f32 %v41, %v41
  %v44 = vsel %vm30, %v42, 0.0
  %45 = vadd.xlane.f32.xlu0 %v44
  %v46 = vpop.xlane.xlu0 %45
  %v47 = vsel %vm30, %v43, 0.0
  %48 = vadd.xlane.f32.xlu0 %v47
  %v49 = vpop.xlane.xlu0 %48
  %v50 = vmul.f32 %v46, %v37
  %v51 = vmul.f32 %v49, %v37
  %v52 = vadd.f32 %v50, 1e-05
  %v53 = vadd.f32 %v51, 1e-05
  %v54 = vrsqrt.pop %v52
  %v55 = vrsqrt.pop %v53
  %v56 = vmul.f32 %v40, %v54
  %v57 = vmul.f32 %v41, %v55
  %v58 = vld [vmem:[%s3] sm:$0x1]
  %v60 = vlaneseq
  %v61 = vshrl.u32 %v60, 7
  %v62 = vsub.s32 0, %v61
  %v63 = vrot.slane %v58, %v62
  %v65 = vmul.f32 %v56, %v63
  %v66 = vmul.f32 %v57, %v63
  %v67 = vld [vmem:[%s4] sm:$0x1]
  %v69 = vlaneseq
  %v70 = vshrl.u32 %v69, 7
  %v71 = vsub.s32 0, %v70
  %v72 = vrot.slane %v67, %v71
  %v74 = vadd.f32 %v65, %v72
  %v75 = vadd.f32 %v66, %v72
  %v76 = vld [vmem:[#allocation2] sm:$0xff]
  %v77 = vld [vmem:[#allocation2 + $0x8] sm:$0xff]
  %v78 = vpack.c.bf16 %v75, %v74
  %v79 = vld [vmem:[%s1] sm:$0xff]
  %v80 = vld [vmem:[%s1 + $0x8] sm:$0xff]
  %v81 = vld [vmem:[%s1 + $0x10] sm:$0xff]
  %v82 = vld [vmem:[%s1 + $0x18] sm:$0xff]
  %v83 = vpack.c.bf16 %v80, %v79
  %v84 = vpack.c.bf16 %v82, %v81
  %v86 = vsel %vm30, %v78, 0
  %88 = vmatprep.subr.bf16.mxu0 0
  %89 = vmatpush1.bf16.msra.mxu0 %v83
  %90 = vmatprep.subr.bf16.mxu0 0
  %91 = vmatpush1.bf16.msra.mxu0 %v84
  %92 = vmatprep.subr.bf16.mxu0 0
  %93 = vmatpush1.bf16.msra.mxu0 0
  %94 = vmatprep.subr.bf16.mxu0 0
  %95 = vmatpush1.bf16.msra.mxu0 0
  %96 = vmatprep.subr.bf16.mxu0 0
  %97 = vmatpush1.bf16.msra.mxu0 0
  %98 = vmatprep.subr.bf16.mxu0 0
  %99 = vmatpush1.bf16.msra.mxu0 0
  %100 = vmatprep.subr.bf16.mxu0 0
  %101 = vmatpush1.bf16.msra.mxu0 0
  %102 = vmatprep.subr.bf16.mxu0 0
  %103 = vmatpush1.bf16.msra.mxu0 0
  %104 = vmatprep.subr.bf16.mxu0 0
  %105 = vmatpush1.bf16.msra.mxu0 0
  %106 = vmatprep.subr.bf16.mxu0 0
  %107 = vmatpush1.bf16.msra.mxu0 0
  %108 = vmatprep.subr.bf16.mxu0 0
  %109 = vmatpush1.bf16.msra.mxu0 0
  %110 = vmatprep.subr.bf16.mxu0 0
  %111 = vmatpush1.bf16.msra.mxu0 0
  %112 = vmatprep.subr.bf16.mxu0 0
  %113 = vmatpush1.bf16.msra.mxu0 0
  %114 = vmatprep.subr.bf16.mxu0 0
  %115 = vmatpush1.bf16.msra.mxu0 0
  %116 = vmatprep.subr.bf16.mxu0 0
  %117 = vmatpush1.bf16.msra.mxu0 0
  %118 = vmatprep.subr.bf16.mxu0 0
  %119 = vmatpush1.bf16.msra.mxu0 0
  %120 = vmatprep.mubr.bf16.mxu0 0
  %121 = vmatmul.mubr.bf16.gmra.mrb[0].mxu0 %v86
  %v122 = vpop.f32.mrb[0].mxu0
  %v123 = vadd.f32 0.0, %v122
  %v124 = vpop.f32.mrb[0].mxu0
  %v125 = vpop.f32.mrb[0].mxu0
  %v126 = vadd.f32 0.0, %v125
  %v127 = vpop.f32.mrb[0].mxu0
  %128 = vdwg.mxu0
  %v129 = vadd.f32 %v76, %v123
  %v130 = vadd.f32 %v77, %v126
  %vm131 = vcmask 785408
  %132 = vst.msk [vmem:[#allocation2] sm:$0xff] %vm131, %v129
  %133 = vst.msk [vmem:[#allocation2 + $0x8] sm:$0xff] %vm131, %v130
  // Predicated region
  $region26: #{audio_encoder_forward.15} parent=0 // pred_check
    %p134 = pneg %p21
  $region27: #{audio_encoder_forward.15} parent=0 // pred_check_branch
    %136 = sbr.rel (%p134) target = $region29
  $region28: #{audio_encoder_forward.15} parent=0 // pred_region
    %v137 = vld [vmem:[#allocation2] sm:$0xff]
    %v138 = vld [vmem:[#allocation2 + $0x8] sm:$0xff]
    %v139 = vld [vmem:[%s2] sm:$0x1]
    %v141 = vlaneseq
    %v142 = vshrl.u32 %v141, 7
    %v143 = vsub.s32 0, %v142
    %v144 = vrot.slane %v139, %v143
    %v146 = vadd.f32 %v137, %v144
    %v147 = vadd.f32 %v138, %v144
    %148 = vst.msk [vmem:[%s5] sm:$0xff] %vm131, %v146
    %149 = vst.msk [vmem:[%s5 + $0x8] sm:$0xff] %vm131, %v147
  $region29: #{audio_encoder_forward.15} parent=0 // pred_fallthru
    _
  // Predicated region
  $region30: #{audio_encoder_forward.15} parent=0 // pred_check
    _
  $region31: #{audio_encoder_forward.15} parent=0 // pred_check_branch
    %151 = sbr.rel (0) target = $region33
  $region32: #{audio_encoder_forward.15} parent=0 // pred_region
    _
  $region33: #{audio_encoder_forward.15} parent=0 // pred_fallthru
    _
  // Predicated region
  $region34: #{audio_encoder_forward.15} parent=0 // pred_check
    _
  $region35: #{audio_encoder_forward.15} parent=0 // pred_check_branch
    %153 = sbr.rel (0) target = $region37
  $region36: #{audio_encoder_forward.15} parent=0 // pred_region
    _
  $region37: #{audio_encoder_forward.15} parent=0 // pred_fallthru
    _

// kernel: audio_encoder_forward.17
$region0: #{audio_encoder_forward.17}
  #allocation0 [shape = 'u32[]', space=smem, size = 0x4, offset = 0x4, fixed_abs, tag = 'smem constant byte address 0x4 - core index']
  #allocation1 [shape = 'u32[144,128]{1,0:T(1,128)}', space=vmem, size = 0x12000, scoped, tag = 'internal scratch']
  #allocation2 [shape = 'f32[16,32]{1,0:T(8,128)}', space=vmem, size = 0x2000, scoped, tag = 'scratch operand']
  %s0 = inlined_call_operand.vmem [shape: f32[16,32], index: 0, kind: input, shape index: {}]
  %s1 = inlined_call_operand.vmem [shape: f32[32,32], index: 1, kind: input, shape index: {}]
  %s2 = inlined_call_operand.vmem [shape: f32[1,32], index: 2, kind: input, shape index: {}]
  %s3 = inlined_call_operand.vmem [shape: f32[16,32], index: 3, kind: input, shape index: {}]
  %s4 = inlined_call_operand.vmem [shape: f32[16,32], index: 4, kind: output, shape index: {}]
  %s5 = sld [smem:[#allocation0]]
  $region34: #{audio_encoder_forward.17} parent=0
    _
  %s7 = ssub.s32 1, %s5
  %s8 = scalar_select 0, %s7, %s5
  // Predicated region
  $region2: #{audio_encoder_forward.17} parent=0 // pred_check
    _
  $region3: #{audio_encoder_forward.17} parent=0 // pred_check_branch
    %10 = sbr.rel (0) target = $region5
  $region4: #{audio_encoder_forward.17} parent=0 // pred_region
    _
  $region5: #{audio_encoder_forward.17} parent=0 // pred_fallthru
    _
  // Predicated region
  $region6: #{audio_encoder_forward.17} parent=0 // pred_check
    _
  $region7: #{audio_encoder_forward.17} parent=0 // pred_check_branch
    %12 = sbr.rel (0) target = $region9
  $region8: #{audio_encoder_forward.17} parent=0 // pred_region
    _
  $region9: #{audio_encoder_forward.17} parent=0 // pred_fallthru
    _
  // Predicated region
  $region10: #{audio_encoder_forward.17} parent=0 // pred_check
    _
  $region11: #{audio_encoder_forward.17} parent=0 // pred_check_branch
    %14 = sbr.rel (0) target = $region13
  $region12: #{audio_encoder_forward.17} parent=0 // pred_region
    _
  $region13: #{audio_encoder_forward.17} parent=0 // pred_fallthru
    _
  // Predicated region
  $region14: #{audio_encoder_forward.17} parent=0 // pred_check
    _
  $region15: #{audio_encoder_forward.17} parent=0 // pred_check_branch
    %16 = sbr.rel (0) target = $region17
  $region16: #{audio_encoder_forward.17} parent=0 // pred_region
    _
  $region17: #{audio_encoder_forward.17} parent=0 // pred_fallthru
    _
  %p18 = scmp.eq.s32.totalorder 0, 0
  // Predicated region
  $region18: #{audio_encoder_forward.17} parent=0 // pred_check
    %p19 = pneg %p18
  $region19: #{audio_encoder_forward.17} parent=0 // pred_check_branch
    %21 = sbr.rel (%p19) target = $region21
  $region20: #{audio_encoder_forward.17} parent=0 // pred_region
    %vm22 = vcmask 261120
    %23 = vst.msk [vmem:[#allocation2] sm:$0xff] %vm22, 0.0
    %24 = vst.msk [vmem:[#allocation2 + $0x8] sm:$0xff] %vm22, 0.0
  $region21: #{audio_encoder_forward.17} parent=0 // pred_fallthru
    _
  %v25 = vld [vmem:[%s0] sm:$0xff]
  %v26 = vld [vmem:[%s0 + $0x8] sm:$0xff]
  %v27 = vld [vmem:[#allocation2] sm:$0xff]
  %v28 = vld [vmem:[#allocation2 + $0x8] sm:$0xff]
  %v29 = vpack.c.bf16 %v26, %v25
  %v30 = vld [vmem:[%s1] sm:$0xff]
  %v31 = vld [vmem:[%s1 + $0x8] sm:$0xff]
  %v32 = vld [vmem:[%s1 + $0x10] sm:$0xff]
  %v33 = vld [vmem:[%s1 + $0x18] sm:$0xff]
  %v34 = vpack.c.bf16 %v31, %v30
  %v35 = vpack.c.bf16 %v33, %v32
  %vm36 = vcmask 261120
  %v38 = vsel %vm36, %v29, 0
  %40 = vmatprep.subr.bf16.mxu0 0
  %41 = vmatpush1.bf16.msra.mxu0 %v34
  %42 = vmatprep.subr.bf16.mxu0 0
  %43 = vmatpush1.bf16.msra.mxu0 %v35
  %44 = vmatprep.subr.bf16.mxu0 0
  %45 = vmatpush1.bf16.msra.mxu0 0
  %46 = vmatprep.subr.bf16.mxu0 0
  %47 = vmatpush1.bf16.msra.mxu0 0
  %48 = vmatprep.subr.bf16.mxu0 0
  %49 = vmatpush1.bf16.msra.mxu0 0
  %50 = vmatprep.subr.bf16.mxu0 0
  %51 = vmatpush1.bf16.msra.mxu0 0
  %52 = vmatprep.subr.bf16.mxu0 0
  %53 = vmatpush1.bf16.msra.mxu0 0
  %54 = vmatprep.subr.bf16.mxu0 0
  %55 = vmatpush1.bf16.msra.mxu0 0
  %56 = vmatprep.subr.bf16.mxu0 0
  %57 = vmatpush1.bf16.msra.mxu0 0
  %58 = vmatprep.subr.bf16.mxu0 0
  %59 = vmatpush1.bf16.msra.mxu0 0
  %60 = vmatprep.subr.bf16.mxu0 0
  %61 = vmatpush1.bf16.msra.mxu0 0
  %62 = vmatprep.subr.bf16.mxu0 0
  %63 = vmatpush1.bf16.msra.mxu0 0
  %64 = vmatprep.subr.bf16.mxu0 0
  %65 = vmatpush1.bf16.msra.mxu0 0
  %66 = vmatprep.subr.bf16.mxu0 0
  %67 = vmatpush1.bf16.msra.mxu0 0
  %68 = vmatprep.subr.bf16.mxu0 0
  %69 = vmatpush1.bf16.msra.mxu0 0
  %70 = vmatprep.subr.bf16.mxu0 0
  %71 = vmatpush1.bf16.msra.mxu0 0
  %72 = vmatprep.mubr.bf16.mxu0 0
  %73 = vmatmul.mubr.bf16.gmra.mrb[0].mxu0 %v38
  %v74 = vpop.f32.mrb[0].mxu0
  %v75 = vadd.f32 0.0, %v74
  %v76 = vpop.f32.mrb[0].mxu0
  %v77 = vpop.f32.mrb[0].mxu0
  %v78 = vadd.f32 0.0, %v77
  %v79 = vpop.f32.mrb[0].mxu0
  %80 = vdwg.mxu0
  %v81 = vadd.f32 %v27, %v75
  %v82 = vadd.f32 %v28, %v78
  %83 = vst.msk [vmem:[#allocation2] sm:$0xff] %vm36, %v81
  %84 = vst.msk [vmem:[#allocation2 + $0x8] sm:$0xff] %vm36, %v82
  // Predicated region
  $region22: #{audio_encoder_forward.17} parent=0 // pred_check
    %p85 = pneg %p18
  $region23: #{audio_encoder_forward.17} parent=0 // pred_check_branch
    %87 = sbr.rel (%p85) target = $region25
  $region24: #{audio_encoder_forward.17} parent=0 // pred_region
    %v88 = vld [vmem:[#allocation2] sm:$0xff]
    %v89 = vld [vmem:[#allocation2 + $0x8] sm:$0xff]
    %v90 = vld [vmem:[%s2] sm:$0x1]
    %v92 = vlaneseq
    %v93 = vshrl.u32 %v92, 7
    %v94 = vsub.s32 0, %v93
    %v95 = vrot.slane %v90, %v94
    %v97 = vadd.f32 %v88, %v95
    %v98 = vadd.f32 %v89, %v95
    %v99 = vld [vmem:[%s3] sm:$0xff]
    %v100 = vld [vmem:[%s3 + $0x8] sm:$0xff]
    %v101 = vadd.f32 %v97, %v99
    %v102 = vadd.f32 %v98, %v100
    %103 = vst.msk [vmem:[%s4] sm:$0xff] %vm36, %v101
    %104 = vst.msk [vmem:[%s4 + $0x8] sm:$0xff] %vm36, %v102
  $region25: #{audio_encoder_forward.17} parent=0 // pred_fallthru
    _
  // Predicated region
  $region26: #{audio_encoder_forward.17} parent=0 // pred_check
    _
  $region27: #{audio_encoder_forward.17} parent=0 // pred_check_branch
    %106 = sbr.rel (0) target = $region29
  $region28: #{audio_encoder_forward.17} parent=0 // pred_region
    _
  $region29: #{audio_encoder_forward.17} parent=0 // pred_fallthru
    _
  // Predicated region
  $region30: #{audio_encoder_forward.17} parent=0 // pred_check
    _
  $region31: #{audio_encoder_forward.17} parent=0 // pred_check_branch
    %108 = sbr.rel (0) target = $region33
  $region32: #{audio_encoder_forward.17} parent=0 // pred_region
    _
  $region33: #{audio_encoder_forward.17} parent=0 // pred_fallthru
    _

// kernel: audio_encoder_forward.16
$region0: #{audio_encoder_forward.16}
  #allocation0 [shape = 'u32[]', space=smem, size = 0x4, offset = 0x4, fixed_abs, tag = 'smem constant byte address 0x4 - core index']
  #allocation1 [shape = 'u32[144,128]{1,0:T(1,128)}', space=vmem, size = 0x12000, scoped, tag = 'internal scratch']
  #allocation2 [shape = 'f32[8,4]{1,0:T(8,128)}', space=vmem, size = 0x1000, scoped, tag = 'scratch operand']
  #allocation3 [shape = 'f32[8,4]{1,0:T(8,128)}', space=vmem, size = 0x1000, scoped, tag = 'scratch operand']
  #allocation4 [shape = 'f32[8,32]{1,0:T(8,128)}', space=vmem, size = 0x1000, scoped, tag = 'scratch operand']
  %s0 = inlined_call_operand.vmem [shape: f32[2,8,32], index: 0, kind: input, shape index: {}]
  %s1 = inlined_call_operand.vmem [shape: f32[2,8,32], index: 1, kind: input, shape index: {}]
  %s2 = inlined_call_operand.vmem [shape: f32[2,8,32], index: 2, kind: input, shape index: {}]
  %s3 = inlined_call_operand.vmem [shape: f32[2,8,32], index: 3, kind: output, shape index: {}]
  %s4 = sld [smem:[#allocation0]]
  $region53: #{audio_encoder_forward.16} parent=0
    _
  %s6 = ssub.s32 1, %s4
  %s7 = scalar_select 0, %s6, %s4
  loop: start=0, step=1, limit=4
  $region2: #{audio_encoder_forward.16} parent=0 // loop_pre_header
    _
  $region3: #{audio_encoder_forward.16} parent=0 // loop_header
    %s9 = sphi 0, %s13
    %p10 = scmp.ge.s32.totalorder %s9, 4
    %s16 = sphi 0, %s35
    %s17 = sphi 0, %s31
    %s18 = sphi 0, %s27
    %s19 = sphi 0, %s16
    %s20 = sphi 0, %s17
    %s21 = sphi 0, %s18
    %s22 = sphi 0, %s19
    %s23 = sphi 0, %s20
    %s24 = sphi 0, %s21
    %s40 = sphi 0, %s42
    %s43 = sphi 0, %s40
    %s44 = sphi 0, %s43
    %s60 = sphi 0, %s44
    %s68 = sphi 0, %s70
    %s71 = sphi 0, %s68
    %s72 = sphi 0, %s71
    %s88 = sphi 0, %s72
    %s96 = sphi 0, %s98
    %s99 = sphi 0, %s96
    %s100 = sphi 0, %s99
    %s116 = sphi 0, %s100
    %s124 = sphi 0, %s126
    %s127 = sphi 0, %s124
    %s128 = sphi 0, %s127
    %s144 = sphi 0, %s128
  $region4: #{audio_encoder_forward.16} parent=0 // loop_header_branch
    %12 = sbr.rel (%p10) target = $region8
  $region5: #{audio_encoder_forward.16} parent=0 // loop_body
    %s14 = ssub.s32 %s9, 1
    %s15 = ssub.s32 %s9, 2
    %s25 = sadd.s32 1, %s18
    %p26 = scmp.ge.s32.totalorder %s25, 1
    %s27 = scalar_select %p26, 0, %s25
    %s28 = sadd.s32 1, %s17
    %s29 = scalar_select %p26, %s28, %s17
    %p30 = scmp.ge.s32.totalorder %s29, 1
    %s31 = scalar_select %p30, 0, %s29
    %s32 = sadd.s32 1, %s16
    %s33 = scalar_select %p30, %s32, %s16
    %p34 = scmp.ge.s32.totalorder %s33, 2
    %s35 = scalar_select %p34, 0, %s33
    %s36 = ssub.s32 %s16, %s35
    %s37 = ssub.s32 %s17, %s31
    %s38 = sor.u32 %s36, %s37
    %p39 = scmp.eq.s32.totalorder %s38, 0
    %s41 = sadd.s32 %s40, 1
    %s42 = scalar_select %p39, %s40, %s41
    %p45 = pneg %p39
    %p46 = scmp.eq.s32.totalorder %s9, 1
    %p47 = por %p45, %p46
    %p48 = scmp.ne.s32.totalorder %s40, %s43
    %p49 = scmp.eq.s32.totalorder %s9, 0
    %p50 = por %p48, %p49
    %p51 = scmp.ne.s32.totalorder %s40, %s43
    %p52 = scmp.eq.s32.totalorder %s14, 1
    %p53 = por %p51, %p52
    %p54 = scmp.ne.s32.totalorder %s43, %s44
    %p55 = scmp.eq.s32.totalorder %s14, 0
    %p56 = por %p54, %p55
    %p57 = scmp.ne.s32.totalorder %s43, %s44
    %p58 = scmp.eq.s32.totalorder %s15, 1
    %p59 = por %p57, %p58
    %p61 = scmp.ne.s32.totalorder %s44, %s60
    %p62 = scmp.eq.s32.totalorder %s15, 0
    %p63 = por %p61, %p62
    %s64 = ssub.s32 %s16, %s35
    %s65 = ssub.s32 %s18, %s27
    %s66 = sor.u32 %s64, %s65
    %p67 = scmp.eq.s32.totalorder %s66, 0
    %s69 = sadd.s32 %s68, 1
    %s70 = scalar_select %p67, %s68, %s69
    %p73 = pneg %p67
    %p74 = scmp.eq.s32.totalorder %s9, 1
    %p75 = por %p73, %p74
    %p76 = scmp.ne.s32.totalorder %s68, %s71
    %p77 = scmp.eq.s32.totalorder %s9, 0
    %p78 = por %p76, %p77
    %p79 = scmp.ne.s32.totalorder %s68, %s71
    %p80 = scmp.eq.s32.totalorder %s14, 1
    %p81 = por %p79, %p80
    %p82 = scmp.ne.s32.totalorder %s71, %s72
    %p83 = scmp.eq.s32.totalorder %s14, 0
    %p84 = por %p82, %p83
    %p85 = scmp.ne.s32.totalorder %s71, %s72
    %p86 = scmp.eq.s32.totalorder %s15, 1
    %p87 = por %p85, %p86
    %p89 = scmp.ne.s32.totalorder %s72, %s88
    %p90 = scmp.eq.s32.totalorder %s15, 0
    %p91 = por %p89, %p90
    %s92 = ssub.s32 %s16, %s35
    %s93 = ssub.s32 %s18, %s27
    %s94 = sor.u32 %s92, %s93
    %p95 = scmp.eq.s32.totalorder %s94, 0
    %s97 = sadd.s32 %s96, 1
    %s98 = scalar_select %p95, %s96, %s97
    %p101 = pneg %p95
    %p102 = scmp.eq.s32.totalorder %s9, 1
    %p103 = por %p101, %p102
    %p104 = scmp.ne.s32.totalorder %s96, %s99
    %p105 = scmp.eq.s32.totalorder %s9, 0
    %p106 = por %p104, %p105
    %p107 = scmp.ne.s32.totalorder %s96, %s99
    %p108 = scmp.eq.s32.totalorder %s14, 1
    %p109 = por %p107, %p108
    %p110 = scmp.ne.s32.totalorder %s99, %s100
    %p111 = scmp.eq.s32.totalorder %s14, 0
    %p112 = por %p110, %p111
    %p113 = scmp.ne.s32.totalorder %s99, %s100
    %p114 = scmp.eq.s32.totalorder %s15, 1
    %p115 = por %p113, %p114
    %p117 = scmp.ne.s32.totalorder %s100, %s116
    %p118 = scmp.eq.s32.totalorder %s15, 0
    %p119 = por %p117, %p118
    %s120 = ssub.s32 %s16, %s35
    %s121 = ssub.s32 %s17, %s31
    %s122 = sor.u32 %s120, %s121
    %p123 = scmp.eq.s32.totalorder %s122, 0
    %s125 = sadd.s32 %s124, 1
    %s126 = scalar_select %p123, %s124, %s125
    %p129 = pneg %p123
    %p130 = scmp.eq.s32.totalorder %s9, 1
    %p131 = por %p129, %p130
    %p132 = scmp.ne.s32.totalorder %s124, %s127
    %p133 = scmp.eq.s32.totalorder %s9, 0
    %p134 = por %p132, %p133
    %p135 = scmp.ne.s32.totalorder %s124, %s127
    %p136 = scmp.eq.s32.totalorder %s14, 1
    %p137 = por %p135, %p136
    %p138 = scmp.ne.s32.totalorder %s127, %s128
    %p139 = scmp.eq.s32.totalorder %s14, 0
    %p140 = por %p138, %p139
    %p141 = scmp.ne.s32.totalorder %s127, %s128
    %p142 = scmp.eq.s32.totalorder %s15, 1
    %p143 = por %p141, %p142
    %p145 = scmp.ne.s32.totalorder %s128, %s144
    %p146 = scmp.eq.s32.totalorder %s15, 0
    %p147 = por %p145, %p146
    %p148 = scmp.le.s32.totalorder 1, %s9
    %p149 = scmp.lt.s32.totalorder %s9, 3
    %p150 = pnand %p148, %p149
    %p151 = pneg %p150
    // Predicated region
    $region9: #{audio_encoder_forward.16} parent=5 // pred_check
      _
    $region10: #{audio_encoder_forward.16} parent=5 // pred_check_branch
      %153 = sbr.rel (%p150) target = $region12
    $region11: #{audio_encoder_forward.16} parent=5 // pred_region
      %s154 = ssub.s32 %s9, 1
    $region12: #{audio_encoder_forward.16} parent=5 // pred_fallthru
      _
    %p155 = scmp.lt.s32.totalorder %s9, 2
    // Predicated region
    $region13: #{audio_encoder_forward.16} parent=5 // pred_check
      %p156 = pneg %p155
    $region14: #{audio_encoder_forward.16} parent=5 // pred_check_branch
      %158 = sbr.rel (%p156) target = $region16
    $region15: #{audio_encoder_forward.16} parent=5 // pred_region
      // Predicated region
      $region17: #{audio_encoder_forward.16} parent=15 // pred_check
        %p159 = pneg %p50
      $region18: #{audio_encoder_forward.16} parent=15 // pred_check_branch
        %161 = sbr.rel (%p159) target = $region20
      $region19: #{audio_encoder_forward.16} parent=15 // pred_region
        %p162 = scmp.lt.s32.totalorder %s16, 1
        %s163 = scalar_select %p162, %s16, 1
        %p164 = scmp.lt.s32.totalorder %s17, 0
        %s165 = scalar_select %p164, %s17, 0
        %s166 = sadd.s32 %s165, %s163
        %s167 = smul.addr %s166, 8
        %s168 = scalar_lea.vmem %s0, %s167
      $region20: #{audio_encoder_forward.16} parent=15 // pred_fallthru
        _
      // Predicated region
      $region21: #{audio_encoder_forward.16} parent=15 // pred_check
        %p169 = pneg %p78
      $region22: #{audio_encoder_forward.16} parent=15 // pred_check_branch
        %171 = sbr.rel (%p169) target = $region24
      $region23: #{audio_encoder_forward.16} parent=15 // pred_region
        %p172 = scmp.lt.s32.totalorder %s16, 1
        %s173 = scalar_select %p172, %s16, 1
        %p174 = scmp.lt.s32.totalorder %s18, 0
        %s175 = scalar_select %p174, %s18, 0
        %s176 = sadd.s32 %s175, %s173
        %s177 = smul.addr %s176, 8
        %s178 = scalar_lea.vmem %s1, %s177
      $region24: #{audio_encoder_forward.16} parent=15 // pred_fallthru
        _
      // Predicated region
      $region25: #{audio_encoder_forward.16} parent=15 // pred_check
        %p179 = pneg %p106
      $region26: #{audio_encoder_forward.16} parent=15 // pred_check_branch
        %181 = sbr.rel (%p179) target = $region28
      $region27: #{audio_encoder_forward.16} parent=15 // pred_region
        %p182 = scmp.lt.s32.totalorder %s16, 1
        %s183 = scalar_select %p182, %s16, 1
        %p184 = scmp.lt.s32.totalorder %s18, 0
        %s185 = scalar_select %p184, %s18, 0
        %s186 = sadd.s32 %s185, %s183
        %s187 = smul.addr %s186, 8
        %s188 = scalar_lea.vmem %s2, %s187
      $region28: #{audio_encoder_forward.16} parent=15 // pred_fallthru
        _
    $region16: #{audio_encoder_forward.16} parent=5 // pred_fallthru
      _
    %p189 = scmp.le.s32.totalorder 1, %s9
    %p190 = scmp.lt.s32.totalorder %s9, 3
    %p191 = pnand %p189, %p190
    %p192 = pneg %p191
    // Predicated region
    $region29: #{audio_encoder_forward.16} parent=5 // pred_check
      _
    $region30: #{audio_encoder_forward.16} parent=5 // pred_check_branch
      %194 = sbr.rel (%p191) target = $region32
    $region31: #{audio_encoder_forward.16} parent=5 // pred_region
      %s195 = ssub.s32 %s9, 1
      %p196 = scmp.lt.s32.totalorder %s19, 1
      %s197 = scalar_select %p196, %s19, 1
      %p198 = scmp.lt.s32.totalorder %s20, 0
      %s199 = scalar_select %p198, %s20, 0
      %s200 = sadd.s32 %s199, %s197
      %s201 = smul.addr %s200, 8
      %s202 = scalar_lea.vmem %s0, %s201
      %p203 = pneg %p56
      %p204 = pneg %p53
      %p205 = scmp.lt.s32.totalorder %s19, 1
      %s206 = scalar_select %p205, %s19, 1
      %p207 = scmp.lt.s32.totalorder %s21, 0
      %s208 = scalar_select %p207, %s21, 0
      %s209 = sadd.s32 %s208, %s206
      %s210 = smul.addr %s209, 8
      %s211 = scalar_lea.vmem %s1, %s210
      %p212 = pneg %p84
      %p213 = pneg %p81
      %p214 = scmp.lt.s32.totalorder %s19, 1
      %s215 = scalar_select %p214, %s19, 1
      %p216 = scmp.lt.s32.totalorder %s21, 0
      %s217 = scalar_select %p216, %s21, 0
      %s218 = sadd.s32 %s217, %s215
      %s219 = smul.addr %s218, 8
      %s220 = scalar_lea.vmem %s2, %s219
      %p221 = pneg %p112
      %p222 = pneg %p109
      %p223 = pneg %p140
      %p224 = pneg %p137
      %p225 = scmp.lt.s32.totalorder %s19, 1
      %s226 = scalar_select %p225, %s19, 1
      %p227 = scmp.lt.s32.totalorder %s20, 0
      %s228 = scalar_select %p227, %s20, 0
      %s229 = sadd.s32 %s228, %s226
      %s230 = smul.addr %s229, 8
      %s231 = scalar_lea.vmem %s3, %s230
      %p232 = scmp.lt.s32.totalorder %s19, 1
      %s233 = scalar_select %p232, %s19, 1
      %p234 = scmp.lt.s32.totalorder %s20, 0
      %s235 = scalar_select %p234, %s20, 0
      %s236 = sadd.s32 %s235, %s233
      %s237 = smul.addr %s236, 8
      %s238 = scalar_lea.vmem %s0, %s237
      %p239 = scmp.lt.s32.totalorder %s19, 1
      %s240 = scalar_select %p239, %s19, 1
      %p241 = scmp.lt.s32.totalorder %s21, 0
      %s242 = scalar_select %p241, %s21, 0
      %s243 = sadd.s32 %s242, %s240
      %s244 = smul.addr %s243, 8
      %s245 = scalar_lea.vmem %s1, %s244
      %p246 = scmp.lt.s32.totalorder %s19, 1
      %s247 = scalar_select %p246, %s19, 1
      %p248 = scmp.lt.s32.totalorder %s21, 0
      %s249 = scalar_select %p248, %s21, 0
      %s250 = sadd.s32 %s249, %s247
      %s251 = smul.addr %s250, 8
      %s252 = scalar_lea.vmem %s2, %s251
      %p253 = scmp.lt.s32.totalorder %s19, 1
      %s254 = scalar_select %p253, %s19, 1
      %p255 = scmp.lt.s32.totalorder %s20, 0
      %s256 = scalar_select %p255, %s20, 0
      %s257 = sadd.s32 %s256, %s254
      %s258 = smul.addr %s257, 8
      %s259 = scalar_lea.vmem %s3, %s258
      %p261 = scmp.eq.s32.totalorder %s21, 0
      // Predicated region
      $region33: #{audio_encoder_forward.16} parent=31 // pred_check
        %p262 = pneg %p261
      $region34: #{audio_encoder_forward.16} parent=31 // pred_check_branch
        %264 = sbr.rel (%p262) target = $region36
      $region35: #{audio_encoder_forward.16} parent=31 // pred_region
        %vm265 = vcmask 31744
        %266 = vst.msk [vmem:[#allocation2] sm:$0xff] %vm265, -inf
        %267 = vst.msk [vmem:[#allocation3] sm:$0xff] %vm265, 0.0
        %vm268 = vcmask 261120
        %269 = vst.msk [vmem:[#allocation4] sm:$0xff] %vm268, 0.0
      $region36: #{audio_encoder_forward.16} parent=31 // pred_fallthru
        _
      %v270 = vld [vmem:[%s238] sm:$0xff]
      %v271 = vpack.c.bf16 %v270, %v270
      %v272 = vld [vmem:[%s245] sm:$0xff]
      %v273 = vpack.c.bf16 %v272, %v272
      %v274 = vld [vmem:[%s252] sm:$0xff]
      %v275 = vpack.c.bf16 %v274, %v274
      %vm276 = vcmask 64512
      %v278 = vsel %vm276, %v271, 0
      %v281 = vsel %vm276, %v273, 0
      %283 = vmatprep.subr.bf16.mxu0 0
      %284 = vmatpush1.bf16.xpose.msra.mxu0 %v281
      %285 = vmatprep.subr.bf16.mxu0 0
      %286 = vmatpush1.bf16.xpose.msra.mxu0 0
      %287 = vmatprep.subr.bf16.mxu0 0
      %288 = vmatpush1.bf16.xpose.msra.mxu0 0
      %289 = vmatprep.subr.bf16.mxu0 0
      %290 = vmatpush1.bf16.xpose.msra.mxu0 0
      %291 = vmatprep.subr.bf16.mxu0 0
      %292 = vmatpush1.bf16.xpose.msra.mxu0 0
      %293 = vmatprep.subr.bf16.mxu0 0
      %294 = vmatpush1.bf16.xpose.msra.mxu0 0
      %295 = vmatprep.subr.bf16.mxu0 0
      %296 = vmatpush1.bf16.xpose.msra.mxu0 0
      %297 = vmatprep.subr.bf16.mxu0 0
      %298 = vmatpush1.bf16.xpose.msra.mxu0 0
      %299 = vmatprep.subr.bf16.mxu0 0
      %300 = vmatpush1.bf16.xpose.msra.mxu0 0
      %301 = vmatprep.subr.bf16.mxu0 0
      %302 = vmatpush1.bf16.xpose.msra.mxu0 0
      %303 = vmatprep.subr.bf16.mxu0 0
      %304 = vmatpush1.bf16.xpose.msra.mxu0 0
      %305 = vmatprep.subr.bf16.mxu0 0
      %306 = vmatpush1.bf16.xpose.msra.mxu0 0
      %307 = vmatprep.subr.bf16.mxu0 0
      %308 = vmatpush1.bf16.xpose.msra.mxu0 0
      %309 = vmatprep.subr.bf16.mxu0 0
      %310 = vmatpush1.bf16.xpose.msra.mxu0 0
      %311 = vmatprep.subr.bf16.mxu0 0
      %312 = vmatpush1.bf16.xpose.msra.mxu0 0
      %313 = vmatprep.subr.bf16.mxu0 0
      %314 = vmatpush1.bf16.xpose.msra.mxu0 0
      %315 = vmatprep.mubr.bf16.mxu0 0
      %316 = vmatmul.mubr.bf16.gmra.mrb[0].mxu0 %v278
      %v317 = vpop.f32.mrb[0].mxu0
      %v318 = vadd.f32 0.0, %v317
      %v319 = vpop.f32.mrb[0].mxu0
      %v320 = vpop.f32.mrb[0].mxu0
      %v321 = vpop.f32.mrb[0].mxu0
      %322 = vdwg.mxu0
      %v323 = vld [vmem:[#allocation2] sm:$0xff]
      %v324 = vsel %vm276, %v318, -inf
      %325 = vmax.xlane.f32.xlu0 %v324
      %v326 = vpop.xlane.xlu0 %325
      %v327 = vmax.f32 %v323, %v326
      %v328 = vsub.f32 %v323, %v327
      %v329 = vmul.f32 %v328, 1.442695
      %v330 = vpow.pop %v329
      %332 = vset.pattern.permute.xlu0 0
      %333 = vperm.xlu0 %332, %v327
      %v334 = vpop.permute.xlu0 %333
      %v336 = vsub.f32 %v318, %v334
      %v337 = vmul.f32 %v336, 1.442695
      %v338 = vpow.pop %v337
      %v339 = vld [vmem:[#allocation3] sm:$0xff]
      %v340 = vmul.f32 %v330, %v339
      %v341 = vsel %vm276, %v338, 0.0
      %342 = vadd.xlane.f32.xlu0 %v341
      %v343 = vpop.xlane.xlu0 %342
      %v344 = vadd.f32 %v340, %v343
      %vm345 = vcmask 7168
      %346 = vst.msk [vmem:[#allocation3] sm:$0xff] %vm345, %v344
      %v347 = vpack.c.bf16 %v338, %v338
      %v349 = vsel %vm276, %v347, 0
      %vm351 = vcmask 1043456
      %v353 = vsel %vm351, %v275, 0
      %355 = vmatprep.subr.bf16.mxu0 0
      %356 = vmatpush1.bf16.msra.mxu0 %v353
      %357 = vmatprep.subr.bf16.mxu0 0
      %358 = vmatpush1.bf16.msra.mxu0 0
      %359 = vmatprep.subr.bf16.mxu0 0
      %360 = vmatpush1.bf16.msra.mxu0 0
      %361 = vmatprep.subr.bf16.mxu0 0
      %362 = vmatpush1.bf16.msra.mxu0 0
      %363 = vmatprep.subr.bf16.mxu0 0
      %364 = vmatpush1.bf16.msra.mxu0 0
      %365 = vmatprep.subr.bf16.mxu0 0
      %366 = vmatpush1.bf16.msra.mxu0 0
      %367 = vmatprep.subr.bf16.mxu0 0
      %368 = vmatpush1.bf16.msra.mxu0 0
      %369 = vmatprep.subr.bf16.mxu0 0
      %370 = vmatpush1.bf16.msra.mxu0 0
      %371 = vmatprep.subr.bf16.mxu0 0
      %372 = vmatpush1.bf16.msra.mxu0 0
      %373 = vmatprep.subr.bf16.mxu0 0
      %374 = vmatpush1.bf16.msra.mxu0 0
      %375 = vmatprep.subr.bf16.mxu0 0
      %376 = vmatpush1.bf16.msra.mxu0 0
      %377 = vmatprep.subr.bf16.mxu0 0
      %378 = vmatpush1.bf16.msra.mxu0 0
      %379 = vmatprep.subr.bf16.mxu0 0
      %380 = vmatpush1.bf16.msra.mxu0 0
      %381 = vmatprep.subr.bf16.mxu0 0
      %382 = vmatpush1.bf16.msra.mxu0 0
      %383 = vmatprep.subr.bf16.mxu0 0
      %384 = vmatpush1.bf16.msra.mxu0 0
      %385 = vmatprep.subr.bf16.mxu0 0
      %386 = vmatpush1.bf16.msra.mxu0 0
      %387 = vmatprep.mubr.bf16.mxu0 0
      %388 = vmatmul.mubr.bf16.gmra.mrb[0].mxu0 %v349
      %v389 = vpop.f32.mrb[0].mxu0
      %v390 = vadd.f32 0.0, %v389
      %v391 = vpop.f32.mrb[0].mxu0
      %v392 = vpop.f32.mrb[0].mxu0
      %v393 = vpop.f32.mrb[0].mxu0
      %394 = vdwg.mxu0
      %v395 = vld [vmem:[#allocation4] sm:$0xff]
      %397 = vset.pattern.permute.xlu0 0
      %398 = vperm.xlu0 %397, %v330
      %v399 = vpop.permute.xlu0 %398
      %v401 = vmul.f32 %v399, %v395
      %v402 = vadd.f32 %v401, %v390
      %403 = vst.msk [vmem:[#allocation4] sm:$0xff] %vm276, %v402
      %404 = vst.msk [vmem:[#allocation2] sm:$0xff] %vm345, %v327
      %406 = vrot.lane.b32.xlu0 %v271, 120
      %v407 = vpop.permute.xlu0 %406
      %409 = vrot.lane.b32.xlu0 %v273, 120
      %v410 = vpop.permute.xlu0 %409
      %v412 = vsel %vm276, %v407, 0
      %v415 = vsel %vm276, %v410, 0
      %417 = vmatprep.subr.bf16.mxu0 0
      %418 = vmatpush1.bf16.xpose.msra.mxu0 %v415
      %419 = vmatprep.subr.bf16.mxu0 0
      %420 = vmatpush1.bf16.xpose.msra.mxu0 0
      %421 = vmatprep.subr.bf16.mxu0 0
      %422 = vmatpush1.bf16.xpose.msra.mxu0 0
      %423 = vmatprep.subr.bf16.mxu0 0
      %424 = vmatpush1.bf16.xpose.msra.mxu0 0
      %425 = vmatprep.subr.bf16.mxu0 0
      %426 = vmatpush1.bf16.xpose.msra.mxu0 0
      %427 = vmatprep.subr.bf16.mxu0 0
      %428 = vmatpush1.bf16.xpose.msra.mxu0 0
      %429 = vmatprep.subr.bf16.mxu0 0
      %430 = vmatpush1.bf16.xpose.msra.mxu0 0
      %431 = vmatprep.subr.bf16.mxu0 0
      %432 = vmatpush1.bf16.xpose.msra.mxu0 0
      %433 = vmatprep.subr.bf16.mxu0 0
      %434 = vmatpush1.bf16.xpose.msra.mxu0 0
      %435 = vmatprep.subr.bf16.mxu0 0
      %436 = vmatpush1.bf16.xpose.msra.mxu0 0
      %437 = vmatprep.subr.bf16.mxu0 0
      %438 = vmatpush1.bf16.xpose.msra.mxu0 0
      %439 = vmatprep.subr.bf16.mxu0 0
      %440 = vmatpush1.bf16.xpose.msra.mxu0 0
      %441 = vmatprep.subr.bf16.mxu0 0
      %442 = vmatpush1.bf16.xpose.msra.mxu0 0
      %443 = vmatprep.subr.bf16.mxu0 0
      %444 = vmatpush1.bf16.xpose.msra.mxu0 0
      %445 = vmatprep.subr.bf16.mxu0 0
      %446 = vmatpush1.bf16.xpose.msra.mxu0 0
      %447 = vmatprep.subr.bf16.mxu0 0
      %448 = vmatpush1.bf16.xpose.msra.mxu0 0
      %449 = vmatprep.mubr.bf16.mxu0 0
      %450 = vmatmul.mubr.bf16.gmra.mrb[0].mxu0 %v412
      %v451 = vpop.f32.mrb[0].mxu0
      %v452 = vadd.f32 0.0, %v451
      %v453 = vpop.f32.mrb[0].mxu0
      %v454 = vpop.f32.mrb[0].mxu0
      %v455 = vpop.f32.mrb[0].mxu0
      %456 = vdwg.mxu0
      %v457 = vld [vmem:[#allocation2] sm:$0xff]
      %v458 = vsel %vm276, %v452, -inf
      %459 = vmax.xlane.f32.xlu0 %v458
      %v460 = vpop.xlane.xlu0 %459
      %v461 = vmax.f32 %v457, %v460
      %v462 = vsub.f32 %v457, %v461
      %v463 = vmul.f32 %v462, 1.442695
      %v464 = vpow.pop %v463
      %466 = vset.pattern.permute.xlu0 1
      %467 = vperm.xlu0 %466, %v461
      %v468 = vpop.permute.xlu0 %467
      %v470 = vsub.f32 %v452, %v468
      %v471 = vmul.f32 %v470, 1.442695
      %v472 = vpow.pop %v471
      %v473 = vld [vmem:[#allocation3] sm:$0xff]
      %v474 = vmul.f32 %v464, %v473
      %v475 = vsel %vm276, %v472, 0.0
      %476 = vadd.xlane.f32.xlu0 %v475
      %v477 = vpop.xlane.xlu0 %476
      %v478 = vadd.f32 %v474, %v477
      %vm479 = vcmask 15368
      %480 = vst.msk [vmem:[#allocation3] sm:$0xff] %vm479, %v478
      %v481 = vpack.c.bf16 %v472, %v472
      %483 = vrot.lane.b32.xlu0 %v275, 120
      %v484 = vpop.permute.xlu0 %483
      %v486 = vsel %vm276, %v481, 0
      %v489 = vsel %vm351, %v484, 0
      %491 = vmatprep.subr.bf16.mxu0 0
      %492 = vmatpush1.bf16.msra.mxu0 %v489
      %493 = vmatprep.subr.bf16.mxu0 0
      %494 = vmatpush1.bf16.msra.mxu0 0
      %495 = vmatprep.subr.bf16.mxu0 0
      %496 = vmatpush1.bf16.msra.mxu0 0
      %497 = vmatprep.subr.bf16.mxu0 0
      %498 = vmatpush1.bf16.msra.mxu0 0
      %499 = vmatprep.subr.bf16.mxu0 0
      %500 = vmatpush1.bf16.msra.mxu0 0
      %501 = vmatprep.subr.bf16.mxu0 0
      %502 = vmatpush1.bf16.msra.mxu0 0
      %503 = vmatprep.subr.bf16.mxu0 0
      %504 = vmatpush1.bf16.msra.mxu0 0
      %505 = vmatprep.subr.bf16.mxu0 0
      %506 = vmatpush1.bf16.msra.mxu0 0
      %507 = vmatprep.subr.bf16.mxu0 0
      %508 = vmatpush1.bf16.msra.mxu0 0
      %509 = vmatprep.subr.bf16.mxu0 0
      %510 = vmatpush1.bf16.msra.mxu0 0
      %511 = vmatprep.subr.bf16.mxu0 0
      %512 = vmatpush1.bf16.msra.mxu0 0
      %513 = vmatprep.subr.bf16.mxu0 0
      %514 = vmatpush1.bf16.msra.mxu0 0
      %515 = vmatprep.subr.bf16.mxu0 0
      %516 = vmatpush1.bf16.msra.mxu0 0
      %517 = vmatprep.subr.bf16.mxu0 0
      %518 = vmatpush1.bf16.msra.mxu0 0
      %519 = vmatprep.subr.bf16.mxu0 0
      %520 = vmatpush1.bf16.msra.mxu0 0
      %521 = vmatprep.subr.bf16.mxu0 0
      %522 = vmatpush1.bf16.msra.mxu0 0
      %523 = vmatprep.mubr.bf16.mxu0 0
      %524 = vmatmul.mubr.bf16.gmra.mrb[0].mxu0 %v486
      %v525 = vpop.f32.mrb[0].mxu0
      %v526 = vadd.f32 0.0, %v525
      %v527 = vpop.f32.mrb[0].mxu0
      %v528 = vpop.f32.mrb[0].mxu0
      %v529 = vpop.f32.mrb[0].mxu0
      %530 = vdwg.mxu0
      %v531 = vld [vmem:[#allocation4] sm:$0xff]
      %533 = vset.pattern.permute.xlu0 1
      %534 = vperm.xlu0 %533, %v464
      %v535 = vpop.permute.xlu0 %534
      %v537 = vmul.f32 %v535, %v531
      %539 = vrot.lane.b32.xlu0 %v526, 8
      %v540 = vpop.permute.xlu0 %539
      %v542 = vadd.f32 %v537, %v540
      %vm543 = vcmask 130112
      %544 = vst.msk [vmem:[#allocation4] sm:$0xff] %vm543, %v542
      %545 = vst.msk [vmem:[#allocation2] sm:$0xff] %vm479, %v461
      %546 = vrot.lane.b32.xlu0 %v271, 112
      %v547 = vpop.permute.xlu0 %546
      %548 = vrot.lane.b32.xlu0 %v273, 112
      %v549 = vpop.permute.xlu0 %548
      %v551 = vsel %vm276, %v547, 0
      %v554 = vsel %vm276, %v549, 0
      %556 = vmatprep.subr.bf16.mxu0 0
      %557 = vmatpush1.bf16.xpose.msra.mxu0 %v554
      %558 = vmatprep.subr.bf16.mxu0 0
      %559 = vmatpush1.bf16.xpose.msra.mxu0 0
      %560 = vmatprep.subr.bf16.mxu0 0
      %561 = vmatpush1.bf16.xpose.msra.mxu0 0
      %562 = vmatprep.subr.bf16.mxu0 0
      %563 = vmatpush1.bf16.xpose.msra.mxu0 0
      %564 = vmatprep.subr.bf16.mxu0 0
      %565 = vmatpush1.bf16.xpose.msra.mxu0 0
      %566 = vmatprep.subr.bf16.mxu0 0
      %567 = vmatpush1.bf16.xpose.msra.mxu0 0
      %568 = vmatprep.subr.bf16.mxu0 0
      %569 = vmatpush1.bf16.xpose.msra.mxu0 0
      %570 = vmatprep.subr.bf16.mxu0 0
      %571 = vmatpush1.bf16.xpose.msra.mxu0 0
      %572 = vmatprep.subr.bf16.mxu0 0
      %573 = vmatpush1.bf16.xpose.msra.mxu0 0
      %574 = vmatprep.subr.bf16.mxu0 0
      %575 = vmatpush1.bf16.xpose.msra.mxu0 0
      %576 = vmatprep.subr.bf16.mxu0 0
      %577 = vmatpush1.bf16.xpose.msra.mxu0 0
      %578 = vmatprep.subr.bf16.mxu0 0
      %579 = vmatpush1.bf16.xpose.msra.mxu0 0
      %580 = vmatprep.subr.bf16.mxu0 0
      %581 = vmatpush1.bf16.xpose.msra.mxu0 0
      %582 = vmatprep.subr.bf16.mxu0 0
      %583 = vmatpush1.bf16.xpose.msra.mxu0 0
      %584 = vmatprep.subr.bf16.mxu0 0
      %585 = vmatpush1.bf16.xpose.msra.mxu0 0
      %586 = vmatprep.subr.bf16.mxu0 0
      %587 = vmatpush1.bf16.xpose.msra.mxu0 0
      %588 = vmatprep.mubr.bf16.mxu0 0
      %589 = vmatmul.mubr.bf16.gmra.mrb[0].mxu0 %v551
      %v590 = vpop.f32.mrb[0].mxu0
      %v591 = vadd.f32 0.0, %v590
      %v592 = vpop.f32.mrb[0].mxu0
      %v593 = vpop.f32.mrb[0].mxu0
      %v594 = vpop.f32.mrb[0].mxu0
      %595 = vdwg.mxu0
      %v596 = vld [vmem:[#allocation2] sm:$0xff]
      %v597 = vsel %vm276, %v591, -inf
      %598 = vmax.xlane.f32.xlu0 %v597
      %v599 = vpop.xlane.xlu0 %598
      %v600 = vmax.f32 %v596, %v599
      %v601 = vsub.f32 %v596, %v600
      %v602 = vmul.f32 %v601, 1.442695
      %v603 = vpow.pop %v602
      %605 = vset.pattern.permute.xlu0 2
      %606 = vperm.xlu0 %605, %v600
      %v607 = vpop.permute.xlu0 %606
      %v609 = vsub.f32 %v591, %v607
      %v610 = vmul.f32 %v609, 1.442695
      %v611 = vpow.pop %v610
      %v612 = vld [vmem:[#allocation3] sm:$0xff]
      %v613 = vmul.f32 %v603, %v612
      %v614 = vsel %vm276, %v611, 0.0
      %615 = vadd.xlane.f32.xlu0 %v614
      %v616 = vpop.xlane.xlu0 %615
      %v617 = vadd.f32 %v613, %v616
      %vm618 = vcmask 23568
      %619 = vst.msk [vmem:[#allocation3] sm:$0xff] %vm618, %v617
      %v620 = vpack.c.bf16 %v611, %v611
      %621 = vrot.lane.b32.xlu0 %v275, 112
      %v622 = vpop.permute.xlu0 %621
      %v624 = vsel %vm276, %v620, 0
      %v627 = vsel %vm351, %v622, 0
      %629 = vmatprep.subr.bf16.mxu0 0
      %630 = vmatpush1.bf16.msra.mxu0 %v627
      %631 = vmatprep.subr.bf16.mxu0 0
      %632 = vmatpush1.bf16.msra.mxu0 0
      %633 = vmatprep.subr.bf16.mxu0 0
      %634 = vmatpush1.bf16.msra.mxu0 0
      %635 = vmatprep.subr.bf16.mxu0 0
      %636 = vmatpush1.bf16.msra.mxu0 0
      %637 = vmatprep.subr.bf16.mxu0 0
      %638 = vmatpush1.bf16.msra.mxu0 0
      %639 = vmatprep.subr.bf16.mxu0 0
      %640 = vmatpush1.bf16.msra.mxu0 0
      %641 = vmatprep.subr.bf16.mxu0 0
      %642 = vmatpush1.bf16.msra.mxu0 0
      %643 = vmatprep.subr.bf16.mxu0 0
      %644 = vmatpush1.bf16.msra.mxu0 0
      %645 = vmatprep.subr.bf16.mxu0 0
      %646 = vmatpush1.bf16.msra.mxu0 0
      %647 = vmatprep.subr.bf16.mxu0 0
      %648 = vmatpush1.bf16.msra.mxu0 0
      %649 = vmatprep.subr.bf16.mxu0 0
      %650 = vmatpush1.bf16.msra.mxu0 0
      %651 = vmatprep.subr.bf16.mxu0 0
      %652 = vmatpush1.bf16.msra.mxu0 0
      %653 = vmatprep.subr.bf16.mxu0 0
      %654 = vmatpush1.bf16.msra.mxu0 0
      %655 = vmatprep.subr.bf16.mxu0 0
      %656 = vmatpush1.bf16.msra.mxu0 0
      %657 = vmatprep.subr.bf16.mxu0 0
      %658 = vmatpush1.bf16.msra.mxu0 0
      %659 = vmatprep.subr.bf16.mxu0 0
      %660 = vmatpush1.bf16.msra.mxu0 0
      %661 = vmatprep.mubr.bf16.mxu0 0
      %662 = vmatmul.mubr.bf16.gmra.mrb[0].mxu0 %v624
      %v663 = vpop.f32.mrb[0].mxu0
      %v664 = vadd.f32 0.0, %v663
      %v665 = vpop.f32.mrb[0].mxu0
      %v666 = vpop.f32.mrb[0].mxu0
      %v667 = vpop.f32.mrb[0].mxu0
      %668 = vdwg.mxu0
      %v669 = vld [vmem:[#allocation4] sm:$0xff]
      %671 = vset.pattern.permute.xlu0 2
      %672 = vperm.xlu0 %671, %v603
      %v673 = vpop.permute.xlu0 %672
      %v675 = vmul.f32 %v673, %v669
      %677 = vrot.lane.b32.xlu0 %v664, 16
      %v678 = vpop.permute.xlu0 %677
      %v680 = vadd.f32 %v675, %v678
      %vm681 = vcmask 195712
      %682 = vst.msk [vmem:[#allocation4] sm:$0xff] %vm681, %v680
      %683 = vst.msk [vmem:[#allocation2] sm:$0xff] %vm618, %v600
      %684 = vrot.lane.b32.xlu0 %v271, 104
      %v685 = vpop.permute.xlu0 %684
      %686 = vrot.lane.b32.xlu0 %v273, 104
      %v687 = vpop.permute.xlu0 %686
      %v689 = vsel %vm276, %v685, 0
      %v692 = vsel %vm276, %v687, 0
      %694 = vmatprep.subr.bf16.mxu0 0
      %695 = vmatpush1.bf16.xpose.msra.mxu0 %v692
      %696 = vmatprep.subr.bf16.mxu0 0
      %697 = vmatpush1.bf16.xpose.msra.mxu0 0
      %698 = vmatprep.subr.bf16.mxu0 0
      %699 = vmatpush1.bf16.xpose.msra.mxu0 0
      %700 = vmatprep.subr.bf16.mxu0 0
      %701 = vmatpush1.bf16.xpose.msra.mxu0 0
      %702 = vmatprep.subr.bf16.mxu0 0
      %703 = vmatpush1.bf16.xpose.msra.mxu0 0
      %704 = vmatprep.subr.bf16.mxu0 0
      %705 = vmatpush1.bf16.xpose.msra.mxu0 0
      %706 = vmatprep.subr.bf16.mxu0 0
      %707 = vmatpush1.bf16.xpose.msra.mxu0 0
      %708 = vmatprep.subr.bf16.mxu0 0
      %709 = vmatpush1.bf16.xpose.msra.mxu0 0
      %710 = vmatprep.subr.bf16.mxu0 0
      %711 = vmatpush1.bf16.xpose.msra.mxu0 0
      %712 = vmatprep.subr.bf16.mxu0 0
      %713 = vmatpush1.bf16.xpose.msra.mxu0 0
      %714 = vmatprep.subr.bf16.mxu0 0
      %715 = vmatpush1.bf16.xpose.msra.mxu0 0
      %716 = vmatprep.subr.bf16.mxu0 0
      %717 = vmatpush1.bf16.xpose.msra.mxu0 0
      %718 = vmatprep.subr.bf16.mxu0 0
      %719 = vmatpush1.bf16.xpose.msra.mxu0 0
      %720 = vmatprep.subr.bf16.mxu0 0
      %721 = vmatpush1.bf16.xpose.msra.mxu0 0
      %722 = vmatprep.subr.bf16.mxu0 0
      %723 = vmatpush1.bf16.xpose.msra.mxu0 0
      %724 = vmatprep.subr.bf16.mxu0 0
      %725 = vmatpush1.bf16.xpose.msra.mxu0 0
      %726 = vmatprep.mubr.bf16.mxu0 0
      %727 = vmatmul.mubr.bf16.gmra.mrb[0].mxu0 %v689
      %v728 = vpop.f32.mrb[0].mxu0
      %v729 = vadd.f32 0.0, %v728
      %v730 = vpop.f32.mrb[0].mxu0
      %v731 = vpop.f32.mrb[0].mxu0
      %v732 = vpop.f32.mrb[0].mxu0
      %733 = vdwg.mxu0
      %v734 = vld [vmem:[#allocation2] sm:$0xff]
      %v735 = vsel %vm276, %v729, -inf
      %736 = vmax.xlane.f32.xlu0 %v735
      %v737 = vpop.xlane.xlu0 %736
      %v738 = vmax.f32 %v734, %v737
      %v739 = vsub.f32 %v734, %v738
      %v740 = vmul.f32 %v739, 1.442695
      %v741 = vpow.pop %v740
      %743 = vset.pattern.permute.xlu0 3
      %744 = vperm.xlu0 %743, %v738
      %v745 = vpop.permute.xlu0 %744
      %v747 = vsub.f32 %v729, %v745
      %v748 = vmul.f32 %v747, 1.442695
      %v749 = vpow.pop %v748
      %v750 = vld [vmem:[#allocation3] sm:$0xff]
      %v751 = vmul.f32 %v741, %v750
      %v752 = vsel %vm276, %v749, 0.0
      %753 = vadd.xlane.f32.xlu0 %v752
      %v754 = vpop.xlane.xlu0 %753
      %v755 = vadd.f32 %v751, %v754
      %vm756 = vcmask 31768
      %757 = vst.msk [vmem:[#allocation3] sm:$0xff] %vm756, %v755
      %v758 = vpack.c.bf16 %v749, %v749
      %759 = vrot.lane.b32.xlu0 %v275, 104
      %v760 = vpop.permute.xlu0 %759
      %v762 = vsel %vm276, %v758, 0
      %v765 = vsel %vm351, %v760, 0
      %767 = vmatprep.subr.bf16.mxu0 0
      %768 = vmatpush1.bf16.msra.mxu0 %v765
      %769 = vmatprep.subr.bf16.mxu0 0
      %770 = vmatpush1.bf16.msra.mxu0 0
      %771 = vmatprep.subr.bf16.mxu0 0
      %772 = vmatpush1.bf16.msra.mxu0 0
      %773 = vmatprep.subr.bf16.mxu0 0
      %774 = vmatpush1.bf16.msra.mxu0 0
      %775 = vmatprep.subr.bf16.mxu0 0
      %776 = vmatpush1.bf16.msra.mxu0 0
      %777 = vmatprep.subr.bf16.mxu0 0
      %778 = vmatpush1.bf16.msra.mxu0 0
      %779 = vmatprep.subr.bf16.mxu0 0
      %780 = vmatpush1.bf16.msra.mxu0 0
      %781 = vmatprep.subr.bf16.mxu0 0
      %782 = vmatpush1.bf16.msra.mxu0 0
      %783 = vmatprep.subr.bf16.mxu0 0
      %784 = vmatpush1.bf16.msra.mxu0 0
      %785 = vmatprep.subr.bf16.mxu0 0
      %786 = vmatpush1.bf16.msra.mxu0 0
      %787 = vmatprep.subr.bf16.mxu0 0
      %788 = vmatpush1.bf16.msra.mxu0 0
      %789 = vmatprep.subr.bf16.mxu0 0
      %790 = vmatpush1.bf16.msra.mxu0 0
      %791 = vmatprep.subr.bf16.mxu0 0
      %792 = vmatpush1.bf16.msra.mxu0 0
      %793 = vmatprep.subr.bf16.mxu0 0
      %794 = vmatpush1.bf16.msra.mxu0 0
      %795 = vmatprep.subr.bf16.mxu0 0
      %796 = vmatpush1.bf16.msra.mxu0 0
      %797 = vmatprep.subr.bf16.mxu0 0
      %798 = vmatpush1.bf16.msra.mxu0 0
      %799 = vmatprep.mubr.bf16.mxu0 0
      %800 = vmatmul.mubr.bf16.gmra.mrb[0].mxu0 %v762
      %v801 = vpop.f32.mrb[0].mxu0
      %v802 = vadd.f32 0.0, %v801
      %v803 = vpop.f32.mrb[0].mxu0
      %v804 = vpop.f32.mrb[0].mxu0
      %v805 = vpop.f32.mrb[0].mxu0
      %806 = vdwg.mxu0
      %v807 = vld [vmem:[#allocation4] sm:$0xff]
      %809 = vset.pattern.permute.xlu0 3
      %810 = vperm.xlu0 %809, %v741
      %v811 = vpop.permute.xlu0 %810
      %v813 = vmul.f32 %v811, %v807
      %815 = vrot.lane.b32.xlu0 %v802, 24
      %v816 = vpop.permute.xlu0 %815
      %v818 = vadd.f32 %v813, %v816
      %vm819 = vcmask 261312
      %820 = vst.msk [vmem:[#allocation4] sm:$0xff] %vm819, %v818
      %821 = vst.msk [vmem:[#allocation2] sm:$0xff] %vm756, %v738
      // Predicated region
      $region37: #{audio_encoder_forward.16} parent=31 // pred_check
        %p822 = pneg %p261
      $region38: #{audio_encoder_forward.16} parent=31 // pred_check_branch
        %824 = sbr.rel (%p822) target = $region40
      $region39: #{audio_encoder_forward.16} parent=31 // pred_region
        %v825 = vld [vmem:[#allocation3] sm:$0xff]
        %v826 = vrcp.pop %v825
        %v827 = vld [vmem:[#allocation4] sm:$0xff]
        %829 = vset.pattern.permute.xlu0 0
        %830 = vperm.xlu0 %829, %v826
        %v831 = vpop.permute.xlu0 %830
        %v833 = vmul.f32 %v827, %v831
        %834 = vset.pattern.permute.xlu0 1
        %835 = vperm.xlu0 %834, %v826
        %v836 = vpop.permute.xlu0 %835
        %v838 = vmul.f32 %v827, %v836
        %839 = vset.pattern.permute.xlu0 2
        %840 = vperm.xlu0 %839, %v826
        %v841 = vpop.permute.xlu0 %840
        %v843 = vmul.f32 %v827, %v841
        %844 = vset.pattern.permute.xlu0 3
        %845 = vperm.xlu0 %844, %v826
        %v846 = vpop.permute.xlu0 %845
        %v848 = vmul.f32 %v827, %v846
        %v849 = vsel %vm276, %v833, %v838
        %vm850 = vcmask 130048
        %v851 = vsel %vm850, %v849, %v843
        %vm852 = vcmask 195584
        %v853 = vsel %vm852, %v851, %v848
        %vm854 = vcmask 261120
        %855 = vst.msk [vmem:[%s259] sm:$0xff] %vm854, %v853
      $region40: #{audio_encoder_forward.16} parent=31 // pred_fallthru
        _
      %p856 = scmp.lt.s32.totalorder %s19, 1
      %s857 = scalar_select %p856, %s19, 1
      %p858 = scmp.lt.s32.totalorder %s20, 0
      %s859 = scalar_select %p858, %s20, 0
      %s860 = sadd.s32 %s859, %s857
      %s861 = smul.addr %s860, 8
      %s862 = scalar_lea.vmem %s3, %s861
      // Predicated region
      $region41: #{audio_encoder_forward.16} parent=31 // pred_check
        %p863 = pneg %p137
      $region42: #{audio_encoder_forward.16} parent=31 // pred_check_branch
        %865 = sbr.rel (%p863) target = $region44
      $region43: #{audio_encoder_forward.16} parent=31 // pred_region
        _
      $region44: #{audio_encoder_forward.16} parent=31 // pred_fallthru
        _
    $region32: #{audio_encoder_forward.16} parent=5 // pred_fallthru
      _
    %p866 = scmp.le.s32.totalorder 2, %s9
    // Predicated region
    $region45: #{audio_encoder_forward.16} parent=5 // pred_check
      %p867 = pneg %p866
    $region46: #{audio_encoder_forward.16} parent=5 // pred_check_branch
      %869 = sbr.rel (%p867) target = $region48
    $region47: #{audio_encoder_forward.16} parent=5 // pred_region
      %s870 = ssub.s32 %s9, 2
      // Predicated region
      $region49: #{audio_encoder_forward.16} parent=47 // pred_check
        %p871 = pneg %p143
      $region50: #{audio_encoder_forward.16} parent=47 // pred_check_branch
        %873 = sbr.rel (%p871) target = $region52
      $region51: #{audio_encoder_forward.16} parent=47 // pred_region
        %p874 = scmp.lt.s32.totalorder %s22, 1
        %s875 = scalar_select %p874, %s22, 1
        %p876 = scmp.lt.s32.totalorder %s23, 0
        %s877 = scalar_select %p876, %s23, 0
        %s878 = sadd.s32 %s877, %s875
        %s879 = smul.addr %s878, 8
        %s880 = scalar_lea.vmem %s3, %s879
      $region52: #{audio_encoder_forward.16} parent=47 // pred_fallthru
        _
    $region48: #{audio_encoder_forward.16} parent=5 // pred_fallthru
      _
  $region6: #{audio_encoder_forward.16} parent=0 // loop_footer
    %s13 = sadd.s32 1, %s9
  $region7: #{audio_encoder_forward.16} parent=0 // loop_footer_branch
    %8 = sbr.rel target = $region3
  $region8: #{audio_encoder_forward.16} parent=0 // loop_exit
    _

// kernel: audio_encoder_forward.18
$region0: #{audio_encoder_forward.18}
  #allocation0 [shape = 'u32[]', space=smem, size = 0x4, offset = 0x4, fixed_abs, tag = 'smem constant byte address 0x4 - core index']
  #allocation1 [shape = 'u32[144,128]{1,0:T(1,128)}', space=vmem, size = 0x12000, scoped, tag = 'internal scratch']
  #allocation2 [shape = 'f32[16,64]{1,0:T(8,128)}', space=vmem, size = 0x2000, scoped, tag = 'scratch operand']
  %s0 = inlined_call_operand.vmem [shape: f32[16,32], index: 0, kind: input, shape index: {}]
  %s1 = inlined_call_operand.vmem [shape: f32[32,64], index: 1, kind: input, shape index: {}]
  %s2 = inlined_call_operand.vmem [shape: f32[1,64], index: 2, kind: input, shape index: {}]
  %s3 = inlined_call_operand.vmem [shape: f32[1,32], index: 3, kind: input, shape index: {}]
  %s4 = inlined_call_operand.vmem [shape: f32[1,32], index: 4, kind: input, shape index: {}]
  %s5 = inlined_call_operand.vmem [shape: f32[16,64], index: 5, kind: output, shape index: {}]
  %s6 = sld [smem:[#allocation0]]
  $region38: #{audio_encoder_forward.18} parent=0
    _
  %s8 = ssub.s32 1, %s6
  %s9 = scalar_select 0, %s8, %s6
  // Predicated region
  $region2: #{audio_encoder_forward.18} parent=0 // pred_check
    _
  $region3: #{audio_encoder_forward.18} parent=0 // pred_check_branch
    %11 = sbr.rel (0) target = $region5
  $region4: #{audio_encoder_forward.18} parent=0 // pred_region
    _
  $region5: #{audio_encoder_forward.18} parent=0 // pred_fallthru
    _
  // Predicated region
  $region6: #{audio_encoder_forward.18} parent=0 // pred_check
    _
  $region7: #{audio_encoder_forward.18} parent=0 // pred_check_branch
    %13 = sbr.rel (0) target = $region9
  $region8: #{audio_encoder_forward.18} parent=0 // pred_region
    _
  $region9: #{audio_encoder_forward.18} parent=0 // pred_fallthru
    _
  // Predicated region
  $region10: #{audio_encoder_forward.18} parent=0 // pred_check
    _
  $region11: #{audio_encoder_forward.18} parent=0 // pred_check_branch
    %15 = sbr.rel (0) target = $region13
  $region12: #{audio_encoder_forward.18} parent=0 // pred_region
    _
  $region13: #{audio_encoder_forward.18} parent=0 // pred_fallthru
    _
  // Predicated region
  $region14: #{audio_encoder_forward.18} parent=0 // pred_check
    _
  $region15: #{audio_encoder_forward.18} parent=0 // pred_check_branch
    %17 = sbr.rel (0) target = $region17
  $region16: #{audio_encoder_forward.18} parent=0 // pred_region
    _
  $region17: #{audio_encoder_forward.18} parent=0 // pred_fallthru
    _
  // Predicated region
  $region18: #{audio_encoder_forward.18} parent=0 // pred_check
    _
  $region19: #{audio_encoder_forward.18} parent=0 // pred_check_branch
    %19 = sbr.rel (0) target = $region21
  $region20: #{audio_encoder_forward.18} parent=0 // pred_region
    _
  $region21: #{audio_encoder_forward.18} parent=0 // pred_fallthru
    _
  %p21 = scmp.eq.s32.totalorder 0, 0
  // Predicated region
  $region22: #{audio_encoder_forward.18} parent=0 // pred_check
    %p22 = pneg %p21
  $region23: #{audio_encoder_forward.18} parent=0 // pred_check_branch
    %24 = sbr.rel (%p22) target = $region25
  $region24: #{audio_encoder_forward.18} parent=0 // pred_region
    %vm25 = vcmask 523264
    %26 = vst.msk [vmem:[#allocation2] sm:$0xff] %vm25, 0.0
    %27 = vst.msk [vmem:[#allocation2 + $0x8] sm:$0xff] %vm25, 0.0
  $region25: #{audio_encoder_forward.18} parent=0 // pred_fallthru
    _
  %v28 = vld [vmem:[%s0] sm:$0xff]
  %v29 = vld [vmem:[%s0 + $0x8] sm:$0xff]
  %vm30 = vcmask 261120
  %v31 = vsel %vm30, %v28, 0.0
  %32 = vadd.xlane.f32.xlu0 %v31
  %v33 = vpop.xlane.xlu0 %32
  %v34 = vsel %vm30, %v29, 0.0
  %35 = vadd.xlane.f32.xlu0 %v34
  %v36 = vpop.xlane.xlu0 %35
  %v37 = vrcp.pop 32.0
  %v38 = vmul.f32 %v33, %v37
  %v39 = vmul.f32 %v36, %v37
  %v40 = vsub.f32 %v28, %v38
  %v41 = vsub.f32 %v29, %v39
  %v42 = vmul.f32 %v40, %v40
  %v43 = vmul.f32 %v41, %v41
  %v44 = vsel %vm30, %v42, 0.0
  %45 = vadd.xlane.f32.xlu0 %v44
  %v46 = vpop.xlane.xlu0 %45
  %v47 = vsel %vm30, %v43, 0.0
  %48 = vadd.xlane.f32.xlu0 %v47
  %v49 = vpop.xlane.xlu0 %48
  %v50 = vmul.f32 %v46, %v37
  %v51 = vmul.f32 %v49, %v37
  %v52 = vadd.f32 %v50, 1e-05
  %v53 = vadd.f32 %v51, 1e-05
  %v54 = vrsqrt.pop %v52
  %v55 = vrsqrt.pop %v53
  %v56 = vmul.f32 %v40, %v54
  %v57 = vmul.f32 %v41, %v55
  %v58 = vld [vmem:[%s3] sm:$0x1]
  %v60 = vlaneseq
  %v61 = vshrl.u32 %v60, 7
  %v62 = vsub.s32 0, %v61
  %v63 = vrot.slane %v58, %v62
  %v65 = vmul.f32 %v56, %v63
  %v66 = vmul.f32 %v57, %v63
  %v67 = vld [vmem:[%s4] sm:$0x1]
  %v69 = vlaneseq
  %v70 = vshrl.u32 %v69, 7
  %v71 = vsub.s32 0, %v70
  %v72 = vrot.slane %v67, %v71
  %v74 = vadd.f32 %v65, %v72
  %v75 = vadd.f32 %v66, %v72
  %v76 = vld [vmem:[#allocation2] sm:$0xff]
  %v77 = vld [vmem:[#allocation2 + $0x8] sm:$0xff]
  %v78 = vpack.c.bf16 %v75, %v74
  %v79 = vld [vmem:[%s1] sm:$0xff]
  %v80 = vld [vmem:[%s1 + $0x8] sm:$0xff]
  %v81 = vld [vmem:[%s1 + $0x10] sm:$0xff]
  %v82 = vld [vmem:[%s1 + $0x18] sm:$0xff]
  %v83 = vpack.c.bf16 %v80, %v79
  %v84 = vpack.c.bf16 %v82, %v81
  %v86 = vsel %vm30, %v78, 0
  %88 = vmatprep.subr.bf16.mxu0 0
  %89 = vmatpush1.bf16.msra.mxu0 %v83
  %90 = vmatprep.subr.bf16.mxu0 0
  %91 = vmatpush1.bf16.msra.mxu0 %v84
  %92 = vmatprep.subr.bf16.mxu0 0
  %93 = vmatpush1.bf16.msra.mxu0 0
  %94 = vmatprep.subr.bf16.mxu0 0
  %95 = vmatpush1.bf16.msra.mxu0 0
  %96 = vmatprep.subr.bf16.mxu0 0
  %97 = vmatpush1.bf16.msra.mxu0 0
  %98 = vmatprep.subr.bf16.mxu0 0
  %99 = vmatpush1.bf16.msra.mxu0 0
  %100 = vmatprep.subr.bf16.mxu0 0
  %101 = vmatpush1.bf16.msra.mxu0 0
  %102 = vmatprep.subr.bf16.mxu0 0
  %103 = vmatpush1.bf16.msra.mxu0 0
  %104 = vmatprep.subr.bf16.mxu0 0
  %105 = vmatpush1.bf16.msra.mxu0 0
  %106 = vmatprep.subr.bf16.mxu0 0
  %107 = vmatpush1.bf16.msra.mxu0 0
  %108 = vmatprep.subr.bf16.mxu0 0
  %109 = vmatpush1.bf16.msra.mxu0 0
  %110 = vmatprep.subr.bf16.mxu0 0
  %111 = vmatpush1.bf16.msra.mxu0 0
  %112 = vmatprep.subr.bf16.mxu0 0
  %113 = vmatpush1.bf16.msra.mxu0 0
  %114 = vmatprep.subr.bf16.mxu0 0
  %115 = vmatpush1.bf16.msra.mxu0 0
  %116 = vmatprep.subr.bf16.mxu0 0
  %117 = vmatpush1.bf16.msra.mxu0 0
  %118 = vmatprep.subr.bf16.mxu0 0
  %119 = vmatpush1.bf16.msra.mxu0 0
  %120 = vmatprep.mubr.bf16.mxu0 0
  %121 = vmatmul.mubr.bf16.gmra.mrb[0].mxu0 %v86
  %v122 = vpop.f32.mrb[0].mxu0
  %v123 = vadd.f32 0.0, %v122
  %v124 = vpop.f32.mrb[0].mxu0
  %v125 = vpop.f32.mrb[0].mxu0
  %v126 = vadd.f32 0.0, %v125
  %v127 = vpop.f32.mrb[0].mxu0
  %128 = vdwg.mxu0
  %v129 = vadd.f32 %v76, %v123
  %v130 = vadd.f32 %v77, %v126
  %vm131 = vcmask 523264
  %132 = vst.msk [vmem:[#allocation2] sm:$0xff] %vm131, %v129
  %133 = vst.msk [vmem:[#allocation2 + $0x8] sm:$0xff] %vm131, %v130
  // Predicated region
  $region26: #{audio_encoder_forward.18} parent=0 // pred_check
    %p134 = pneg %p21
  $region27: #{audio_encoder_forward.18} parent=0 // pred_check_branch
    %136 = sbr.rel (%p134) target = $region29
  $region28: #{audio_encoder_forward.18} parent=0 // pred_region
    %v137 = vld [vmem:[#allocation2] sm:$0xff]
    %v138 = vld [vmem:[#allocation2 + $0x8] sm:$0xff]
    %v139 = vld [vmem:[%s2] sm:$0x1]
    %v141 = vlaneseq
    %v142 = vshrl.u32 %v141, 7
    %v143 = vsub.s32 0, %v142
    %v144 = vrot.slane %v139, %v143
    %v146 = vadd.f32 %v137, %v144
    %v147 = vadd.f32 %v138, %v144
    %v148 = vmul.f32 %v146, %v146
    %v149 = vmul.f32 %v147, %v147
    %v150 = vmul.f32 %v146, %v148
    %v151 = vmul.f32 %v147, %v149
    %v152 = vmul.f32 %v150, 0.044715
    %v153 = vmul.f32 %v151, 0.044715
    %v154 = vadd.f32 %v146, %v152
    %v155 = vadd.f32 %v147, %v153
    %v156 = vmul.f32 %v154, 0.7978846
    %v157 = vmul.f32 %v155, 0.7978846
    %v158 = vtanh.pop %v156
    %v159 = vtanh.pop %v157
    %v160 = vadd.f32 %v158, 1.0
    %v161 = vadd.f32 %v159, 1.0
    %v162 = vmul.f32 %v160, 0.5
    %v163 = vmul.f32 %v161, 0.5
    %v164 = vmul.f32 %v146, %v162
    %v165 = vmul.f32 %v147, %v163
    %166 = vst.msk [vmem:[%s5] sm:$0xff] %vm131, %v164
    %167 = vst.msk [vmem:[%s5 + $0x8] sm:$0xff] %vm131, %v165
  $region29: #{audio_encoder_forward.18} parent=0 // pred_fallthru
    _
  // Predicated region
  $region30: #{audio_encoder_forward.18} parent=0 // pred_check
    _
  $region31: #{audio_encoder_forward.18} parent=0 // pred_check_branch
    %169 = sbr.rel (0) target = $region33
  $region32: #{audio_encoder_forward.18} parent=0 // pred_region
    _
  $region33: #{audio_encoder_forward.18} parent=0 // pred_fallthru
    _
  // Predicated region
  $region34: #{audio_encoder_forward.18} parent=0 // pred_check
    _
  $region35: #{audio_encoder_forward.18} parent=0 // pred_check_branch
    %171 = sbr.rel (0) target = $region37
  $region36: #{audio_encoder_forward.18} parent=0 // pred_region
    _
  $region37: #{audio_encoder_forward.18} parent=0 // pred_fallthru
    _

// kernel: audio_encoder_forward.19
$region0: #{audio_encoder_forward.19}
  #allocation0 [shape = 'u32[]', space=smem, size = 0x4, offset = 0x4, fixed_abs, tag = 'smem constant byte address 0x4 - core index']
  #allocation1 [shape = 'u32[144,128]{1,0:T(1,128)}', space=vmem, size = 0x12000, scoped, tag = 'internal scratch']
  #allocation2 [shape = 'f32[16,32]{1,0:T(8,128)}', space=vmem, size = 0x2000, scoped, tag = 'scratch operand']
  %s0 = inlined_call_operand.vmem [shape: f32[16,64], index: 0, kind: input, shape index: {}]
  %s1 = inlined_call_operand.vmem [shape: f32[64,32], index: 1, kind: input, shape index: {}]
  %s2 = inlined_call_operand.vmem [shape: f32[1,32], index: 2, kind: input, shape index: {}]
  %s3 = inlined_call_operand.vmem [shape: f32[16,32], index: 3, kind: input, shape index: {}]
  %s4 = inlined_call_operand.vmem [shape: f32[16,32], index: 4, kind: output, shape index: {}]
  %s5 = sld [smem:[#allocation0]]
  $region34: #{audio_encoder_forward.19} parent=0
    _
  %s7 = ssub.s32 1, %s5
  %s8 = scalar_select 0, %s7, %s5
  // Predicated region
  $region2: #{audio_encoder_forward.19} parent=0 // pred_check
    _
  $region3: #{audio_encoder_forward.19} parent=0 // pred_check_branch
    %10 = sbr.rel (0) target = $region5
  $region4: #{audio_encoder_forward.19} parent=0 // pred_region
    _
  $region5: #{audio_encoder_forward.19} parent=0 // pred_fallthru
    _
  // Predicated region
  $region6: #{audio_encoder_forward.19} parent=0 // pred_check
    _
  $region7: #{audio_encoder_forward.19} parent=0 // pred_check_branch
    %12 = sbr.rel (0) target = $region9
  $region8: #{audio_encoder_forward.19} parent=0 // pred_region
    _
  $region9: #{audio_encoder_forward.19} parent=0 // pred_fallthru
    _
  // Predicated region
  $region10: #{audio_encoder_forward.19} parent=0 // pred_check
    _
  $region11: #{audio_encoder_forward.19} parent=0 // pred_check_branch
    %14 = sbr.rel (0) target = $region13
  $region12: #{audio_encoder_forward.19} parent=0 // pred_region
    _
  $region13: #{audio_encoder_forward.19} parent=0 // pred_fallthru
    _
  // Predicated region
  $region14: #{audio_encoder_forward.19} parent=0 // pred_check
    _
  $region15: #{audio_encoder_forward.19} parent=0 // pred_check_branch
    %16 = sbr.rel (0) target = $region17
  $region16: #{audio_encoder_forward.19} parent=0 // pred_region
    _
  $region17: #{audio_encoder_forward.19} parent=0 // pred_fallthru
    _
  %p18 = scmp.eq.s32.totalorder 0, 0
  // Predicated region
  $region18: #{audio_encoder_forward.19} parent=0 // pred_check
    %p19 = pneg %p18
  $region19: #{audio_encoder_forward.19} parent=0 // pred_check_branch
    %21 = sbr.rel (%p19) target = $region21
  $region20: #{audio_encoder_forward.19} parent=0 // pred_region
    %vm22 = vcmask 261120
    %23 = vst.msk [vmem:[#allocation2] sm:$0xff] %vm22, 0.0
    %24 = vst.msk [vmem:[#allocation2 + $0x8] sm:$0xff] %vm22, 0.0
  $region21: #{audio_encoder_forward.19} parent=0 // pred_fallthru
    _
  %v25 = vld [vmem:[%s0] sm:$0xff]
  %v26 = vld [vmem:[%s0 + $0x8] sm:$0xff]
  %v27 = vld [vmem:[#allocation2] sm:$0xff]
  %v28 = vld [vmem:[#allocation2 + $0x8] sm:$0xff]
  %v29 = vpack.c.bf16 %v26, %v25
  %v30 = vld [vmem:[%s1] sm:$0xff]
  %v31 = vld [vmem:[%s1 + $0x8] sm:$0xff]
  %v32 = vld [vmem:[%s1 + $0x10] sm:$0xff]
  %v33 = vld [vmem:[%s1 + $0x18] sm:$0xff]
  %v34 = vld [vmem:[%s1 + $0x20] sm:$0xff]
  %v35 = vld [vmem:[%s1 + $0x28] sm:$0xff]
  %v36 = vld [vmem:[%s1 + $0x30] sm:$0xff]
  %v37 = vld [vmem:[%s1 + $0x38] sm:$0xff]
  %v38 = vpack.c.bf16 %v31, %v30
  %v39 = vpack.c.bf16 %v33, %v32
  %v40 = vpack.c.bf16 %v35, %v34
  %v41 = vpack.c.bf16 %v37, %v36
  %vm42 = vcmask 523264
  %v44 = vsel %vm42, %v29, 0
  %46 = vmatprep.subr.bf16.mxu0 0
  %47 = vmatpush1.bf16.msra.mxu0 %v38
  %48 = vmatprep.subr.bf16.mxu0 0
  %49 = vmatpush1.bf16.msra.mxu0 %v39
  %50 = vmatprep.subr.bf16.mxu0 0
  %51 = vmatpush1.bf16.msra.mxu0 %v40
  %52 = vmatprep.subr.bf16.mxu0 0
  %53 = vmatpush1.bf16.msra.mxu0 %v41
  %54 = vmatprep.subr.bf16.mxu0 0
  %55 = vmatpush1.bf16.msra.mxu0 0
  %56 = vmatprep.subr.bf16.mxu0 0
  %57 = vmatpush1.bf16.msra.mxu0 0
  %58 = vmatprep.subr.bf16.mxu0 0
  %59 = vmatpush1.bf16.msra.mxu0 0
  %60 = vmatprep.subr.bf16.mxu0 0
  %61 = vmatpush1.bf16.msra.mxu0 0
  %62 = vmatprep.subr.bf16.mxu0 0
  %63 = vmatpush1.bf16.msra.mxu0 0
  %64 = vmatprep.subr.bf16.mxu0 0
  %65 = vmatpush1.bf16.msra.mxu0 0
  %66 = vmatprep.subr.bf16.mxu0 0
  %67 = vmatpush1.bf16.msra.mxu0 0
  %68 = vmatprep.subr.bf16.mxu0 0
  %69 = vmatpush1.bf16.msra.mxu0 0
  %70 = vmatprep.subr.bf16.mxu0 0
  %71 = vmatpush1.bf16.msra.mxu0 0
  %72 = vmatprep.subr.bf16.mxu0 0
  %73 = vmatpush1.bf16.msra.mxu0 0
  %74 = vmatprep.subr.bf16.mxu0 0
  %75 = vmatpush1.bf16.msra.mxu0 0
  %76 = vmatprep.subr.bf16.mxu0 0
  %77 = vmatpush1.bf16.msra.mxu0 0
  %78 = vmatprep.mubr.bf16.mxu0 0
  %79 = vmatmul.mubr.bf16.gmra.mrb[0].mxu0 %v44
  %v80 = vpop.f32.mrb[0].mxu0
  %v81 = vadd.f32 0.0, %v80
  %v82 = vpop.f32.mrb[0].mxu0
  %v83 = vpop.f32.mrb[0].mxu0
  %v84 = vadd.f32 0.0, %v83
  %v85 = vpop.f32.mrb[0].mxu0
  %86 = vdwg.mxu0
  %v87 = vadd.f32 %v27, %v81
  %v88 = vadd.f32 %v28, %v84
  %vm89 = vcmask 261120
  %90 = vst.msk [vmem:[#allocation2] sm:$0xff] %vm89, %v87
  %91 = vst.msk [vmem:[#allocation2 + $0x8] sm:$0xff] %vm89, %v88
  // Predicated region
  $region22: #{audio_encoder_forward.19} parent=0 // pred_check
    %p92 = pneg %p18
  $region23: #{audio_encoder_forward.19} parent=0 // pred_check_branch
    %94 = sbr.rel (%p92) target = $region25
  $region24: #{audio_encoder_forward.19} parent=0 // pred_region
    %v95 = vld [vmem:[#allocation2] sm:$0xff]
    %v96 = vld [vmem:[#allocation2 + $0x8] sm:$0xff]
    %v97 = vld [vmem:[%s2] sm:$0x1]
    %v99 = vlaneseq
    %v100 = vshrl.u32 %v99, 7
    %v101 = vsub.s32 0, %v100
    %v102 = vrot.slane %v97, %v101
    %v104 = vadd.f32 %v95, %v102
    %v105 = vadd.f32 %v96, %v102
    %v106 = vld [vmem:[%s3] sm:$0xff]
    %v107 = vld [vmem:[%s3 + $0x8] sm:$0xff]
    %v108 = vadd.f32 %v104, %v106
    %v109 = vadd.f32 %v105, %v107
    %110 = vst.msk [vmem:[%s4] sm:$0xff] %vm89, %v108
    %111 = vst.msk [vmem:[%s4 + $0x8] sm:$0xff] %vm89, %v109
  $region25: #{audio_encoder_forward.19} parent=0 // pred_fallthru
    _
  // Predicated region
  $region26: #{audio_encoder_forward.19} parent=0 // pred_check
    _
  $region27: #{audio_encoder_forward.19} parent=0 // pred_check_branch
    %113 = sbr.rel (0) target = $region29
  $region28: #{audio_encoder_forward.19} parent=0 // pred_region
    _
  $region29: #{audio_encoder_forward.19} parent=0 // pred_fallthru
    _
  // Predicated region
  $region30: #{audio_encoder_forward.19} parent=0 // pred_check
    _
  $region31: #{audio_encoder_forward.19} parent=0 // pred_check_branch
    %115 = sbr.rel (0) target = $region33
  $region32: #{audio_encoder_forward.19} parent=0 // pred_region
    _
  $region33: #{audio_encoder_forward.19} parent=0 // pred_fallthru
    _

// kernel: audio_encoder_forward.25
$region0: #{audio_encoder_forward.25}
  #allocation0 [shape = 'u32[]', space=smem, size = 0x4, offset = 0x4, fixed_abs, tag = 'smem constant byte address 0x4 - core index']
  #allocation1 [shape = 'u32[144,128]{1,0:T(1,128)}', space=vmem, size = 0x12000, scoped, tag = 'internal scratch']
  #allocation2 [shape = 'f32[2,32]{1,0:T(2,128)}', space=vmem, size = 0x400, scoped, tag = 'scratch operand']
  %s0 = inlined_call_operand.vmem [shape: f32[2,8,32], index: 0, kind: input, shape index: {}]
  %s1 = inlined_call_operand.vmem [shape: f32[1,32], index: 1, kind: input, shape index: {}]
  %s2 = inlined_call_operand.vmem [shape: f32[1,32], index: 2, kind: input, shape index: {}]
  %s3 = inlined_call_operand.vmem [shape: f32[32,16], index: 3, kind: input, shape index: {}]
  %s4 = inlined_call_operand.vmem [shape: f32[1,16], index: 4, kind: input, shape index: {}]
  %s5 = inlined_call_operand.hbm [shape: f32[2,16], index: 5, kind: output, shape index: {}]
  %s6 = sld [smem:[#allocation0]]
  $region38: #{audio_encoder_forward.25} parent=0
    _
  %s8 = ssub.s32 1, %s6
  %s9 = scalar_select 0, %s8, %s6
  $region1: #{audio_encoder_forward.25} parent=0
    #allocation3 [shape = 'u8[1024]{0}', space=vmem, size = 0x400, scoped, tag = 'output window, operand 0, single buffered']
    #allocation4 [shape = 's32[1]{0}', space=sflag, size = 0x4, scoped, tag = 'scoped memory for audio_encoder_forward.25']
    %10 = vsyncpa [#allocation4], 0
    // Predicated region
    $region2: #{audio_encoder_forward.25} parent=1 // pred_check
      _
    $region3: #{audio_encoder_forward.25} parent=1 // pred_check_branch
      %12 = sbr.rel (0) target = $region5
    $region4: #{audio_encoder_forward.25} parent=1 // pred_region
      _
    $region5: #{audio_encoder_forward.25} parent=1 // pred_fallthru
      _
    // Predicated region
    $region6: #{audio_encoder_forward.25} parent=1 // pred_check
      _
    $region7: #{audio_encoder_forward.25} parent=1 // pred_check_branch
      %14 = sbr.rel (0) target = $region9
    $region8: #{audio_encoder_forward.25} parent=1 // pred_region
      _
    $region9: #{audio_encoder_forward.25} parent=1 // pred_fallthru
      _
    // Predicated region
    $region10: #{audio_encoder_forward.25} parent=1 // pred_check
      _
    $region11: #{audio_encoder_forward.25} parent=1 // pred_check_branch
      %16 = sbr.rel (0) target = $region13
    $region12: #{audio_encoder_forward.25} parent=1 // pred_region
      _
    $region13: #{audio_encoder_forward.25} parent=1 // pred_fallthru
      _
    // Predicated region
    $region14: #{audio_encoder_forward.25} parent=1 // pred_check
      _
    $region15: #{audio_encoder_forward.25} parent=1 // pred_check_branch
      %18 = sbr.rel (0) target = $region17
    $region16: #{audio_encoder_forward.25} parent=1 // pred_region
      _
    $region17: #{audio_encoder_forward.25} parent=1 // pred_fallthru
      _
    // Predicated region
    $region18: #{audio_encoder_forward.25} parent=1 // pred_check
      _
    $region19: #{audio_encoder_forward.25} parent=1 // pred_check_branch
      %20 = sbr.rel (0) target = $region21
    $region20: #{audio_encoder_forward.25} parent=1 // pred_region
      _
    $region21: #{audio_encoder_forward.25} parent=1 // pred_fallthru
      _
    %p22 = scmp.eq.s32.totalorder 0, 0
    // Predicated region
    $region22: #{audio_encoder_forward.25} parent=1 // pred_check
      %p23 = pneg %p22
    $region23: #{audio_encoder_forward.25} parent=1 // pred_check_branch
      %25 = sbr.rel (%p23) target = $region25
    $region24: #{audio_encoder_forward.25} parent=1 // pred_region
      %vm26 = vcmask 254976
      %27 = vst.msk [vmem:[#allocation2] sm:$0x3] %vm26, 0.0
    $region25: #{audio_encoder_forward.25} parent=1 // pred_fallthru
      _
    %v28 = vld [vmem:[%s0] sm:$0xff]
    %v29 = vld [vmem:[%s0 + $0x8] sm:$0xff]
    %vm30 = vcmask 261120
    %v31 = vsel %vm30, %v28, 0.0
    %32 = vadd.xlane.f32.xlu0 %v31
    %v33 = vpop.xlane.xlu0 %32
    %v34 = vsel %vm30, %v29, 0.0
    %35 = vadd.xlane.f32.xlu0 %v34
    %v36 = vpop.xlane.xlu0 %35
    %v37 = vrcp.pop 32.0
    %v38 = vmul.f32 %v33, %v37
    %v39 = vmul.f32 %v36, %v37
    %v40 = vsub.f32 %v28, %v38
    %v41 = vsub.f32 %v29, %v39
    %v42 = vmul.f32 %v40, %v40
    %v43 = vmul.f32 %v41, %v41
    %v44 = vsel %vm30, %v42, 0.0
    %45 = vadd.xlane.f32.xlu0 %v44
    %v46 = vpop.xlane.xlu0 %45
    %v47 = vsel %vm30, %v43, 0.0
    %48 = vadd.xlane.f32.xlu0 %v47
    %v49 = vpop.xlane.xlu0 %48
    %v50 = vmul.f32 %v46, %v37
    %v51 = vmul.f32 %v49, %v37
    %v52 = vadd.f32 %v50, 1e-05
    %v53 = vadd.f32 %v51, 1e-05
    %v54 = vrsqrt.pop %v52
    %v55 = vrsqrt.pop %v53
    %v56 = vmul.f32 %v40, %v54
    %v57 = vmul.f32 %v41, %v55
    %v58 = vld [vmem:[%s1] sm:$0x1]
    %v60 = vlaneseq
    %v61 = vshrl.u32 %v60, 7
    %v62 = vsub.s32 0, %v61
    %v63 = vrot.slane %v58, %v62
    %v65 = vmul.f32 %v56, %v63
    %v66 = vmul.f32 %v57, %v63
    %v67 = vld [vmem:[%s2] sm:$0x1]
    %v69 = vlaneseq
    %v70 = vshrl.u32 %v69, 7
    %v71 = vsub.s32 0, %v70
    %v72 = vrot.slane %v67, %v71
    %v74 = vadd.f32 %v65, %v72
    %v75 = vadd.f32 %v66, %v72
    %v76 = vld [vmem:[#allocation2] sm:$0x3]
    %v77 = vsel %vm30, %v74, 0.0
    %v78 = vrot.slane %v77, 4
    %v79 = vadd.f32 %v77, %v78
    %v80 = vrot.slane %v79, 2
    %v81 = vadd.f32 %v79, %v80
    %v82 = vrot.slane %v81, 1
    %v83 = vadd.f32 %v81, %v82
    %v84 = vsel %vm30, %v75, 0.0
    %v85 = vrot.slane %v84, 4
    %v86 = vadd.f32 %v84, %v85
    %v87 = vrot.slane %v86, 2
    %v88 = vadd.f32 %v86, %v87
    %v89 = vrot.slane %v88, 1
    %v90 = vadd.f32 %v88, %v89
    %vm93 = vcmask 1041409
    %v94 = vsel %vm93, %v90, %v83
    %v96 = vadd.f32 %v76, %v94
    %vm97 = vcmask 254976
    %98 = vst.msk [vmem:[#allocation2] sm:$0x3] %vm97, %v96
    // Predicated region
    $region26: #{audio_encoder_forward.25} parent=1 // pred_check
      %p99 = pneg %p22
    $region27: #{audio_encoder_forward.25} parent=1 // pred_check_branch
      %101 = sbr.rel (%p99) target = $region29
    $region28: #{audio_encoder_forward.25} parent=1 // pred_region
      %v102 = vld [vmem:[#allocation2] sm:$0x3]
      %v103 = vmul.f32 %v102, 0.125
      %v104 = vpack.c.bf16 %v103, %v103
      %v105 = vld [vmem:[%s3] sm:$0xff]
      %v106 = vld [vmem:[%s3 + $0x8] sm:$0xff]
      %v107 = vld [vmem:[%s3 + $0x10] sm:$0xff]
      %v108 = vld [vmem:[%s3 + $0x18] sm:$0xff]
      %v109 = vpack.c.bf16 %v106, %v105
      %v110 = vpack.c.bf16 %v108, %v107
      %v111 = vld [vmem:[%s4] sm:$0x1]
      %v113 = vlaneseq
      %v114 = vshrl.u32 %v113, 7
      %v115 = vsub.s32 0, %v114
      %v116 = vrot.slane %v111, %v115
      %v119 = vsel %vm30, %v104, 0
      %121 = vmatprep.subr.bf16.mxu0 0
      %122 = vmatpush1.bf16.msra.mxu0 %v109
      %123 = vmatprep.subr.bf16.mxu0 0
      %124 = vmatpush1.bf16.msra.mxu0 %v110
      %125 = vmatprep.subr.bf16.mxu0 0
      %126 = vmatpush1.bf16.msra.mxu0 0
      %127 = vmatprep.subr.bf16.mxu0 0
      %128 = vmatpush1.bf16.msra.mxu0 0
      %129 = vmatprep.subr.bf16.mxu0 0
      %130 = vmatpush1.bf16.msra.mxu0 0
      %131 = vmatprep.subr.bf16.mxu0 0
      %132 = vmatpush1.bf16.msra.mxu0 0
      %133 = vmatprep.subr.bf16.mxu0 0
      %134 = vmatpush1.bf16.msra.mxu0 0
      %135 = vmatprep.subr.bf16.mxu0 0
      %136 = vmatpush1.bf16.msra.mxu0 0
      %137 = vmatprep.subr.bf16.mxu0 0
      %138 = vmatpush1.bf16.msra.mxu0 0
      %139 = vmatprep.subr.bf16.mxu0 0
      %140 = vmatpush1.bf16.msra.mxu0 0
      %141 = vmatprep.subr.bf16.mxu0 0
      %142 = vmatpush1.bf16.msra.mxu0 0
      %143 = vmatprep.subr.bf16.mxu0 0
      %144 = vmatpush1.bf16.msra.mxu0 0
      %145 = vmatprep.subr.bf16.mxu0 0
      %146 = vmatpush1.bf16.msra.mxu0 0
      %147 = vmatprep.subr.bf16.mxu0 0
      %148 = vmatpush1.bf16.msra.mxu0 0
      %149 = vmatprep.subr.bf16.mxu0 0
      %150 = vmatpush1.bf16.msra.mxu0 0
      %151 = vmatprep.subr.bf16.mxu0 0
      %152 = vmatpush1.bf16.msra.mxu0 0
      %153 = vmatprep.mubr.bf16.mxu0 0
      %154 = vmatmul.mubr.bf16.gmra.mrb[0].mxu0 %v119
      %v155 = vpop.f32.mrb[0].mxu0
      %v156 = vadd.f32 %v116, %v155
      %v157 = vpop.f32.mrb[0].mxu0
      %v158 = vpop.f32.mrb[0].mxu0
      %v159 = vpop.f32.mrb[0].mxu0
      %160 = vdwg.mxu0
      %vm161 = vcmask 123904
      %162 = vst.msk [vmem:[#allocation3] sm:$0x3] %vm161, %v156
    $region29: #{audio_encoder_forward.25} parent=1 // pred_fallthru
      _
    // Predicated region
    $region30: #{audio_encoder_forward.25} parent=1 // pred_check
      _
    $region31: #{audio_encoder_forward.25} parent=1 // pred_check_branch
      %164 = sbr.rel (0) target = $region33
    $region32: #{audio_encoder_forward.25} parent=1 // pred_region
      %s166 = ssub.s32 32, 32
      %167 = vsyncadd [#allocation4], %s166
      %s169 = sshll.u32 [#allocation3], 4
      %s170 = int_to_ptr.vmem [resolvable:$true] %s169
      %172 = dma.vmem_to_hbm [thread:$0]  %s170, 32, %s5, [#allocation4]
    $region33: #{audio_encoder_forward.25} parent=1 // pred_fallthru
      _
    // Predicated region
    $region34: #{audio_encoder_forward.25} parent=1 // pred_check
      _
    $region35: #{audio_encoder_forward.25} parent=1 // pred_check_branch
      %174 = sbr.rel (0) target = $region37
    $region36: #{audio_encoder_forward.25} parent=1 // pred_region
      %175 = dma.done [#allocation4], 32
    $region37: #{audio_encoder_forward.25} parent=1 // pred_fallthru
      _
    %176 = vsyncpa [#allocation4], 1

</llo_original>
